<compile_context>
chip_gen: v7x
topology: tpu7x:2x2x1
jax: 0.10.0
libtpu: 0.0.40
codegen_flags: <defaults>
</compile_context>

<pallas_src>
import jax
import jax.numpy as jnp
import numpy as np
from jax.experimental import pallas as pl
from jax.experimental.pallas import tpu as pltpu


# ---------------------------------------------------------------------------
# Helpers
# ---------------------------------------------------------------------------
def _round_up(x, m):
    return ((x + m - 1) // m) * m


def _pad_axis(x, axis, new_size):
    pad = new_size - x.shape[axis]
    if pad <= 0:
        return x
    cfg = [(0, 0)] * x.ndim
    cfg[axis] = (0, pad)
    return jnp.pad(x, cfg)


def _fold_bn(gamma, beta, mean, var, eps=1e-5):
    scale = gamma / jnp.sqrt(var + eps)
    bias = beta - mean * scale
    return scale.astype(jnp.float32), bias.astype(jnp.float32)


# ---------------------------------------------------------------------------
# Fused BasicBlock kernel (conv1+bn1+relu -> conv2+bn2 -> +shortcut -> relu)
# ---------------------------------------------------------------------------
def _make_fused_block_kernel(*, ho, wo, cin_pad, cpad, taps1, sc_slice, has_proj):
    """taps1: list of (dy, dx, chan_off) static slice offsets for conv1's 9 taps.
    sc_slice: (sy, sx, chan_off) static offsets of the shortcut's input slice."""

    def kernel(*refs):
        if has_proj:
            (x_ref, w1_ref, s1_ref, b1_ref, w2_ref, s2_ref, b2_ref,
             wsc_ref, ssc_ref, bsc_ref, o_ref, out1_ref) = refs
        else:
            (x_ref, w1_ref, s1_ref, b1_ref, w2_ref, s2_ref, b2_ref,
             o_ref, out1_ref) = refs

        p = ho * wo

        # ---- conv1: 9 shifted-slice matmuls (im2col fused in VMEM) ----
        acc1 = jnp.zeros((p, cpad), jnp.float32)
        for t, (dy, dx, c0) in enumerate(taps1):
            lhs = x_ref[dy:dy + ho, dx:dx + wo, c0:c0 + cin_pad].reshape(p, cin_pad)
            acc1 = acc1 + jnp.dot(lhs, w1_ref[t], preferred_element_type=jnp.float32)
        # BN1 scale/bias in f32 epilogue + ReLU
        y1 = jnp.maximum(acc1 * s1_ref[...] + b1_ref[...], 0.0)

        # ---- out1 never leaves VMEM; zero border == conv2's zero padding ----
        out1_ref[...] = jnp.zeros_like(out1_ref)
        out1_ref[1:ho + 1, 1:wo + 1, :] = y1.reshape(ho, wo, cpad).astype(out1_ref.dtype)

        # ---- conv2: 9 shifted-slice matmuls over the resident out1 tile ----
        acc2 = jnp.zeros((p, cpad), jnp.float32)
        for t in range(9):
            dy, dx = t // 3, t % 3
            lhs = out1_ref[dy:dy + ho, dx:dx + wo, :].reshape(p, cpad)
            acc2 = acc2 + jnp.dot(lhs, w2_ref[t], preferred_element_type=jnp.float32)
        y2 = acc2 * s2_ref[...] + b2_ref[...]

        # ---- shortcut from the already-resident input tile (no extra stream) --
        sy, sx, sc0 = sc_slice
        if has_proj:
            sc_lhs = x_ref[sy:sy + ho, sx:sx + wo, sc0:sc0 + cin_pad].reshape(p, cin_pad)
            sc = (jnp.dot(sc_lhs, wsc_ref[...], preferred_element_type=jnp.float32)
                  * ssc_ref[...] + bsc_ref[...])
        else:  # identity: cin_pad == cpad
            sc = x_ref[sy:sy + ho, sx:sx + wo, sc0:sc0 + cpad].reshape(p, cpad)
            sc = sc.astype(jnp.float32)

        out = jnp.maximum(y2 + sc, 0.0)
        o_ref[...] = out.reshape(ho, wo, cpad).astype(o_ref.dtype)

    return kernel


def _fused_call(xin, w1, s1, b1, w2, s2, b2, proj, *, ho, wo, cin_pad, cpad,
                taps1, sc_slice, out_dtype):
    n, hin, win, cx = xin.shape
    has_proj = proj is not None
    kernel = _make_fused_block_kernel(ho=ho, wo=wo, cin_pad=cin_pad, cpad=cpad,
                                      taps1=taps1, sc_slice=sc_slice,
                                      has_proj=has_proj)

    inputs = [xin, w1, s1, b1, w2, s2, b2]
    in_specs = [
        pl.BlockSpec((None, hin, win, cx), lambda i: (i, 0, 0, 0)),
        pl.BlockSpec((9, cin_pad, cpad), lambda i: (0, 0, 0)),
        pl.BlockSpec((1, cpad), lambda i: (0, 0)),
        pl.BlockSpec((1, cpad), lambda i: (0, 0)),
        pl.BlockSpec((9, cpad, cpad), lambda i: (0, 0, 0)),
        pl.BlockSpec((1, cpad), lambda i: (0, 0)),
        pl.BlockSpec((1, cpad), lambda i: (0, 0)),
    ]
    flops = 2 * n * ho * wo * (9 * cin_pad * cpad + 9 * cpad * cpad)
    if has_proj:
        wsc, ssc, bsc = proj
        inputs += [wsc, ssc, bsc]
        in_specs += [
            pl.BlockSpec((cin_pad, cpad), lambda i: (0, 0)),
            pl.BlockSpec((1, cpad), lambda i: (0, 0)),
            pl.BlockSpec((1, cpad), lambda i: (0, 0)),
        ]
        flops += 2 * n * ho * wo * cin_pad * cpad

    out_itemsize = jnp.dtype(out_dtype).itemsize
    in_bytes = sum(int(a.size) * a.dtype.itemsize for a in inputs)
    out_bytes = n * ho * wo * cpad * out_itemsize
    cost = pl.CostEstimate(flops=int(flops), transcendentals=0,
                           bytes_accessed=int(in_bytes + out_bytes))

    # Per-step VMEM footprint: double-buffered image in/out streams, resident
    # weights, the out1 halo scratch, and f32 accumulator / relayout temps.
    img_in = hin * win * cx * 2
    img_out = ho * wo * cpad * out_itemsize
    weight_bytes = sum(int(a.size) * a.dtype.itemsize for a in inputs[1:])
    scratch_bytes = (ho + 2) * (wo + 2) * cpad * 2
    acc_bytes = ho * wo * cpad * 4
    needed = 2 * (img_in + img_out) + weight_bytes + scratch_bytes + 4 * acc_bytes
    vmem_limit = int(min(64 << 20, max(32 << 20, 2 * needed)))  # v7x-safe cap

    return pl.pallas_call(
        kernel,
        out_shape=jax.ShapeDtypeStruct((n, ho, wo, cpad), out_dtype),
        grid=(n,),
        in_specs=in_specs,
        out_specs=pl.BlockSpec((None, ho, wo, cpad), lambda i: (i, 0, 0, 0)),
        scratch_shapes=[pltpu.VMEM((ho + 2, wo + 2, cpad), jnp.bfloat16)],
        compiler_params=pltpu.CompilerParams(
            dimension_semantics=("parallel",),
            vmem_limit_bytes=vmem_limit),
        cost_estimate=cost,
    )(*inputs)


# ---------------------------------------------------------------------------
# Parameter init + forward (inference-mode BN, matching PyTorch eval semantics)
# ---------------------------------------------------------------------------
def init_basic_block_params(key, in_planes, planes, stride):
    """Deterministic parameters matching BasicBlock's shapes (PyTorch OIHW)."""
    k1, k2, k3 = jax.random.split(key, 3)
    params = {
        "conv1_w": 0.1 * jax.random.normal(k1, (planes, in_planes, 3, 3), jnp.float32),
        "conv2_w": 0.1 * jax.random.normal(k2, (planes, planes, 3, 3), jnp.float32),
        "bn1": (jnp.ones(planes), jnp.zeros(planes), jnp.zeros(planes), jnp.ones(planes)),
        "bn2": (jnp.ones(planes), jnp.zeros(planes), jnp.zeros(planes), jnp.ones(planes)),
        "stride": stride,
        "has_proj": (stride != 1 or in_planes != planes),
    }
    if params["has_proj"]:
        params["sc_w"] = 0.1 * jax.random.normal(k3, (planes, in_planes, 1, 1), jnp.float32)
        params["bn_sc"] = (jnp.ones(planes), jnp.zeros(planes),
                           jnp.zeros(planes), jnp.ones(planes))
    return params


def basic_block_forward(params, x_nchw, out_dtype=jnp.bfloat16):
    """BasicBlock forward. Input NCHW (PyTorch); output NCHW (out_dtype)."""
    stride = int(params["stride"])
    has_proj = bool(params["has_proj"])
    planes, in_planes = params["conv1_w"].shape[:2]
    cin_pad = _round_up(in_planes, 128)   # lane-dense contraction channels
    cpad = _round_up(planes, 128)         # lane-dense output channels

    x = jnp.transpose(x_nchw, (0, 2, 3, 1)).astype(jnp.bfloat16)  # NHWC bf16 stream
    n, h, w_sp, _ = x.shape
    # conv1 spatial zero pad (padding=1) + channel pad (zeros -> contribute 0)
    xpad = jnp.pad(x, ((0, 0), (1, 1), (1, 1), (0, cin_pad - in_planes)))

    if stride == 1:
        ho, wo = h, w_sp
        xin = xpad                                              # (N, H+2, W+2, cin_pad)
        taps1 = [(ky, kx, 0) for ky in range(3) for kx in range(3)]
        sc_slice = (1, 1, 0)                                    # shortcut input = x
    elif stride == 2:
        ho, wo = (h - 1) // 2 + 1, (w_sp - 1) // 2 + 1
        xpad = _pad_axis(xpad, 1, _round_up(xpad.shape[1], 2))
        xpad = _pad_axis(xpad, 2, _round_up(xpad.shape[2], 2))
        # 2x2 space-to-depth: stride-2 3x3 conv -> 9 stride-1 taps on parity planes
        xin = jnp.concatenate(
            [xpad[:, 0::2, 0::2, :], xpad[:, 0::2, 1::2, :],
             xpad[:, 1::2, 0::2, :], xpad[:, 1::2, 1::2, :]], axis=-1)
        taps1 = [(ky // 2, kx // 2, (2 * (ky % 2) + (kx % 2)) * cin_pad)
                 for ky in range(3) for kx in range(3)]
        sc_slice = (0, 0, 3 * cin_pad)        # x[2i, 2j] lives in the "odd/odd" plane
    else:
        raise NotImplementedError("BasicBlock stride must be 1 or 2")

    def _prep_w(w_oihw, ci_pad):
        wk = jnp.transpose(w_oihw, (2, 3, 1, 0))                 # (kh, kw, Cin, Cout)
        wk = _pad_axis(_pad_axis(wk, 2, ci_pad), 3, cpad)
        kh, kw = wk.shape[:2]
        return wk.reshape(kh * kw, ci_pad, cpad).astype(jnp.bfloat16)

    def _prep_sb(bn):
        s, b = _fold_bn(*bn)
        return (_pad_axis(s.reshape(1, -1), 1, cpad),
                _pad_axis(b.reshape(1, -1), 1, cpad))

    w1 = _prep_w(params["conv1_w"], cin_pad)
    w2 = _prep_w(params["conv2_w"], cpad)
    s1, b1 = _prep_sb(params["bn1"])
    s2, b2 = _prep_sb(params["bn2"])

    proj = None
    if has_proj:
        wsc = jnp.transpose(params["sc_w"], (2, 3, 1, 0)).reshape(in_planes, planes)
        wsc = _pad_axis(_pad_axis(wsc, 0, cin_pad), 1, cpad).astype(jnp.bfloat16)
        ssc, bsc = _prep_sb(params["bn_sc"])
        proj = (wsc, ssc, bsc)

    out = _fused_call(xin, w1, s1, b1, w2, s2, b2, proj,
                      ho=ho, wo=wo, cin_pad=cin_pad, cpad=cpad,
                      taps1=taps1, sc_slice=sc_slice, out_dtype=out_dtype)
    out = out[:, :, :, :planes]
    return jnp.transpose(out, (0, 3, 1, 2))                      # -> NCHW


# ---------------------------------------------------------------------------
# Pure-JAX reference (sanity check)
# ---------------------------------------------------------------------------
def _ref_conv(x_nhwc, w_oihw, stride, padding):
    w_hwio = jnp.transpose(w_oihw, (2, 3, 1, 0))
    return jax.lax.conv_general_dilated(
        x_nhwc, w_hwio, window_strides=(stride, stride),
        padding=((padding, padding), (padding, padding)),
        dimension_numbers=("NHWC", "HWIO", "NHWC"))


def _ref_forward(params, x_nchw):
    stride = int(params["stride"])
    x = jnp.transpose(x_nchw, (0, 2, 3, 1)).astype(jnp.float32)
    s1, b1 = _fold_bn(*params["bn1"])
    s2, b2 = _fold_bn(*params["bn2"])
    out = jax.nn.relu(_ref_conv(x, params["conv1_w"], stride, 1) * s1 + b1)
    out = _ref_conv(out, params["conv2_w"], 1, 1) * s2 + b2
    if params["has_proj"]:
        ssc, bsc = _fold_bn(*params["bn_sc"])
        short = _ref_conv(x, params["sc_w"], stride, 0) * ssc + bsc
    else:
        short = x
    out = jax.nn.relu(out + short)
    return jnp.transpose(out, (0, 3, 1, 2))


# ---------------------------------------------------------------------------
if __name__ == "__main__":
    key = jax.random.PRNGKey(0)
    kx, kp1, kp2 = jax.random.split(key, 3)

    # Case 1: projection shortcut (stride=2, in_planes != planes)
    x1 = jax.random.normal(kx, (2, 4, 16, 16), jnp.float32)        # NCHW
    params1 = init_basic_block_params(kp1, in_planes=4, planes=8, stride=2)
    y1 = jax.block_until_ready(basic_block_forward(params1, x1))
    y1_ref = _ref_forward(params1, x1)
    np.testing.assert_allclose(np.asarray(y1, dtype=np.float32),
                               np.asarray(y1_ref), rtol=3e-2, atol=3e-2)
    assert y1.shape == (2, 8, 8, 8)

    # Case 2: identity shortcut (stride=1, in_planes == planes)
    x2 = jax.random.normal(kx, (2, 8, 16, 16), jnp.float32)
    params2 = init_basic_block_params(kp2, in_planes=8, planes=8, stride=1)
    y2 = jax.block_until_ready(basic_block_forward(params2, x2))
    y2_ref = _ref_forward(params2, x2)
    np.testing.assert_allclose(np.asarray(y2, dtype=np.float32),
                               np.asarray(y2_ref), rtol=3e-2, atol=3e-2)
    assert y2.shape == (2, 8, 16, 16)

    print("KERNEL_OK")
</pallas_src>

<mosaic_0001>
module attributes {stable_mosaic.version = 11 : i64} {
  func.func @kernel(%arg0: i32, %arg1: memref<1x9x9x512xbf16, #tpu.memory_space<vmem>>, %arg2: memref<9x128x128xbf16, #tpu.memory_space<vmem>>, %arg3: memref<1x128xf32, #tpu.memory_space<vmem>>, %arg4: memref<1x128xf32, #tpu.memory_space<vmem>>, %arg5: memref<9x128x128xbf16, #tpu.memory_space<vmem>>, %arg6: memref<1x128xf32, #tpu.memory_space<vmem>>, %arg7: memref<1x128xf32, #tpu.memory_space<vmem>>, %arg8: memref<128x128xbf16, #tpu.memory_space<vmem>>, %arg9: memref<1x128xf32, #tpu.memory_space<vmem>>, %arg10: memref<1x128xf32, #tpu.memory_space<vmem>>, %arg11: memref<1x8x8x128xbf16, #tpu.memory_space<vmem>>, %arg12: memref<10x10x128xbf16, #tpu.memory_space<vmem>>) attributes {dimension_semantics = [#tpu.dimension_semantics<parallel>], iteration_bounds = array<i64: 2>, scalar_prefetch = 0 : i64, scratch_operands = 1 : i64, tpu.core_type = #tpu.core_type<tc>, window_params = [{transform_indices = @transform_0, window_bounds = array<i64: 1, 9, 9, 512>}, {pipeline_mode = #tpu.pipeline_mode<synchronous>, transform_indices = @transform_1, window_bounds = array<i64: 9, 128, 128>}, {pipeline_mode = #tpu.pipeline_mode<synchronous>, transform_indices = @transform_2, window_bounds = array<i64: 1, 128>}, {pipeline_mode = #tpu.pipeline_mode<synchronous>, transform_indices = @transform_3, window_bounds = array<i64: 1, 128>}, {pipeline_mode = #tpu.pipeline_mode<synchronous>, transform_indices = @transform_4, window_bounds = array<i64: 9, 128, 128>}, {pipeline_mode = #tpu.pipeline_mode<synchronous>, transform_indices = @transform_5, window_bounds = array<i64: 1, 128>}, {pipeline_mode = #tpu.pipeline_mode<synchronous>, transform_indices = @transform_6, window_bounds = array<i64: 1, 128>}, {pipeline_mode = #tpu.pipeline_mode<synchronous>, transform_indices = @transform_7, window_bounds = array<i64: 128, 128>}, {pipeline_mode = #tpu.pipeline_mode<synchronous>, transform_indices = @transform_8, window_bounds = array<i64: 1, 128>}, {pipeline_mode = #tpu.pipeline_mode<synchronous>, transform_indices = @transform_9, window_bounds = array<i64: 1, 128>}, {transform_indices = @transform_10, window_bounds = array<i64: 1, 8, 8, 128>}]} {
    %cst = arith.constant 0.000000e+00 : f32
    %0 = vector.broadcast %cst : f32 to vector<64x128xf32>
    %c0 = arith.constant 0 : index
    %c0_0 = arith.constant 0 : index
    %c0_1 = arith.constant 0 : index
    %c0_2 = arith.constant 0 : index
    %1 = vector.load %arg1[%c0, %c0_0, %c0_1, %c0_2] : memref<1x9x9x512xbf16, #tpu.memory_space<vmem>>, vector<1x8x8x128xbf16>
    %2 = vector.shape_cast %1 : vector<1x8x8x128xbf16> to vector<8x8x128xbf16>
    %3 = vector.shape_cast %2 : vector<8x8x128xbf16> to vector<64x128xbf16>
    %c0_3 = arith.constant 0 : index
    %c0_4 = arith.constant 0 : index
    %c0_5 = arith.constant 0 : index
    %4 = vector.load %arg2[%c0_3, %c0_4, %c0_5] : memref<9x128x128xbf16, #tpu.memory_space<vmem>>, vector<1x128x128xbf16>
    %5 = vector.shape_cast %4 : vector<1x128x128xbf16> to vector<128x128xbf16>
    %cst_6 = arith.constant dense<0.000000e+00> : vector<64x128xf32>
    %6 = tpu.matmul %3, %5, %cst_6 {dimension_numbers = #tpu.dot_dimension_numbers<[1], [0], [0], [1], [0, 0, 1, 1], [], []>} : vector<64x128xbf16>, vector<128x128xbf16>, vector<64x128xf32> -> vector<64x128xf32>
    %7 = arith.addf %0, %6 : vector<64x128xf32>
    %c0_7 = arith.constant 0 : index
    %c0_8 = arith.constant 0 : index
    %c0_9 = arith.constant 0 : index
    %c128 = arith.constant 128 : index
    %8 = vector.load %arg1[%c0_7, %c0_8, %c0_9, %c128] : memref<1x9x9x512xbf16, #tpu.memory_space<vmem>>, vector<1x8x8x128xbf16>
    %9 = vector.shape_cast %8 : vector<1x8x8x128xbf16> to vector<8x8x128xbf16>
    %10 = vector.shape_cast %9 : vector<8x8x128xbf16> to vector<64x128xbf16>
    %c1 = arith.constant 1 : index
    %c0_10 = arith.constant 0 : index
    %c0_11 = arith.constant 0 : index
    %11 = vector.load %arg2[%c1, %c0_10, %c0_11] : memref<9x128x128xbf16, #tpu.memory_space<vmem>>, vector<1x128x128xbf16>
    %12 = vector.shape_cast %11 : vector<1x128x128xbf16> to vector<128x128xbf16>
    %cst_12 = arith.constant dense<0.000000e+00> : vector<64x128xf32>
    %13 = tpu.matmul %10, %12, %cst_12 {dimension_numbers = #tpu.dot_dimension_numbers<[1], [0], [0], [1], [0, 0, 1, 1], [], []>} : vector<64x128xbf16>, vector<128x128xbf16>, vector<64x128xf32> -> vector<64x128xf32>
    %14 = arith.addf %7, %13 : vector<64x128xf32>
    %c0_13 = arith.constant 0 : index
    %c0_14 = arith.constant 0 : index
    %c1_15 = arith.constant 1 : index
    %c0_16 = arith.constant 0 : index
    %15 = vector.load %arg1[%c0_13, %c0_14, %c1_15, %c0_16] : memref<1x9x9x512xbf16, #tpu.memory_space<vmem>>, vector<1x8x8x128xbf16>
    %16 = vector.shape_cast %15 : vector<1x8x8x128xbf16> to vector<8x8x128xbf16>
    %17 = vector.shape_cast %16 : vector<8x8x128xbf16> to vector<64x128xbf16>
    %c2 = arith.constant 2 : index
    %c0_17 = arith.constant 0 : index
    %c0_18 = arith.constant 0 : index
    %18 = vector.load %arg2[%c2, %c0_17, %c0_18] : memref<9x128x128xbf16, #tpu.memory_space<vmem>>, vector<1x128x128xbf16>
    %19 = vector.shape_cast %18 : vector<1x128x128xbf16> to vector<128x128xbf16>
    %cst_19 = arith.constant dense<0.000000e+00> : vector<64x128xf32>
    %20 = tpu.matmul %17, %19, %cst_19 {dimension_numbers = #tpu.dot_dimension_numbers<[1], [0], [0], [1], [0, 0, 1, 1], [], []>} : vector<64x128xbf16>, vector<128x128xbf16>, vector<64x128xf32> -> vector<64x128xf32>
    %21 = arith.addf %14, %20 : vector<64x128xf32>
    %c0_20 = arith.constant 0 : index
    %c0_21 = arith.constant 0 : index
    %c0_22 = arith.constant 0 : index
    %c256 = arith.constant 256 : index
    %22 = vector.load %arg1[%c0_20, %c0_21, %c0_22, %c256] : memref<1x9x9x512xbf16, #tpu.memory_space<vmem>>, vector<1x8x8x128xbf16>
    %23 = vector.shape_cast %22 : vector<1x8x8x128xbf16> to vector<8x8x128xbf16>
    %24 = vector.shape_cast %23 : vector<8x8x128xbf16> to vector<64x128xbf16>
    %c3 = arith.constant 3 : index
    %c0_23 = arith.constant 0 : index
    %c0_24 = arith.constant 0 : index
    %25 = vector.load %arg2[%c3, %c0_23, %c0_24] : memref<9x128x128xbf16, #tpu.memory_space<vmem>>, vector<1x128x128xbf16>
    %26 = vector.shape_cast %25 : vector<1x128x128xbf16> to vector<128x128xbf16>
    %cst_25 = arith.constant dense<0.000000e+00> : vector<64x128xf32>
    %27 = tpu.matmul %24, %26, %cst_25 {dimension_numbers = #tpu.dot_dimension_numbers<[1], [0], [0], [1], [0, 0, 1, 1], [], []>} : vector<64x128xbf16>, vector<128x128xbf16>, vector<64x128xf32> -> vector<64x128xf32>
    %28 = arith.addf %21, %27 : vector<64x128xf32>
    %c0_26 = arith.constant 0 : index
    %c0_27 = arith.constant 0 : index
    %c0_28 = arith.constant 0 : index
    %c384 = arith.constant 384 : index
    %29 = vector.load %arg1[%c0_26, %c0_27, %c0_28, %c384] : memref<1x9x9x512xbf16, #tpu.memory_space<vmem>>, vector<1x8x8x128xbf16>
    %30 = vector.shape_cast %29 : vector<1x8x8x128xbf16> to vector<8x8x128xbf16>
    %31 = vector.shape_cast %30 : vector<8x8x128xbf16> to vector<64x128xbf16>
    %c4 = arith.constant 4 : index
    %c0_29 = arith.constant 0 : index
    %c0_30 = arith.constant 0 : index
    %32 = vector.load %arg2[%c4, %c0_29, %c0_30] : memref<9x128x128xbf16, #tpu.memory_space<vmem>>, vector<1x128x128xbf16>
    %33 = vector.shape_cast %32 : vector<1x128x128xbf16> to vector<128x128xbf16>
    %cst_31 = arith.constant dense<0.000000e+00> : vector<64x128xf32>
    %34 = tpu.matmul %31, %33, %cst_31 {dimension_numbers = #tpu.dot_dimension_numbers<[1], [0], [0], [1], [0, 0, 1, 1], [], []>} : vector<64x128xbf16>, vector<128x128xbf16>, vector<64x128xf32> -> vector<64x128xf32>
    %35 = arith.addf %28, %34 : vector<64x128xf32>
    %c0_32 = arith.constant 0 : index
    %c0_33 = arith.constant 0 : index
    %c1_34 = arith.constant 1 : index
    %c256_35 = arith.constant 256 : index
    %36 = vector.load %arg1[%c0_32, %c0_33, %c1_34, %c256_35] : memref<1x9x9x512xbf16, #tpu.memory_space<vmem>>, vector<1x8x8x128xbf16>
    %37 = vector.shape_cast %36 : vector<1x8x8x128xbf16> to vector<8x8x128xbf16>
    %38 = vector.shape_cast %37 : vector<8x8x128xbf16> to vector<64x128xbf16>
    %c5 = arith.constant 5 : index
    %c0_36 = arith.constant 0 : index
    %c0_37 = arith.constant 0 : index
    %39 = vector.load %arg2[%c5, %c0_36, %c0_37] : memref<9x128x128xbf16, #tpu.memory_space<vmem>>, vector<1x128x128xbf16>
    %40 = vector.shape_cast %39 : vector<1x128x128xbf16> to vector<128x128xbf16>
    %cst_38 = arith.constant dense<0.000000e+00> : vector<64x128xf32>
    %41 = tpu.matmul %38, %40, %cst_38 {dimension_numbers = #tpu.dot_dimension_numbers<[1], [0], [0], [1], [0, 0, 1, 1], [], []>} : vector<64x128xbf16>, vector<128x128xbf16>, vector<64x128xf32> -> vector<64x128xf32>
    %42 = arith.addf %35, %41 : vector<64x128xf32>
    %c0_39 = arith.constant 0 : index
    %c1_40 = arith.constant 1 : index
    %c0_41 = arith.constant 0 : index
    %c0_42 = arith.constant 0 : index
    %43 = vector.load %arg1[%c0_39, %c1_40, %c0_41, %c0_42] : memref<1x9x9x512xbf16, #tpu.memory_space<vmem>>, vector<1x8x8x128xbf16>
    %44 = vector.shape_cast %43 : vector<1x8x8x128xbf16> to vector<8x8x128xbf16>
    %45 = vector.shape_cast %44 : vector<8x8x128xbf16> to vector<64x128xbf16>
    %c6 = arith.constant 6 : index
    %c0_43 = arith.constant 0 : index
    %c0_44 = arith.constant 0 : index
    %46 = vector.load %arg2[%c6, %c0_43, %c0_44] : memref<9x128x128xbf16, #tpu.memory_space<vmem>>, vector<1x128x128xbf16>
    %47 = vector.shape_cast %46 : vector<1x128x128xbf16> to vector<128x128xbf16>
    %cst_45 = arith.constant dense<0.000000e+00> : vector<64x128xf32>
    %48 = tpu.matmul %45, %47, %cst_45 {dimension_numbers = #tpu.dot_dimension_numbers<[1], [0], [0], [1], [0, 0, 1, 1], [], []>} : vector<64x128xbf16>, vector<128x128xbf16>, vector<64x128xf32> -> vector<64x128xf32>
    %49 = arith.addf %42, %48 : vector<64x128xf32>
    %c0_46 = arith.constant 0 : index
    %c1_47 = arith.constant 1 : index
    %c0_48 = arith.constant 0 : index
    %c128_49 = arith.constant 128 : index
    %50 = vector.load %arg1[%c0_46, %c1_47, %c0_48, %c128_49] : memref<1x9x9x512xbf16, #tpu.memory_space<vmem>>, vector<1x8x8x128xbf16>
    %51 = vector.shape_cast %50 : vector<1x8x8x128xbf16> to vector<8x8x128xbf16>
    %52 = vector.shape_cast %51 : vector<8x8x128xbf16> to vector<64x128xbf16>
    %c7 = arith.constant 7 : index
    %c0_50 = arith.constant 0 : index
    %c0_51 = arith.constant 0 : index
    %53 = vector.load %arg2[%c7, %c0_50, %c0_51] : memref<9x128x128xbf16, #tpu.memory_space<vmem>>, vector<1x128x128xbf16>
    %54 = vector.shape_cast %53 : vector<1x128x128xbf16> to vector<128x128xbf16>
    %cst_52 = arith.constant dense<0.000000e+00> : vector<64x128xf32>
    %55 = tpu.matmul %52, %54, %cst_52 {dimension_numbers = #tpu.dot_dimension_numbers<[1], [0], [0], [1], [0, 0, 1, 1], [], []>} : vector<64x128xbf16>, vector<128x128xbf16>, vector<64x128xf32> -> vector<64x128xf32>
    %56 = arith.addf %49, %55 : vector<64x128xf32>
    %c0_53 = arith.constant 0 : index
    %c1_54 = arith.constant 1 : index
    %c1_55 = arith.constant 1 : index
    %c0_56 = arith.constant 0 : index
    %57 = vector.load %arg1[%c0_53, %c1_54, %c1_55, %c0_56] : memref<1x9x9x512xbf16, #tpu.memory_space<vmem>>, vector<1x8x8x128xbf16>
    %58 = vector.shape_cast %57 : vector<1x8x8x128xbf16> to vector<8x8x128xbf16>
    %59 = vector.shape_cast %58 : vector<8x8x128xbf16> to vector<64x128xbf16>
    %c8 = arith.constant 8 : index
    %c0_57 = arith.constant 0 : index
    %c0_58 = arith.constant 0 : index
    %60 = vector.load %arg2[%c8, %c0_57, %c0_58] : memref<9x128x128xbf16, #tpu.memory_space<vmem>>, vector<1x128x128xbf16>
    %61 = vector.shape_cast %60 : vector<1x128x128xbf16> to vector<128x128xbf16>
    %cst_59 = arith.constant dense<0.000000e+00> : vector<64x128xf32>
    %62 = tpu.matmul %59, %61, %cst_59 {dimension_numbers = #tpu.dot_dimension_numbers<[1], [0], [0], [1], [0, 0, 1, 1], [], []>} : vector<64x128xbf16>, vector<128x128xbf16>, vector<64x128xf32> -> vector<64x128xf32>
    %63 = arith.addf %56, %62 : vector<64x128xf32>
    %c0_60 = arith.constant 0 : index
    %c0_61 = arith.constant 0 : index
    %64 = vector.load %arg3[%c0_60, %c0_61] : memref<1x128xf32, #tpu.memory_space<vmem>>, vector<1x128xf32>
    %65 = vector.broadcast %64 : vector<1x128xf32> to vector<64x128xf32>
    %66 = arith.mulf %63, %65 : vector<64x128xf32>
    %c0_62 = arith.constant 0 : index
    %c0_63 = arith.constant 0 : index
    %67 = vector.load %arg4[%c0_62, %c0_63] : memref<1x128xf32, #tpu.memory_space<vmem>>, vector<1x128xf32>
    %68 = vector.broadcast %67 : vector<1x128xf32> to vector<64x128xf32>
    %69 = arith.addf %66, %68 : vector<64x128xf32>
    %cst_64 = arith.constant 0.000000e+00 : f32
    %70 = vector.broadcast %cst_64 : f32 to vector<64x128xf32>
    %71 = arith.maximumf %69, %70 : vector<64x128xf32>
    %cst_65 = arith.constant 0.000000e+00 : bf16
    %72 = vector.broadcast %cst_65 : bf16 to vector<10x10x128xbf16>
    %c0_66 = arith.constant 0 : index
    %c0_67 = arith.constant 0 : index
    %c0_68 = arith.constant 0 : index
    %73 = vector.load %arg12[%c0_66, %c0_67, %c0_68] : memref<10x10x128xbf16, #tpu.memory_space<vmem>>, vector<10x10x128xbf16>
    tpu.vector_store %arg12[%c0_66, %c0_67, %c0_68], %72 {strides = array<i32>} : memref<10x10x128xbf16, #tpu.memory_space<vmem>>, vector<10x10x128xbf16>,
    %74 = vector.shape_cast %71 : vector<64x128xf32> to vector<8x8x128xf32>
    %75 = arith.truncf %74 : vector<8x8x128xf32> to vector<8x8x128xbf16>
    %c1_69 = arith.constant 1 : index
    %c1_70 = arith.constant 1 : index
    %c0_71 = arith.constant 0 : index
    %76 = vector.load %arg12[%c1_69, %c1_70, %c0_71] : memref<10x10x128xbf16, #tpu.memory_space<vmem>>, vector<8x8x128xbf16>
    tpu.vector_store %arg12[%c1_69, %c1_70, %c0_71], %75 {strides = array<i32>} : memref<10x10x128xbf16, #tpu.memory_space<vmem>>, vector<8x8x128xbf16>,
    %cst_72 = arith.constant 0.000000e+00 : f32
    %77 = vector.broadcast %cst_72 : f32 to vector<64x128xf32>
    %c0_73 = arith.constant 0 : index
    %c0_74 = arith.constant 0 : index
    %c0_75 = arith.constant 0 : index
    %78 = vector.load %arg12[%c0_73, %c0_74, %c0_75] : memref<10x10x128xbf16, #tpu.memory_space<vmem>>, vector<8x8x128xbf16>
    %79 = vector.shape_cast %78 : vector<8x8x128xbf16> to vector<64x128xbf16>
    %c0_76 = arith.constant 0 : index
    %c0_77 = arith.constant 0 : index
    %c0_78 = arith.constant 0 : index
    %80 = vector.load %arg5[%c0_76, %c0_77, %c0_78] : memref<9x128x128xbf16, #tpu.memory_space<vmem>>, vector<1x128x128xbf16>
    %81 = vector.shape_cast %80 : vector<1x128x128xbf16> to vector<128x128xbf16>
    %cst_79 = arith.constant dense<0.000000e+00> : vector<64x128xf32>
    %82 = tpu.matmul %79, %81, %cst_79 {dimension_numbers = #tpu.dot_dimension_numbers<[1], [0], [0], [1], [0, 0, 1, 1], [], []>} : vector<64x128xbf16>, vector<128x128xbf16>, vector<64x128xf32> -> vector<64x128xf32>
    %83 = arith.addf %77, %82 : vector<64x128xf32>
    %c0_80 = arith.constant 0 : index
    %c1_81 = arith.constant 1 : index
    %c0_82 = arith.constant 0 : index
    %84 = vector.load %arg12[%c0_80, %c1_81, %c0_82] : memref<10x10x128xbf16, #tpu.memory_space<vmem>>, vector<8x8x128xbf16>
    %85 = vector.shape_cast %84 : vector<8x8x128xbf16> to vector<64x128xbf16>
    %c1_83 = arith.constant 1 : index
    %c0_84 = arith.constant 0 : index
    %c0_85 = arith.constant 0 : index
    %86 = vector.load %arg5[%c1_83, %c0_84, %c0_85] : memref<9x128x128xbf16, #tpu.memory_space<vmem>>, vector<1x128x128xbf16>
    %87 = vector.shape_cast %86 : vector<1x128x128xbf16> to vector<128x128xbf16>
    %cst_86 = arith.constant dense<0.000000e+00> : vector<64x128xf32>
    %88 = tpu.matmul %85, %87, %cst_86 {dimension_numbers = #tpu.dot_dimension_numbers<[1], [0], [0], [1], [0, 0, 1, 1], [], []>} : vector<64x128xbf16>, vector<128x128xbf16>, vector<64x128xf32> -> vector<64x128xf32>
    %89 = arith.addf %83, %88 : vector<64x128xf32>
    %c0_87 = arith.constant 0 : index
    %c2_88 = arith.constant 2 : index
    %c0_89 = arith.constant 0 : index
    %90 = vector.load %arg12[%c0_87, %c2_88, %c0_89] : memref<10x10x128xbf16, #tpu.memory_space<vmem>>, vector<8x8x128xbf16>
    %91 = vector.shape_cast %90 : vector<8x8x128xbf16> to vector<64x128xbf16>
    %c2_90 = arith.constant 2 : index
    %c0_91 = arith.constant 0 : index
    %c0_92 = arith.constant 0 : index
    %92 = vector.load %arg5[%c2_90, %c0_91, %c0_92] : memref<9x128x128xbf16, #tpu.memory_space<vmem>>, vector<1x128x128xbf16>
    %93 = vector.shape_cast %92 : vector<1x128x128xbf16> to vector<128x128xbf16>
    %cst_93 = arith.constant dense<0.000000e+00> : vector<64x128xf32>
    %94 = tpu.matmul %91, %93, %cst_93 {dimension_numbers = #tpu.dot_dimension_numbers<[1], [0], [0], [1], [0, 0, 1, 1], [], []>} : vector<64x128xbf16>, vector<128x128xbf16>, vector<64x128xf32> -> vector<64x128xf32>
    %95 = arith.addf %89, %94 : vector<64x128xf32>
    %c1_94 = arith.constant 1 : index
    %c0_95 = arith.constant 0 : index
    %c0_96 = arith.constant 0 : index
    %96 = vector.load %arg12[%c1_94, %c0_95, %c0_96] : memref<10x10x128xbf16, #tpu.memory_space<vmem>>, vector<8x8x128xbf16>
    %97 = vector.shape_cast %96 : vector<8x8x128xbf16> to vector<64x128xbf16>
    %c3_97 = arith.constant 3 : index
    %c0_98 = arith.constant 0 : index
    %c0_99 = arith.constant 0 : index
    %98 = vector.load %arg5[%c3_97, %c0_98, %c0_99] : memref<9x128x128xbf16, #tpu.memory_space<vmem>>, vector<1x128x128xbf16>
    %99 = vector.shape_cast %98 : vector<1x128x128xbf16> to vector<128x128xbf16>
    %cst_100 = arith.constant dense<0.000000e+00> : vector<64x128xf32>
    %100 = tpu.matmul %97, %99, %cst_100 {dimension_numbers = #tpu.dot_dimension_numbers<[1], [0], [0], [1], [0, 0, 1, 1], [], []>} : vector<64x128xbf16>, vector<128x128xbf16>, vector<64x128xf32> -> vector<64x128xf32>
    %101 = arith.addf %95, %100 : vector<64x128xf32>
    %c1_101 = arith.constant 1 : index
    %c1_102 = arith.constant 1 : index
    %c0_103 = arith.constant 0 : index
    %102 = vector.load %arg12[%c1_101, %c1_102, %c0_103] : memref<10x10x128xbf16, #tpu.memory_space<vmem>>, vector<8x8x128xbf16>
    %103 = vector.shape_cast %102 : vector<8x8x128xbf16> to vector<64x128xbf16>
    %c4_104 = arith.constant 4 : index
    %c0_105 = arith.constant 0 : index
    %c0_106 = arith.constant 0 : index
    %104 = vector.load %arg5[%c4_104, %c0_105, %c0_106] : memref<9x128x128xbf16, #tpu.memory_space<vmem>>, vector<1x128x128xbf16>
    %105 = vector.shape_cast %104 : vector<1x128x128xbf16> to vector<128x128xbf16>
    %cst_107 = arith.constant dense<0.000000e+00> : vector<64x128xf32>
    %106 = tpu.matmul %103, %105, %cst_107 {dimension_numbers = #tpu.dot_dimension_numbers<[1], [0], [0], [1], [0, 0, 1, 1], [], []>} : vector<64x128xbf16>, vector<128x128xbf16>, vector<64x128xf32> -> vector<64x128xf32>
    %107 = arith.addf %101, %106 : vector<64x128xf32>
    %c1_108 = arith.constant 1 : index
    %c2_109 = arith.constant 2 : index
    %c0_110 = arith.constant 0 : index
    %108 = vector.load %arg12[%c1_108, %c2_109, %c0_110] : memref<10x10x128xbf16, #tpu.memory_space<vmem>>, vector<8x8x128xbf16>
    %109 = vector.shape_cast %108 : vector<8x8x128xbf16> to vector<64x128xbf16>
    %c5_111 = arith.constant 5 : index
    %c0_112 = arith.constant 0 : index
    %c0_113 = arith.constant 0 : index
    %110 = vector.load %arg5[%c5_111, %c0_112, %c0_113] : memref<9x128x128xbf16, #tpu.memory_space<vmem>>, vector<1x128x128xbf16>
    %111 = vector.shape_cast %110 : vector<1x128x128xbf16> to vector<128x128xbf16>
    %cst_114 = arith.constant dense<0.000000e+00> : vector<64x128xf32>
    %112 = tpu.matmul %109, %111, %cst_114 {dimension_numbers = #tpu.dot_dimension_numbers<[1], [0], [0], [1], [0, 0, 1, 1], [], []>} : vector<64x128xbf16>, vector<128x128xbf16>, vector<64x128xf32> -> vector<64x128xf32>
    %113 = arith.addf %107, %112 : vector<64x128xf32>
    %c2_115 = arith.constant 2 : index
    %c0_116 = arith.constant 0 : index
    %c0_117 = arith.constant 0 : index
    %114 = vector.load %arg12[%c2_115, %c0_116, %c0_117] : memref<10x10x128xbf16, #tpu.memory_space<vmem>>, vector<8x8x128xbf16>
    %115 = vector.shape_cast %114 : vector<8x8x128xbf16> to vector<64x128xbf16>
    %c6_118 = arith.constant 6 : index
    %c0_119 = arith.constant 0 : index
    %c0_120 = arith.constant 0 : index
    %116 = vector.load %arg5[%c6_118, %c0_119, %c0_120] : memref<9x128x128xbf16, #tpu.memory_space<vmem>>, vector<1x128x128xbf16>
    %117 = vector.shape_cast %116 : vector<1x128x128xbf16> to vector<128x128xbf16>
    %cst_121 = arith.constant dense<0.000000e+00> : vector<64x128xf32>
    %118 = tpu.matmul %115, %117, %cst_121 {dimension_numbers = #tpu.dot_dimension_numbers<[1], [0], [0], [1], [0, 0, 1, 1], [], []>} : vector<64x128xbf16>, vector<128x128xbf16>, vector<64x128xf32> -> vector<64x128xf32>
    %119 = arith.addf %113, %118 : vector<64x128xf32>
    %c2_122 = arith.constant 2 : index
    %c1_123 = arith.constant 1 : index
    %c0_124 = arith.constant 0 : index
    %120 = vector.load %arg12[%c2_122, %c1_123, %c0_124] : memref<10x10x128xbf16, #tpu.memory_space<vmem>>, vector<8x8x128xbf16>
    %121 = vector.shape_cast %120 : vector<8x8x128xbf16> to vector<64x128xbf16>
    %c7_125 = arith.constant 7 : index
    %c0_126 = arith.constant 0 : index
    %c0_127 = arith.constant 0 : index
    %122 = vector.load %arg5[%c7_125, %c0_126, %c0_127] : memref<9x128x128xbf16, #tpu.memory_space<vmem>>, vector<1x128x128xbf16>
    %123 = vector.shape_cast %122 : vector<1x128x128xbf16> to vector<128x128xbf16>
    %cst_128 = arith.constant dense<0.000000e+00> : vector<64x128xf32>
    %124 = tpu.matmul %121, %123, %cst_128 {dimension_numbers = #tpu.dot_dimension_numbers<[1], [0], [0], [1], [0, 0, 1, 1], [], []>} : vector<64x128xbf16>, vector<128x128xbf16>, vector<64x128xf32> -> vector<64x128xf32>
    %125 = arith.addf %119, %124 : vector<64x128xf32>
    %c2_129 = arith.constant 2 : index
    %c2_130 = arith.constant 2 : index
    %c0_131 = arith.constant 0 : index
    %126 = vector.load %arg12[%c2_129, %c2_130, %c0_131] : memref<10x10x128xbf16, #tpu.memory_space<vmem>>, vector<8x8x128xbf16>
    %127 = vector.shape_cast %126 : vector<8x8x128xbf16> to vector<64x128xbf16>
    %c8_132 = arith.constant 8 : index
    %c0_133 = arith.constant 0 : index
    %c0_134 = arith.constant 0 : index
    %128 = vector.load %arg5[%c8_132, %c0_133, %c0_134] : memref<9x128x128xbf16, #tpu.memory_space<vmem>>, vector<1x128x128xbf16>
    %129 = vector.shape_cast %128 : vector<1x128x128xbf16> to vector<128x128xbf16>
    %cst_135 = arith.constant dense<0.000000e+00> : vector<64x128xf32>
    %130 = tpu.matmul %127, %129, %cst_135 {dimension_numbers = #tpu.dot_dimension_numbers<[1], [0], [0], [1], [0, 0, 1, 1], [], []>} : vector<64x128xbf16>, vector<128x128xbf16>, vector<64x128xf32> -> vector<64x128xf32>
    %131 = arith.addf %125, %130 : vector<64x128xf32>
    %c0_136 = arith.constant 0 : index
    %c0_137 = arith.constant 0 : index
    %132 = vector.load %arg6[%c0_136, %c0_137] : memref<1x128xf32, #tpu.memory_space<vmem>>, vector<1x128xf32>
    %133 = vector.broadcast %132 : vector<1x128xf32> to vector<64x128xf32>
    %134 = arith.mulf %131, %133 : vector<64x128xf32>
    %c0_138 = arith.constant 0 : index
    %c0_139 = arith.constant 0 : index
    %135 = vector.load %arg7[%c0_138, %c0_139] : memref<1x128xf32, #tpu.memory_space<vmem>>, vector<1x128xf32>
    %136 = vector.broadcast %135 : vector<1x128xf32> to vector<64x128xf32>
    %137 = arith.addf %134, %136 : vector<64x128xf32>
    %c0_140 = arith.constant 0 : index
    %c0_141 = arith.constant 0 : index
    %c0_142 = arith.constant 0 : index
    %c384_143 = arith.constant 384 : index
    %138 = vector.load %arg1[%c0_140, %c0_141, %c0_142, %c384_143] : memref<1x9x9x512xbf16, #tpu.memory_space<vmem>>, vector<1x8x8x128xbf16>
    %139 = vector.shape_cast %138 : vector<1x8x8x128xbf16> to vector<8x8x128xbf16>
    %140 = vector.shape_cast %139 : vector<8x8x128xbf16> to vector<64x128xbf16>
    %c0_144 = arith.constant 0 : index
    %c0_145 = arith.constant 0 : index
    %141 = vector.load %arg8[%c0_144, %c0_145] : memref<128x128xbf16, #tpu.memory_space<vmem>>, vector<128x128xbf16>
    %cst_146 = arith.constant dense<0.000000e+00> : vector<64x128xf32>
    %142 = tpu.matmul %140, %141, %cst_146 {dimension_numbers = #tpu.dot_dimension_numbers<[1], [0], [0], [1], [0, 0, 1, 1], [], []>} : vector<64x128xbf16>, vector<128x128xbf16>, vector<64x128xf32> -> vector<64x128xf32>
    %c0_147 = arith.constant 0 : index
    %c0_148 = arith.constant 0 : index
    %143 = vector.load %arg9[%c0_147, %c0_148] : memref<1x128xf32, #tpu.memory_space<vmem>>, vector<1x128xf32>
    %144 = vector.broadcast %143 : vector<1x128xf32> to vector<64x128xf32>
    %145 = arith.mulf %142, %144 : vector<64x128xf32>
    %c0_149 = arith.constant 0 : index
    %c0_150 = arith.constant 0 : index
    %146 = vector.load %arg10[%c0_149, %c0_150] : memref<1x128xf32, #tpu.memory_space<vmem>>, vector<1x128xf32>
    %147 = vector.broadcast %146 : vector<1x128xf32> to vector<64x128xf32>
    %148 = arith.addf %145, %147 : vector<64x128xf32>
    %149 = arith.addf %137, %148 : vector<64x128xf32>
    %cst_151 = arith.constant 0.000000e+00 : f32
    %150 = vector.broadcast %cst_151 : f32 to vector<64x128xf32>
    %151 = arith.maximumf %149, %150 : vector<64x128xf32>
    %152 = vector.shape_cast %151 : vector<64x128xf32> to vector<8x8x128xf32>
    %153 = arith.truncf %152 : vector<8x8x128xf32> to vector<8x8x128xbf16>
    %c0_152 = arith.constant 0 : index
    %c0_153 = arith.constant 0 : index
    %c0_154 = arith.constant 0 : index
    %c0_155 = arith.constant 0 : index
    %154 = vector.load %arg11[%c0_152, %c0_153, %c0_154, %c0_155] : memref<1x8x8x128xbf16, #tpu.memory_space<vmem>>, vector<1x8x8x128xbf16>
    %155 = vector.shape_cast %154 : vector<1x8x8x128xbf16> to vector<8x8x128xbf16>
    %156 = vector.shape_cast %153 : vector<8x8x128xbf16> to vector<1x8x8x128xbf16>
    tpu.vector_store %arg11[%c0_152, %c0_153, %c0_154, %c0_155], %156 {strides = array<i32>} : memref<1x8x8x128xbf16, #tpu.memory_space<vmem>>, vector<1x8x8x128xbf16>,
    return
  }
  func.func @transform_0(%arg0: i32) -> (i32, i32, i32, i32) {
    %c0_i32 = arith.constant 0 : i32
    %c0_i32_0 = arith.constant 0 : i32
    %c0_i32_1 = arith.constant 0 : i32
    %c0_i32_2 = arith.constant 0 : i32
    return %arg0, %c0_i32, %c0_i32_0, %c0_i32_1 : i32, i32, i32, i32
  }
  func.func @transform_1(%arg0: i32) -> (i32, i32, i32) {
    %c0_i32 = arith.constant 0 : i32
    %c0_i32_0 = arith.constant 0 : i32
    %c0_i32_1 = arith.constant 0 : i32
    %c0_i32_2 = arith.constant 0 : i32
    return %c0_i32, %c0_i32_0, %c0_i32_1 : i32, i32, i32
  }
  func.func @transform_2(%arg0: i32) -> (i32, i32) {
    %c0_i32 = arith.constant 0 : i32
    %c0_i32_0 = arith.constant 0 : i32
    %c0_i32_1 = arith.constant 0 : i32
    return %c0_i32, %c0_i32_0 : i32, i32
  }
  func.func @transform_3(%arg0: i32) -> (i32, i32) {
    %c0_i32 = arith.constant 0 : i32
    %c0_i32_0 = arith.constant 0 : i32
    %c0_i32_1 = arith.constant 0 : i32
    return %c0_i32, %c0_i32_0 : i32, i32
  }
  func.func @transform_4(%arg0: i32) -> (i32, i32, i32) {
    %c0_i32 = arith.constant 0 : i32
    %c0_i32_0 = arith.constant 0 : i32
    %c0_i32_1 = arith.constant 0 : i32
    %c0_i32_2 = arith.constant 0 : i32
    return %c0_i32, %c0_i32_0, %c0_i32_1 : i32, i32, i32
  }
  func.func @transform_5(%arg0: i32) -> (i32, i32) {
    %c0_i32 = arith.constant 0 : i32
    %c0_i32_0 = arith.constant 0 : i32
    %c0_i32_1 = arith.constant 0 : i32
    return %c0_i32, %c0_i32_0 : i32, i32
  }
  func.func @transform_6(%arg0: i32) -> (i32, i32) {
    %c0_i32 = arith.constant 0 : i32
    %c0_i32_0 = arith.constant 0 : i32
    %c0_i32_1 = arith.constant 0 : i32
    return %c0_i32, %c0_i32_0 : i32, i32
  }
  func.func @transform_7(%arg0: i32) -> (i32, i32) {
    %c0_i32 = arith.constant 0 : i32
    %c0_i32_0 = arith.constant 0 : i32
    %c0_i32_1 = arith.constant 0 : i32
    return %c0_i32, %c0_i32_0 : i32, i32
  }
  func.func @transform_8(%arg0: i32) -> (i32, i32) {
    %c0_i32 = arith.constant 0 : i32
    %c0_i32_0 = arith.constant 0 : i32
    %c0_i32_1 = arith.constant 0 : i32
    return %c0_i32, %c0_i32_0 : i32, i32
  }
  func.func @transform_9(%arg0: i32) -> (i32, i32) {
    %c0_i32 = arith.constant 0 : i32
    %c0_i32_0 = arith.constant 0 : i32
    %c0_i32_1 = arith.constant 0 : i32
    return %c0_i32, %c0_i32_0 : i32, i32
  }
  func.func @transform_10(%arg0: i32) -> (i32, i32, i32, i32) {
    %c0_i32 = arith.constant 0 : i32
    %c0_i32_0 = arith.constant 0 : i32
    %c0_i32_1 = arith.constant 0 : i32
    %c0_i32_2 = arith.constant 0 : i32
    return %arg0, %c0_i32, %c0_i32_0, %c0_i32_1 : i32, i32, i32, i32
  }
}

</mosaic_0001>

<llo_original>
// kernel: tpu_custom_call.1
$region0: #{tpu_custom_call.1}
  #allocation0 [shape = 'u32[]', space=smem, size = 0x4, offset = 0x4, fixed_abs, tag = 'smem constant byte address 0x4 - core index']
  #allocation1 [shape = 'u32[144,128]{1,0:T(1,128)}', space=vmem, size = 0x12000, scoped, tag = 'internal scratch']
  #allocation2 [shape = 'bf16[10,10,128]{2,1,0:T(8,128)(2,1)}', space=vmem, size = 0xa000, scoped, tag = 'scratch operand']
  %s0 = inlined_call_operand.vmem [shape: bf16[2,9,9,512], index: 0, kind: input, shape index: {}]
  %s1 = inlined_call_operand.vmem [shape: bf16[9,128,128], index: 1, kind: input, shape index: {}]
  %s2 = inlined_call_operand.vmem [shape: f32[1,128], index: 2, kind: input, shape index: {}]
  %s3 = inlined_call_operand.vmem [shape: f32[1,128], index: 3, kind: input, shape index: {}]
  %s4 = inlined_call_operand.hbm [shape: bf16[9,128,128], index: 4, kind: input, shape index: {}]
  %s5 = inlined_call_operand.vmem [shape: f32[1,128], index: 5, kind: input, shape index: {}]
  %s6 = inlined_call_operand.vmem [shape: f32[1,128], index: 6, kind: input, shape index: {}]
  %s7 = inlined_call_operand.vmem [shape: bf16[128,128], index: 7, kind: input, shape index: {}]
  %s8 = inlined_call_operand.vmem [shape: f32[1,128], index: 8, kind: input, shape index: {}]
  %s9 = inlined_call_operand.vmem [shape: f32[1,128], index: 9, kind: input, shape index: {}]
  %s10 = inlined_call_operand.hbm [shape: bf16[2,8,8,128], index: 10, kind: output, shape index: {}]
  %s11 = sld [smem:[#allocation0]]
  $region77: #{tpu_custom_call.1} parent=0
    _
  %s13 = ssub.s32 1, %s11
  %s14 = scalar_select 0, %s13, %s11
  $region1: #{tpu_custom_call.1} parent=0
    #allocation3 [shape = 'u8[294912]{0}', space=vmem, size = 0x48000, scoped, tag = 'input window, operand 4, single buffered']
    #allocation4 [shape = 's32[2]{0}', space=sflag, size = 0x8, scoped, tag = 'scoped memory for tpu_custom_call.1']
    #allocation5 [shape = 's32[2]{0}', space=sflag, size = 0x8, scoped, tag = 'scoped memory for tpu_custom_call.1']
    #allocation6 [shape = 'u8[32768]{0}', space=vmem, size = 0x8000, scoped, tag = 'output window, operand 0']
    %15 = vsyncpa [#allocation4], 0
    %16 = vsyncpa [#allocation5], 0
    %s17 = scalar_lea.sflag [#allocation5], 1
    %18 = vsyncpa %s17, 0
    loop: start=0, step=1, limit=4
    $region2: #{tpu_custom_call.1} parent=1 // loop_pre_header
      _
    $region3: #{tpu_custom_call.1} parent=1 // loop_header
      %s20 = sphi 0, %s24
      %p21 = scmp.ge.s32.totalorder %s20, 4
      %s30 = sphi 0, %s32
      %s33 = sphi 0, %s30
      %s34 = sphi 0, %s33
      %s50 = sphi 0, %s34
      %s54 = sphi 0, %s54
      %s56 = sphi 0, %s54
      %s57 = sphi 0, %s56
      %s71 = sphi 0, %s57
      %s75 = sphi 0, %s75
      %s77 = sphi 0, %s75
      %s78 = sphi 0, %s77
      %s92 = sphi 0, %s78
      %s96 = sphi 0, %s96
      %s98 = sphi 0, %s96
      %s99 = sphi 0, %s98
      %s113 = sphi 0, %s99
      %s117 = sphi 0, %s117
      %s119 = sphi 0, %s117
      %s120 = sphi 0, %s119
      %s134 = sphi 0, %s120
      %s138 = sphi 0, %s138
      %s140 = sphi 0, %s138
      %s141 = sphi 0, %s140
      %s155 = sphi 0, %s141
      %s159 = sphi 0, %s159
      %s161 = sphi 0, %s159
      %s162 = sphi 0, %s161
      %s176 = sphi 0, %s162
      %s180 = sphi 0, %s180
      %s182 = sphi 0, %s180
      %s183 = sphi 0, %s182
      %s197 = sphi 0, %s183
      %s201 = sphi 0, %s201
      %s203 = sphi 0, %s201
      %s204 = sphi 0, %s203
      %s218 = sphi 0, %s204
      %s222 = sphi 0, %s222
      %s224 = sphi 0, %s222
      %s225 = sphi 0, %s224
      %s239 = sphi 0, %s225
      %s245 = sphi 0, %s247
      %s248 = sphi 0, %s245
      %s249 = sphi 0, %s248
      %s265 = sphi 0, %s249
    $region4: #{tpu_custom_call.1} parent=1 // loop_header_branch
      %23 = sbr.rel (%p21) target = $region8
    $region5: #{tpu_custom_call.1} parent=1 // loop_body
      %s25 = ssub.s32 %s20, 1
      %s26 = ssub.s32 %s20, 2
      %s27 = sadd.s32 %s20, 1
      %s28 = ssub.s32 %s20, %s27
      %p29 = scmp.eq.s32.totalorder %s28, 0
      %s31 = sadd.s32 %s30, 1
      %s32 = scalar_select %p29, %s30, %s31
      %p35 = pneg %p29
      %p36 = scmp.eq.s32.totalorder %s20, 1
      %p37 = por %p35, %p36
      %p38 = scmp.ne.s32.totalorder %s30, %s33
      %p39 = scmp.eq.s32.totalorder %s20, 0
      %p40 = por %p38, %p39
      %p41 = scmp.ne.s32.totalorder %s30, %s33
      %p42 = scmp.eq.s32.totalorder %s25, 1
      %p43 = por %p41, %p42
      %p44 = scmp.ne.s32.totalorder %s33, %s34
      %p45 = scmp.eq.s32.totalorder %s25, 0
      %p46 = por %p44, %p45
      %p47 = scmp.ne.s32.totalorder %s33, %s34
      %p48 = scmp.eq.s32.totalorder %s26, 1
      %p49 = por %p47, %p48
      %p51 = scmp.ne.s32.totalorder %s34, %s50
      %p52 = scmp.eq.s32.totalorder %s26, 0
      %p53 = por %p51, %p52
      %s55 = sadd.s32 %s54, 1
      %p58 = scmp.eq.s32.totalorder %s20, 1
      %p59 = scmp.ne.s32.totalorder %s54, %s56
      %p60 = scmp.eq.s32.totalorder %s20, 0
      %p61 = por %p59, %p60
      %p62 = scmp.ne.s32.totalorder %s54, %s56
      %p63 = scmp.eq.s32.totalorder %s25, 1
      %p64 = por %p62, %p63
      %p65 = scmp.ne.s32.totalorder %s56, %s57
      %p66 = scmp.eq.s32.totalorder %s25, 0
      %p67 = por %p65, %p66
      %p68 = scmp.ne.s32.totalorder %s56, %s57
      %p69 = scmp.eq.s32.totalorder %s26, 1
      %p70 = por %p68, %p69
      %p72 = scmp.ne.s32.totalorder %s57, %s71
      %p73 = scmp.eq.s32.totalorder %s26, 0
      %p74 = por %p72, %p73
      %s76 = sadd.s32 %s75, 1
      %p79 = scmp.eq.s32.totalorder %s20, 1
      %p80 = scmp.ne.s32.totalorder %s75, %s77
      %p81 = scmp.eq.s32.totalorder %s20, 0
      %p82 = por %p80, %p81
      %p83 = scmp.ne.s32.totalorder %s75, %s77
      %p84 = scmp.eq.s32.totalorder %s25, 1
      %p85 = por %p83, %p84
      %p86 = scmp.ne.s32.totalorder %s77, %s78
      %p87 = scmp.eq.s32.totalorder %s25, 0
      %p88 = por %p86, %p87
      %p89 = scmp.ne.s32.totalorder %s77, %s78
      %p90 = scmp.eq.s32.totalorder %s26, 1
      %p91 = por %p89, %p90
      %p93 = scmp.ne.s32.totalorder %s78, %s92
      %p94 = scmp.eq.s32.totalorder %s26, 0
      %p95 = por %p93, %p94
      %s97 = sadd.s32 %s96, 1
      %p100 = scmp.eq.s32.totalorder %s20, 1
      %p101 = scmp.ne.s32.totalorder %s96, %s98
      %p102 = scmp.eq.s32.totalorder %s20, 0
      %p103 = por %p101, %p102
      %p104 = scmp.ne.s32.totalorder %s96, %s98
      %p105 = scmp.eq.s32.totalorder %s25, 1
      %p106 = por %p104, %p105
      %p107 = scmp.ne.s32.totalorder %s98, %s99
      %p108 = scmp.eq.s32.totalorder %s25, 0
      %p109 = por %p107, %p108
      %p110 = scmp.ne.s32.totalorder %s98, %s99
      %p111 = scmp.eq.s32.totalorder %s26, 1
      %p112 = por %p110, %p111
      %p114 = scmp.ne.s32.totalorder %s99, %s113
      %p115 = scmp.eq.s32.totalorder %s26, 0
      %p116 = por %p114, %p115
      %s118 = sadd.s32 %s117, 1
      %p121 = scmp.eq.s32.totalorder %s20, 1
      %p122 = scmp.ne.s32.totalorder %s117, %s119
      %p123 = scmp.eq.s32.totalorder %s20, 0
      %p124 = por %p122, %p123
      %p125 = scmp.ne.s32.totalorder %s117, %s119
      %p126 = scmp.eq.s32.totalorder %s25, 1
      %p127 = por %p125, %p126
      %p128 = scmp.ne.s32.totalorder %s119, %s120
      %p129 = scmp.eq.s32.totalorder %s25, 0
      %p130 = por %p128, %p129
      %p131 = scmp.ne.s32.totalorder %s119, %s120
      %p132 = scmp.eq.s32.totalorder %s26, 1
      %p133 = por %p131, %p132
      %p135 = scmp.ne.s32.totalorder %s120, %s134
      %p136 = scmp.eq.s32.totalorder %s26, 0
      %p137 = por %p135, %p136
      %s139 = sadd.s32 %s138, 1
      %p142 = scmp.eq.s32.totalorder %s20, 1
      %p143 = scmp.ne.s32.totalorder %s138, %s140
      %p144 = scmp.eq.s32.totalorder %s20, 0
      %p145 = por %p143, %p144
      %p146 = scmp.ne.s32.totalorder %s138, %s140
      %p147 = scmp.eq.s32.totalorder %s25, 1
      %p148 = por %p146, %p147
      %p149 = scmp.ne.s32.totalorder %s140, %s141
      %p150 = scmp.eq.s32.totalorder %s25, 0
      %p151 = por %p149, %p150
      %p152 = scmp.ne.s32.totalorder %s140, %s141
      %p153 = scmp.eq.s32.totalorder %s26, 1
      %p154 = por %p152, %p153
      %p156 = scmp.ne.s32.totalorder %s141, %s155
      %p157 = scmp.eq.s32.totalorder %s26, 0
      %p158 = por %p156, %p157
      %s160 = sadd.s32 %s159, 1
      %p163 = scmp.eq.s32.totalorder %s20, 1
      %p164 = scmp.ne.s32.totalorder %s159, %s161
      %p165 = scmp.eq.s32.totalorder %s20, 0
      %p166 = por %p164, %p165
      %p167 = scmp.ne.s32.totalorder %s159, %s161
      %p168 = scmp.eq.s32.totalorder %s25, 1
      %p169 = por %p167, %p168
      %p170 = scmp.ne.s32.totalorder %s161, %s162
      %p171 = scmp.eq.s32.totalorder %s25, 0
      %p172 = por %p170, %p171
      %p173 = scmp.ne.s32.totalorder %s161, %s162
      %p174 = scmp.eq.s32.totalorder %s26, 1
      %p175 = por %p173, %p174
      %p177 = scmp.ne.s32.totalorder %s162, %s176
      %p178 = scmp.eq.s32.totalorder %s26, 0
      %p179 = por %p177, %p178
      %s181 = sadd.s32 %s180, 1
      %p184 = scmp.eq.s32.totalorder %s20, 1
      %p185 = scmp.ne.s32.totalorder %s180, %s182
      %p186 = scmp.eq.s32.totalorder %s20, 0
      %p187 = por %p185, %p186
      %p188 = scmp.ne.s32.totalorder %s180, %s182
      %p189 = scmp.eq.s32.totalorder %s25, 1
      %p190 = por %p188, %p189
      %p191 = scmp.ne.s32.totalorder %s182, %s183
      %p192 = scmp.eq.s32.totalorder %s25, 0
      %p193 = por %p191, %p192
      %p194 = scmp.ne.s32.totalorder %s182, %s183
      %p195 = scmp.eq.s32.totalorder %s26, 1
      %p196 = por %p194, %p195
      %p198 = scmp.ne.s32.totalorder %s183, %s197
      %p199 = scmp.eq.s32.totalorder %s26, 0
      %p200 = por %p198, %p199
      %s202 = sadd.s32 %s201, 1
      %p205 = scmp.eq.s32.totalorder %s20, 1
      %p206 = scmp.ne.s32.totalorder %s201, %s203
      %p207 = scmp.eq.s32.totalorder %s20, 0
      %p208 = por %p206, %p207
      %p209 = scmp.ne.s32.totalorder %s201, %s203
      %p210 = scmp.eq.s32.totalorder %s25, 1
      %p211 = por %p209, %p210
      %p212 = scmp.ne.s32.totalorder %s203, %s204
      %p213 = scmp.eq.s32.totalorder %s25, 0
      %p214 = por %p212, %p213
      %p215 = scmp.ne.s32.totalorder %s203, %s204
      %p216 = scmp.eq.s32.totalorder %s26, 1
      %p217 = por %p215, %p216
      %p219 = scmp.ne.s32.totalorder %s204, %s218
      %p220 = scmp.eq.s32.totalorder %s26, 0
      %p221 = por %p219, %p220
      %s223 = sadd.s32 %s222, 1
      %p226 = scmp.eq.s32.totalorder %s20, 1
      %p227 = scmp.ne.s32.totalorder %s222, %s224
      %p228 = scmp.eq.s32.totalorder %s20, 0
      %p229 = por %p227, %p228
      %p230 = scmp.ne.s32.totalorder %s222, %s224
      %p231 = scmp.eq.s32.totalorder %s25, 1
      %p232 = por %p230, %p231
      %p233 = scmp.ne.s32.totalorder %s224, %s225
      %p234 = scmp.eq.s32.totalorder %s25, 0
      %p235 = por %p233, %p234
      %p236 = scmp.ne.s32.totalorder %s224, %s225
      %p237 = scmp.eq.s32.totalorder %s26, 1
      %p238 = por %p236, %p237
      %p240 = scmp.ne.s32.totalorder %s225, %s239
      %p241 = scmp.eq.s32.totalorder %s26, 0
      %p242 = por %p240, %p241
      %s243 = ssub.s32 %s20, %s27
      %p244 = scmp.eq.s32.totalorder %s243, 0
      %s246 = sadd.s32 %s245, 1
      %s247 = scalar_select %p244, %s245, %s246
      %p250 = pneg %p244
      %p251 = scmp.eq.s32.totalorder %s20, 1
      %p252 = por %p250, %p251
      %p253 = scmp.ne.s32.totalorder %s245, %s248
      %p254 = scmp.eq.s32.totalorder %s20, 0
      %p255 = por %p253, %p254
      %p256 = scmp.ne.s32.totalorder %s245, %s248
      %p257 = scmp.eq.s32.totalorder %s25, 1
      %p258 = por %p256, %p257
      %p259 = scmp.ne.s32.totalorder %s248, %s249
      %p260 = scmp.eq.s32.totalorder %s25, 0
      %p261 = por %p259, %p260
      %p262 = scmp.ne.s32.totalorder %s248, %s249
      %p263 = scmp.eq.s32.totalorder %s26, 1
      %p264 = por %p262, %p263
      %p266 = scmp.ne.s32.totalorder %s249, %s265
      %p267 = scmp.eq.s32.totalorder %s26, 0
      %p268 = por %p266, %p267
      %p269 = scmp.le.s32.totalorder 1, %s20
      %p270 = scmp.lt.s32.totalorder %s20, 3
      %p271 = pnand %p269, %p270
      %p272 = pneg %p271
      // Predicated region
      $region9: #{tpu_custom_call.1} parent=5 // pred_check
        _
      $region10: #{tpu_custom_call.1} parent=5 // pred_check_branch
        %274 = sbr.rel (%p271) target = $region12
      $region11: #{tpu_custom_call.1} parent=5 // pred_region
        %s275 = ssub.s32 %s20, 1
        // Predicated region
        $region13: #{tpu_custom_call.1} parent=11 // pred_check
          %p276 = pneg %p67
        $region14: #{tpu_custom_call.1} parent=11 // pred_check_branch
          %278 = sbr.rel (%p276) target = $region16
        $region15: #{tpu_custom_call.1} parent=11 // pred_region
          _
        $region16: #{tpu_custom_call.1} parent=11 // pred_fallthru
          _
        // Predicated region
        $region17: #{tpu_custom_call.1} parent=11 // pred_check
          %p279 = pneg %p88
        $region18: #{tpu_custom_call.1} parent=11 // pred_check_branch
          %281 = sbr.rel (%p279) target = $region20
        $region19: #{tpu_custom_call.1} parent=11 // pred_region
          _
        $region20: #{tpu_custom_call.1} parent=11 // pred_fallthru
          _
        // Predicated region
        $region21: #{tpu_custom_call.1} parent=11 // pred_check
          %p282 = pneg %p109
        $region22: #{tpu_custom_call.1} parent=11 // pred_check_branch
          %284 = sbr.rel (%p282) target = $region24
        $region23: #{tpu_custom_call.1} parent=11 // pred_region
          _
        $region24: #{tpu_custom_call.1} parent=11 // pred_fallthru
          _
        // Predicated region
        $region25: #{tpu_custom_call.1} parent=11 // pred_check
          %p285 = pneg %p130
        $region26: #{tpu_custom_call.1} parent=11 // pred_check_branch
          %287 = sbr.rel (%p285) target = $region28
        $region27: #{tpu_custom_call.1} parent=11 // pred_region
          %s289 = ssub.s32 9216, 9216
          %290 = vsyncadd [#allocation4], %s289
          %s291 = sshll.u32 [#allocation3], 4
          %s292 = int_to_ptr.vmem [resolvable:$true] %s291
          %297 = dma.hbm_to_vmem [thread:$0]  %s4, 9216, %s292, [#allocation4], 64, 64, 4
        $region28: #{tpu_custom_call.1} parent=11 // pred_fallthru
          _
        // Predicated region
        $region29: #{tpu_custom_call.1} parent=11 // pred_check
          %p298 = pneg %p151
        $region30: #{tpu_custom_call.1} parent=11 // pred_check_branch
          %300 = sbr.rel (%p298) target = $region32
        $region31: #{tpu_custom_call.1} parent=11 // pred_region
          _
        $region32: #{tpu_custom_call.1} parent=11 // pred_fallthru
          _
        // Predicated region
        $region33: #{tpu_custom_call.1} parent=11 // pred_check
          %p301 = pneg %p172
        $region34: #{tpu_custom_call.1} parent=11 // pred_check_branch
          %303 = sbr.rel (%p301) target = $region36
        $region35: #{tpu_custom_call.1} parent=11 // pred_region
          _
        $region36: #{tpu_custom_call.1} parent=11 // pred_fallthru
          _
        // Predicated region
        $region37: #{tpu_custom_call.1} parent=11 // pred_check
          %p304 = pneg %p193
        $region38: #{tpu_custom_call.1} parent=11 // pred_check_branch
          %306 = sbr.rel (%p304) target = $region40
        $region39: #{tpu_custom_call.1} parent=11 // pred_region
          _
        $region40: #{tpu_custom_call.1} parent=11 // pred_fallthru
          _
        // Predicated region
        $region41: #{tpu_custom_call.1} parent=11 // pred_check
          %p307 = pneg %p214
        $region42: #{tpu_custom_call.1} parent=11 // pred_check_branch
          %309 = sbr.rel (%p307) target = $region44
        $region43: #{tpu_custom_call.1} parent=11 // pred_region
          _
        $region44: #{tpu_custom_call.1} parent=11 // pred_fallthru
          _
        // Predicated region
        $region45: #{tpu_custom_call.1} parent=11 // pred_check
          %p310 = pneg %p235
        $region46: #{tpu_custom_call.1} parent=11 // pred_check_branch
          %312 = sbr.rel (%p310) target = $region48
        $region47: #{tpu_custom_call.1} parent=11 // pred_region
          _
        $region48: #{tpu_custom_call.1} parent=11 // pred_fallthru
          _
      $region12: #{tpu_custom_call.1} parent=5 // pred_fallthru
        _
      %p313 = scmp.lt.s32.totalorder %s20, 2
      // Predicated region
      $region49: #{tpu_custom_call.1} parent=5 // pred_check
        %p314 = pneg %p313
      $region50: #{tpu_custom_call.1} parent=5 // pred_check_branch
        %316 = sbr.rel (%p314) target = $region52
      $region51: #{tpu_custom_call.1} parent=5 // pred_region
        // Predicated region
        $region53: #{tpu_custom_call.1} parent=51 // pred_check
          %p317 = pneg %p40
        $region54: #{tpu_custom_call.1} parent=51 // pred_check_branch
          %319 = sbr.rel (%p317) target = $region56
        $region55: #{tpu_custom_call.1} parent=51 // pred_region
          %p320 = scmp.lt.s32.totalorder %s20, 1
          %s321 = scalar_select %p320, %s20, 1
          %s322 = smul.addr %s321, 72
          %s323 = smul.addr %s322, 4
          %s324 = scalar_lea.vmem %s0, %s323
        $region56: #{tpu_custom_call.1} parent=51 // pred_fallthru
          _
      $region52: #{tpu_custom_call.1} parent=5 // pred_fallthru
        _
      %p325 = scmp.le.s32.totalorder 1, %s20
      %p326 = scmp.lt.s32.totalorder %s20, 3
      %p327 = pnand %p325, %p326
      %p328 = pneg %p327
      // Predicated region
      $region57: #{tpu_custom_call.1} parent=5 // pred_check
        _
      $region58: #{tpu_custom_call.1} parent=5 // pred_check_branch
        %330 = sbr.rel (%p327) target = $region60
      $region59: #{tpu_custom_call.1} parent=5 // pred_region
        %s331 = ssub.s32 %s20, 1
        // Predicated region
        $region61: #{tpu_custom_call.1} parent=59 // pred_check
          %p332 = pneg %p130
        $region62: #{tpu_custom_call.1} parent=59 // pred_check_branch
          %334 = sbr.rel (%p332) target = $region64
        $region63: #{tpu_custom_call.1} parent=59 // pred_region
          %335 = dma.done [#allocation4], 9216
        $region64: #{tpu_custom_call.1} parent=59 // pred_fallthru
          _
        %p336 = scmp.lt.s32.totalorder %s25, 1
        %s337 = scalar_select %p336, %s25, 1
        %s338 = smul.addr %s337, 72
        %s339 = smul.addr %s338, 4
        %s340 = scalar_lea.vmem %s0, %s339
        %p341 = pneg %p46
        %p342 = pneg %p43
        %p343 = pneg %p67
        %p344 = pneg %p64
        %p345 = pneg %p88
        %p346 = pneg %p85
        %p347 = pneg %p109
        %p348 = pneg %p106
        %p349 = pneg %p130
        %p350 = pneg %p127
        %p351 = pneg %p151
        %p352 = pneg %p148
        %p353 = pneg %p172
        %p354 = pneg %p169
        %p355 = pneg %p193
        %p356 = pneg %p190
        %p357 = pneg %p214
        %p358 = pneg %p211
        %p359 = pneg %p235
        %p360 = pneg %p232
        %p361 = pneg %p261
        %p362 = pneg %p258
        %s363 = sand.u32 %s248, 1
        %s364 = scalar_lea.sflag [#allocation5], %s363
        %s365 = sand.u32 %s248, 1
        %s366 = smul.addr %s365, 32
        %s367 = scalar_lea.vmem [#allocation6], %s366
        %p368 = scmp.lt.s32.totalorder %s25, 1
        %s369 = scalar_select %p368, %s25, 1
        %s370 = smul.addr %s369, 72
        %s371 = smul.addr %s370, 4
        %s372 = scalar_lea.vmem %s0, %s371
        %v374 = vld [vmem:[%s372] sm:$0xf]
        %v375 = vld [vmem:[%s372 + $0x20] sm:$0xf]
        %v376 = vld [vmem:[%s372 + $0x40] sm:$0xf]
        %v377 = vld [vmem:[%s372 + $0x60] sm:$0xf]
        %v378 = vld [vmem:[%s372 + $0x80] sm:$0xf]
        %v379 = vld [vmem:[%s372 + $0xa0] sm:$0xf]
        %v380 = vld [vmem:[%s372 + $0xc0] sm:$0xf]
        %v381 = vld [vmem:[%s372 + $0xe0] sm:$0xf]
        %v382 = vld [vmem:[%s1] sm:$0xf]
        %v383 = vld [vmem:[%s1 + $0x4] sm:$0xf]
        %v384 = vld [vmem:[%s1 + $0x8] sm:$0xf]
        %v385 = vld [vmem:[%s1 + $0xc] sm:$0xf]
        %v386 = vld [vmem:[%s1 + $0x10] sm:$0xf]
        %v387 = vld [vmem:[%s1 + $0x14] sm:$0xf]
        %v388 = vld [vmem:[%s1 + $0x18] sm:$0xf]
        %v389 = vld [vmem:[%s1 + $0x1c] sm:$0xf]
        %v390 = vld [vmem:[%s1 + $0x20] sm:$0xf]
        %v391 = vld [vmem:[%s1 + $0x24] sm:$0xf]
        %v392 = vld [vmem:[%s1 + $0x28] sm:$0xf]
        %v393 = vld [vmem:[%s1 + $0x2c] sm:$0xf]
        %v394 = vld [vmem:[%s1 + $0x30] sm:$0xf]
        %v395 = vld [vmem:[%s1 + $0x34] sm:$0xf]
        %v396 = vld [vmem:[%s1 + $0x38] sm:$0xf]
        %v397 = vld [vmem:[%s1 + $0x3c] sm:$0xf]
        %v398 = vld [vmem:[%s372 + $0x4] sm:$0xf]
        %v399 = vld [vmem:[%s372 + $0x24] sm:$0xf]
        %v400 = vld [vmem:[%s372 + $0x44] sm:$0xf]
        %v401 = vld [vmem:[%s372 + $0x64] sm:$0xf]
        %v402 = vld [vmem:[%s372 + $0x84] sm:$0xf]
        %v403 = vld [vmem:[%s372 + $0xa4] sm:$0xf]
        %v404 = vld [vmem:[%s372 + $0xc4] sm:$0xf]
        %v405 = vld [vmem:[%s372 + $0xe4] sm:$0xf]
        %s406 = scalar_lea.vmem %s1, 64
        %v407 = vld [vmem:[%s406] sm:$0xf]
        %v408 = vld [vmem:[%s406 + $0x4] sm:$0xf]
        %v409 = vld [vmem:[%s406 + $0x8] sm:$0xf]
        %v410 = vld [vmem:[%s406 + $0xc] sm:$0xf]
        %v411 = vld [vmem:[%s406 + $0x10] sm:$0xf]
        %v412 = vld [vmem:[%s406 + $0x14] sm:$0xf]
        %v413 = vld [vmem:[%s406 + $0x18] sm:$0xf]
        %v414 = vld [vmem:[%s406 + $0x1c] sm:$0xf]
        %v415 = vld [vmem:[%s406 + $0x20] sm:$0xf]
        %v416 = vld [vmem:[%s406 + $0x24] sm:$0xf]
        %v417 = vld [vmem:[%s406 + $0x28] sm:$0xf]
        %v418 = vld [vmem:[%s406 + $0x2c] sm:$0xf]
        %v419 = vld [vmem:[%s406 + $0x30] sm:$0xf]
        %v420 = vld [vmem:[%s406 + $0x34] sm:$0xf]
        %v421 = vld [vmem:[%s406 + $0x38] sm:$0xf]
        %v422 = vld [vmem:[%s406 + $0x3c] sm:$0xf]
        %v431 = vunpack.c.l.b16 %v398
        %v432 = vunpack.c.l.b16 %v399
        %v433 = vunpack.c.l.b16 %v400
        %v434 = vunpack.c.l.b16 %v401
        %v435 = vunpack.c.l.b16 %v402
        %v436 = vunpack.c.l.b16 %v403
        %v437 = vunpack.c.l.b16 %v404
        %v438 = vunpack.c.l.b16 %v405
        %v439 = vpack.c.b16 %v432, %v431
        %v440 = vpack.c.b16 %v434, %v433
        %v441 = vpack.c.b16 %v436, %v435
        %v442 = vpack.c.b16 %v438, %v437
        %v463 = vunpack.c.l.b16 %v407
        %v464 = vunpack.c.l.b16 %v408
        %v465 = vunpack.c.l.b16 %v409
        %v466 = vunpack.c.l.b16 %v410
        %v467 = vunpack.c.l.b16 %v411
        %v468 = vunpack.c.l.b16 %v412
        %v469 = vunpack.c.l.b16 %v413
        %v470 = vunpack.c.l.b16 %v414
        %v471 = vunpack.c.l.b16 %v415
        %v472 = vunpack.c.l.b16 %v416
        %v473 = vunpack.c.l.b16 %v417
        %v474 = vunpack.c.l.b16 %v418
        %v475 = vunpack.c.l.b16 %v419
        %v476 = vunpack.c.l.b16 %v420
        %v477 = vunpack.c.l.b16 %v421
        %v478 = vunpack.c.l.b16 %v422
        %v479 = vpack.c.b16 %v464, %v463
        %v480 = vpack.c.b16 %v466, %v465
        %v481 = vpack.c.b16 %v468, %v467
        %v482 = vpack.c.b16 %v470, %v469
        %v483 = vpack.c.b16 %v472, %v471
        %v484 = vpack.c.b16 %v474, %v473
        %v485 = vpack.c.b16 %v476, %v475
        %v486 = vpack.c.b16 %v478, %v477
        %495 = vmatprep.subr.bf16.mxu0 0
        %496 = vmatpush1.bf16.msra.mxu0 %v479
        %497 = vmatprep.subr.bf16.mxu0 0
        %498 = vmatpush1.bf16.msra.mxu0 %v480
        %499 = vmatprep.subr.bf16.mxu0 0
        %500 = vmatpush1.bf16.msra.mxu0 %v481
        %501 = vmatprep.subr.bf16.mxu0 0
        %502 = vmatpush1.bf16.msra.mxu0 %v482
        %503 = vmatprep.subr.bf16.mxu0 0
        %504 = vmatpush1.bf16.msra.mxu0 %v483
        %505 = vmatprep.subr.bf16.mxu0 0
        %506 = vmatpush1.bf16.msra.mxu0 %v484
        %507 = vmatprep.subr.bf16.mxu0 0
        %508 = vmatpush1.bf16.msra.mxu0 %v485
        %509 = vmatprep.subr.bf16.mxu0 0
        %510 = vmatpush1.bf16.msra.mxu0 %v486
        %511 = vmatprep.subr.bf16.mxu0 0
        %512 = vmatpush1.bf16.msra.mxu0 0
        %513 = vmatprep.subr.bf16.mxu0 0
        %514 = vmatpush1.bf16.msra.mxu0 0
        %515 = vmatprep.subr.bf16.mxu0 0
        %516 = vmatpush1.bf16.msra.mxu0 0
        %517 = vmatprep.subr.bf16.mxu0 0
        %518 = vmatpush1.bf16.msra.mxu0 0
        %519 = vmatprep.subr.bf16.mxu0 0
        %520 = vmatpush1.bf16.msra.mxu0 0
        %521 = vmatprep.subr.bf16.mxu0 0
        %522 = vmatpush1.bf16.msra.mxu0 0
        %523 = vmatprep.subr.bf16.mxu0 0
        %524 = vmatpush1.bf16.msra.mxu0 0
        %525 = vmatprep.subr.bf16.mxu0 0
        %526 = vmatpush1.bf16.msra.mxu0 0
        %527 = vmatprep.mubr.bf16.mxu0 0
        %528 = vmatmul.mubr.bf16.gmra.mrb[0].mxu0 %v439
        %v529 = vpop.f32.mrb[0].mxu0
        %v530 = vadd.f32 0.0, %v529
        %v531 = vpop.f32.mrb[0].mxu0
        %v532 = vpop.f32.mrb[0].mxu0
        %v533 = vadd.f32 0.0, %v532
        %v534 = vpop.f32.mrb[0].mxu0
        %535 = vmatprep.mubr.bf16.mxu0 0
        %536 = vmatmul.mubr.bf16.gmra.mrb[0].mxu0 %v440
        %v537 = vpop.f32.mrb[0].mxu0
        %v538 = vadd.f32 0.0, %v537
        %v539 = vpop.f32.mrb[0].mxu0
        %v540 = vpop.f32.mrb[0].mxu0
        %v541 = vadd.f32 0.0, %v540
        %v542 = vpop.f32.mrb[0].mxu0
        %543 = vmatprep.mubr.bf16.mxu0 0
        %544 = vmatmul.mubr.bf16.gmra.mrb[0].mxu0 %v441
        %v545 = vpop.f32.mrb[0].mxu0
        %v546 = vadd.f32 0.0, %v545
        %v547 = vpop.f32.mrb[0].mxu0
        %v548 = vpop.f32.mrb[0].mxu0
        %v549 = vadd.f32 0.0, %v548
        %v550 = vpop.f32.mrb[0].mxu0
        %551 = vmatprep.mubr.bf16.mxu0 0
        %552 = vmatmul.mubr.bf16.gmra.mrb[0].mxu0 %v442
        %v553 = vpop.f32.mrb[0].mxu0
        %v554 = vadd.f32 0.0, %v553
        %v555 = vpop.f32.mrb[0].mxu0
        %v556 = vpop.f32.mrb[0].mxu0
        %v557 = vadd.f32 0.0, %v556
        %v558 = vpop.f32.mrb[0].mxu0
        %559 = vdwg.mxu0
        %v568 = vunpack.c.l.b16 %v374
        %v569 = vunpack.c.l.b16 %v375
        %v570 = vunpack.c.l.b16 %v376
        %v571 = vunpack.c.l.b16 %v377
        %v572 = vunpack.c.l.b16 %v378
        %v573 = vunpack.c.l.b16 %v379
        %v574 = vunpack.c.l.b16 %v380
        %v575 = vunpack.c.l.b16 %v381
        %v576 = vpack.c.b16 %v569, %v568
        %v577 = vpack.c.b16 %v571, %v570
        %v578 = vpack.c.b16 %v573, %v572
        %v579 = vpack.c.b16 %v575, %v574
        %v600 = vunpack.c.l.b16 %v382
        %v601 = vunpack.c.l.b16 %v383
        %v602 = vunpack.c.l.b16 %v384
        %v603 = vunpack.c.l.b16 %v385
        %v604 = vunpack.c.l.b16 %v386
        %v605 = vunpack.c.l.b16 %v387
        %v606 = vunpack.c.l.b16 %v388
        %v607 = vunpack.c.l.b16 %v389
        %v608 = vunpack.c.l.b16 %v390
        %v609 = vunpack.c.l.b16 %v391
        %v610 = vunpack.c.l.b16 %v392
        %v611 = vunpack.c.l.b16 %v393
        %v612 = vunpack.c.l.b16 %v394
        %v613 = vunpack.c.l.b16 %v395
        %v614 = vunpack.c.l.b16 %v396
        %v615 = vunpack.c.l.b16 %v397
        %v616 = vpack.c.b16 %v601, %v600
        %v617 = vpack.c.b16 %v603, %v602
        %v618 = vpack.c.b16 %v605, %v604
        %v619 = vpack.c.b16 %v607, %v606
        %v620 = vpack.c.b16 %v609, %v608
        %v621 = vpack.c.b16 %v611, %v610
        %v622 = vpack.c.b16 %v613, %v612
        %v623 = vpack.c.b16 %v615, %v614
        %632 = vmatprep.subr.bf16.mxu0 0
        %633 = vmatpush1.bf16.msra.mxu0 %v616
        %634 = vmatprep.subr.bf16.mxu0 0
        %635 = vmatpush1.bf16.msra.mxu0 %v617
        %636 = vmatprep.subr.bf16.mxu0 0
        %637 = vmatpush1.bf16.msra.mxu0 %v618
        %638 = vmatprep.subr.bf16.mxu0 0
        %639 = vmatpush1.bf16.msra.mxu0 %v619
        %640 = vmatprep.subr.bf16.mxu0 0
        %641 = vmatpush1.bf16.msra.mxu0 %v620
        %642 = vmatprep.subr.bf16.mxu0 0
        %643 = vmatpush1.bf16.msra.mxu0 %v621
        %644 = vmatprep.subr.bf16.mxu0 0
        %645 = vmatpush1.bf16.msra.mxu0 %v622
        %646 = vmatprep.subr.bf16.mxu0 0
        %647 = vmatpush1.bf16.msra.mxu0 %v623
        %648 = vmatprep.subr.bf16.mxu0 0
        %649 = vmatpush1.bf16.msra.mxu0 0
        %650 = vmatprep.subr.bf16.mxu0 0
        %651 = vmatpush1.bf16.msra.mxu0 0
        %652 = vmatprep.subr.bf16.mxu0 0
        %653 = vmatpush1.bf16.msra.mxu0 0
        %654 = vmatprep.subr.bf16.mxu0 0
        %655 = vmatpush1.bf16.msra.mxu0 0
        %656 = vmatprep.subr.bf16.mxu0 0
        %657 = vmatpush1.bf16.msra.mxu0 0
        %658 = vmatprep.subr.bf16.mxu0 0
        %659 = vmatpush1.bf16.msra.mxu0 0
        %660 = vmatprep.subr.bf16.mxu0 0
        %661 = vmatpush1.bf16.msra.mxu0 0
        %662 = vmatprep.subr.bf16.mxu0 0
        %663 = vmatpush1.bf16.msra.mxu0 0
        %664 = vmatprep.mubr.bf16.mxu0 0
        %665 = vmatmul.mubr.bf16.gmra.mrb[0].mxu0 %v576
        %v666 = vpop.f32.mrb[0].mxu0
        %v667 = vadd.f32 %v530, %v666
        %v668 = vpop.f32.mrb[0].mxu0
        %v669 = vpop.f32.mrb[0].mxu0
        %v670 = vadd.f32 %v533, %v669
        %v671 = vpop.f32.mrb[0].mxu0
        %672 = vmatprep.mubr.bf16.mxu0 0
        %673 = vmatmul.mubr.bf16.gmra.mrb[0].mxu0 %v577
        %v674 = vpop.f32.mrb[0].mxu0
        %v675 = vadd.f32 %v538, %v674
        %v676 = vpop.f32.mrb[0].mxu0
        %v677 = vpop.f32.mrb[0].mxu0
        %v678 = vadd.f32 %v541, %v677
        %v679 = vpop.f32.mrb[0].mxu0
        %680 = vmatprep.mubr.bf16.mxu0 0
        %681 = vmatmul.mubr.bf16.gmra.mrb[0].mxu0 %v578
        %v682 = vpop.f32.mrb[0].mxu0
        %v683 = vadd.f32 %v546, %v682
        %v684 = vpop.f32.mrb[0].mxu0
        %v685 = vpop.f32.mrb[0].mxu0
        %v686 = vadd.f32 %v549, %v685
        %v687 = vpop.f32.mrb[0].mxu0
        %688 = vmatprep.mubr.bf16.mxu0 0
        %689 = vmatmul.mubr.bf16.gmra.mrb[0].mxu0 %v579
        %v690 = vpop.f32.mrb[0].mxu0
        %v691 = vadd.f32 %v554, %v690
        %v692 = vpop.f32.mrb[0].mxu0
        %v693 = vpop.f32.mrb[0].mxu0
        %v694 = vadd.f32 %v557, %v693
        %v695 = vpop.f32.mrb[0].mxu0
        %696 = vdwg.mxu0
        %v697 = vld [vmem:[%s372] sm:$0xf]
        %v698 = vld [vmem:[%s372 + $0x10] sm:$0x1]
        %v699 = vld [vmem:[%s372 + $0x20] sm:$0xf]
        %v700 = vld [vmem:[%s372 + $0x30] sm:$0x1]
        %v701 = vld [vmem:[%s372 + $0x40] sm:$0xf]
        %v702 = vld [vmem:[%s372 + $0x50] sm:$0x1]
        %v703 = vld [vmem:[%s372 + $0x60] sm:$0xf]
        %v704 = vld [vmem:[%s372 + $0x70] sm:$0x1]
        %v705 = vld [vmem:[%s372 + $0x80] sm:$0xf]
        %v706 = vld [vmem:[%s372 + $0x90] sm:$0x1]
        %v707 = vld [vmem:[%s372 + $0xa0] sm:$0xf]
        %v708 = vld [vmem:[%s372 + $0xb0] sm:$0x1]
        %v709 = vld [vmem:[%s372 + $0xc0] sm:$0xf]
        %v710 = vld [vmem:[%s372 + $0xd0] sm:$0x1]
        %v711 = vld [vmem:[%s372 + $0xe0] sm:$0xf]
        %v712 = vld [vmem:[%s372 + $0xf0] sm:$0x1]
        %vm713 = vsmask.f32 3328
        %vm714 = vsmask.f32 7440
        %vm715 = vmor %vm713, %vm714
        %v717 = vshrl.u32 %v697, 16
        %v719 = vrot.slane %v717, 4
        %v720 = vshll.u32 %v697, 16
        %v722 = vrot.slane %v720, 5
        %v723 = vor.u32 %v719, %v722
        %v724 = vrot.slane %v723, 4
        %v726 = vshll.u32 %v698, 16
        %v728 = vrot.slane %v726, 5
        %v729 = vsel %vm715, %v724, %v728
        %v731 = vshrl.u32 %v699, 16
        %v733 = vrot.slane %v731, 4
        %v734 = vshll.u32 %v699, 16
        %v736 = vrot.slane %v734, 5
        %v737 = vor.u32 %v733, %v736
        %v738 = vrot.slane %v737, 4
        %v740 = vshll.u32 %v700, 16
        %v742 = vrot.slane %v740, 5
        %v743 = vsel %vm715, %v738, %v742
        %v745 = vshrl.u32 %v701, 16
        %v747 = vrot.slane %v745, 4
        %v748 = vshll.u32 %v701, 16
        %v750 = vrot.slane %v748, 5
        %v751 = vor.u32 %v747, %v750
        %v752 = vrot.slane %v751, 4
        %v754 = vshll.u32 %v702, 16
        %v756 = vrot.slane %v754, 5
        %v757 = vsel %vm715, %v752, %v756
        %v759 = vshrl.u32 %v703, 16
        %v761 = vrot.slane %v759, 4
        %v762 = vshll.u32 %v703, 16
        %v764 = vrot.slane %v762, 5
        %v765 = vor.u32 %v761, %v764
        %v766 = vrot.slane %v765, 4
        %v768 = vshll.u32 %v704, 16
        %v770 = vrot.slane %v768, 5
        %v771 = vsel %vm715, %v766, %v770
        %v773 = vshrl.u32 %v705, 16
        %v775 = vrot.slane %v773, 4
        %v776 = vshll.u32 %v705, 16
        %v778 = vrot.slane %v776, 5
        %v779 = vor.u32 %v775, %v778
        %v780 = vrot.slane %v779, 4
        %v782 = vshll.u32 %v706, 16
        %v784 = vrot.slane %v782, 5
        %v785 = vsel %vm715, %v780, %v784
        %v787 = vshrl.u32 %v707, 16
        %v789 = vrot.slane %v787, 4
        %v790 = vshll.u32 %v707, 16
        %v792 = vrot.slane %v790, 5
        %v793 = vor.u32 %v789, %v792
        %v794 = vrot.slane %v793, 4
        %v796 = vshll.u32 %v708, 16
        %v798 = vrot.slane %v796, 5
        %v799 = vsel %vm715, %v794, %v798
        %v801 = vshrl.u32 %v709, 16
        %v803 = vrot.slane %v801, 4
        %v804 = vshll.u32 %v709, 16
        %v806 = vrot.slane %v804, 5
        %v807 = vor.u32 %v803, %v806
        %v808 = vrot.slane %v807, 4
        %v810 = vshll.u32 %v710, 16
        %v812 = vrot.slane %v810, 5
        %v813 = vsel %vm715, %v808, %v812
        %v815 = vshrl.u32 %v711, 16
        %v817 = vrot.slane %v815, 4
        %v818 = vshll.u32 %v711, 16
        %v820 = vrot.slane %v818, 5
        %v821 = vor.u32 %v817, %v820
        %v822 = vrot.slane %v821, 4
        %v824 = vshll.u32 %v712, 16
        %v826 = vrot.slane %v824, 5
        %v827 = vsel %vm715, %v822, %v826
        %s828 = scalar_lea.vmem %s1, 128
        %v829 = vld [vmem:[%s828] sm:$0xf]
        %v830 = vld [vmem:[%s828 + $0x4] sm:$0xf]
        %v831 = vld [vmem:[%s828 + $0x8] sm:$0xf]
        %v832 = vld [vmem:[%s828 + $0xc] sm:$0xf]
        %v833 = vld [vmem:[%s828 + $0x10] sm:$0xf]
        %v834 = vld [vmem:[%s828 + $0x14] sm:$0xf]
        %v835 = vld [vmem:[%s828 + $0x18] sm:$0xf]
        %v836 = vld [vmem:[%s828 + $0x1c] sm:$0xf]
        %v837 = vld [vmem:[%s828 + $0x20] sm:$0xf]
        %v838 = vld [vmem:[%s828 + $0x24] sm:$0xf]
        %v839 = vld [vmem:[%s828 + $0x28] sm:$0xf]
        %v840 = vld [vmem:[%s828 + $0x2c] sm:$0xf]
        %v841 = vld [vmem:[%s828 + $0x30] sm:$0xf]
        %v842 = vld [vmem:[%s828 + $0x34] sm:$0xf]
        %v843 = vld [vmem:[%s828 + $0x38] sm:$0xf]
        %v844 = vld [vmem:[%s828 + $0x3c] sm:$0xf]
        %v845 = vunpack.c.l.b16 %v729
        %v846 = vunpack.c.l.b16 %v743
        %v847 = vunpack.c.l.b16 %v757
        %v848 = vunpack.c.l.b16 %v771
        %v849 = vunpack.c.l.b16 %v785
        %v850 = vunpack.c.l.b16 %v799
        %v851 = vunpack.c.l.b16 %v813
        %v852 = vunpack.c.l.b16 %v827
        %v853 = vpack.c.b16 %v846, %v845
        %v854 = vpack.c.b16 %v848, %v847
        %v855 = vpack.c.b16 %v850, %v849
        %v856 = vpack.c.b16 %v852, %v851
        %v877 = vunpack.c.l.b16 %v829
        %v878 = vunpack.c.l.b16 %v830
        %v879 = vunpack.c.l.b16 %v831
        %v880 = vunpack.c.l.b16 %v832
        %v881 = vunpack.c.l.b16 %v833
        %v882 = vunpack.c.l.b16 %v834
        %v883 = vunpack.c.l.b16 %v835
        %v884 = vunpack.c.l.b16 %v836
        %v885 = vunpack.c.l.b16 %v837
        %v886 = vunpack.c.l.b16 %v838
        %v887 = vunpack.c.l.b16 %v839
        %v888 = vunpack.c.l.b16 %v840
        %v889 = vunpack.c.l.b16 %v841
        %v890 = vunpack.c.l.b16 %v842
        %v891 = vunpack.c.l.b16 %v843
        %v892 = vunpack.c.l.b16 %v844
        %v893 = vpack.c.b16 %v878, %v877
        %v894 = vpack.c.b16 %v880, %v879
        %v895 = vpack.c.b16 %v882, %v881
        %v896 = vpack.c.b16 %v884, %v883
        %v897 = vpack.c.b16 %v886, %v885
        %v898 = vpack.c.b16 %v888, %v887
        %v899 = vpack.c.b16 %v890, %v889
        %v900 = vpack.c.b16 %v892, %v891
        %909 = vmatprep.subr.bf16.mxu0 0
        %910 = vmatpush1.bf16.msra.mxu0 %v893
        %911 = vmatprep.subr.bf16.mxu0 0
        %912 = vmatpush1.bf16.msra.mxu0 %v894
        %913 = vmatprep.subr.bf16.mxu0 0
        %914 = vmatpush1.bf16.msra.mxu0 %v895
        %915 = vmatprep.subr.bf16.mxu0 0
        %916 = vmatpush1.bf16.msra.mxu0 %v896
        %917 = vmatprep.subr.bf16.mxu0 0
        %918 = vmatpush1.bf16.msra.mxu0 %v897
        %919 = vmatprep.subr.bf16.mxu0 0
        %920 = vmatpush1.bf16.msra.mxu0 %v898
        %921 = vmatprep.subr.bf16.mxu0 0
        %922 = vmatpush1.bf16.msra.mxu0 %v899
        %923 = vmatprep.subr.bf16.mxu0 0
        %924 = vmatpush1.bf16.msra.mxu0 %v900
        %925 = vmatprep.subr.bf16.mxu0 0
        %926 = vmatpush1.bf16.msra.mxu0 0
        %927 = vmatprep.subr.bf16.mxu0 0
        %928 = vmatpush1.bf16.msra.mxu0 0
        %929 = vmatprep.subr.bf16.mxu0 0
        %930 = vmatpush1.bf16.msra.mxu0 0
        %931 = vmatprep.subr.bf16.mxu0 0
        %932 = vmatpush1.bf16.msra.mxu0 0
        %933 = vmatprep.subr.bf16.mxu0 0
        %934 = vmatpush1.bf16.msra.mxu0 0
        %935 = vmatprep.subr.bf16.mxu0 0
        %936 = vmatpush1.bf16.msra.mxu0 0
        %937 = vmatprep.subr.bf16.mxu0 0
        %938 = vmatpush1.bf16.msra.mxu0 0
        %939 = vmatprep.subr.bf16.mxu0 0
        %940 = vmatpush1.bf16.msra.mxu0 0
        %941 = vmatprep.mubr.bf16.mxu0 0
        %942 = vmatmul.mubr.bf16.gmra.mrb[0].mxu0 %v853
        %v943 = vpop.f32.mrb[0].mxu0
        %v944 = vadd.f32 0.0, %v943
        %v945 = vpop.f32.mrb[0].mxu0
        %v946 = vpop.f32.mrb[0].mxu0
        %v947 = vadd.f32 0.0, %v946
        %v948 = vpop.f32.mrb[0].mxu0
        %949 = vmatprep.mubr.bf16.mxu0 0
        %950 = vmatmul.mubr.bf16.gmra.mrb[0].mxu0 %v854
        %v951 = vpop.f32.mrb[0].mxu0
        %v952 = vadd.f32 0.0, %v951
        %v953 = vpop.f32.mrb[0].mxu0
        %v954 = vpop.f32.mrb[0].mxu0
        %v955 = vadd.f32 0.0, %v954
        %v956 = vpop.f32.mrb[0].mxu0
        %957 = vmatprep.mubr.bf16.mxu0 0
        %958 = vmatmul.mubr.bf16.gmra.mrb[0].mxu0 %v855
        %v959 = vpop.f32.mrb[0].mxu0
        %v960 = vadd.f32 0.0, %v959
        %v961 = vpop.f32.mrb[0].mxu0
        %v962 = vpop.f32.mrb[0].mxu0
        %v963 = vadd.f32 0.0, %v962
        %v964 = vpop.f32.mrb[0].mxu0
        %965 = vmatprep.mubr.bf16.mxu0 0
        %966 = vmatmul.mubr.bf16.gmra.mrb[0].mxu0 %v856
        %v967 = vpop.f32.mrb[0].mxu0
        %v968 = vadd.f32 0.0, %v967
        %v969 = vpop.f32.mrb[0].mxu0
        %v970 = vpop.f32.mrb[0].mxu0
        %v971 = vadd.f32 0.0, %v970
        %v972 = vpop.f32.mrb[0].mxu0
        %973 = vdwg.mxu0
        %v974 = vadd.f32 %v667, %v944
        %v975 = vadd.f32 %v670, %v947
        %v976 = vadd.f32 %v675, %v952
        %v977 = vadd.f32 %v678, %v955
        %v978 = vadd.f32 %v683, %v960
        %v979 = vadd.f32 %v686, %v963
        %v980 = vadd.f32 %v691, %v968
        %v981 = vadd.f32 %v694, %v971
        %v982 = vld [vmem:[%s372 + $0x8] sm:$0xf]
        %v983 = vld [vmem:[%s372 + $0x28] sm:$0xf]
        %v984 = vld [vmem:[%s372 + $0x48] sm:$0xf]
        %v985 = vld [vmem:[%s372 + $0x68] sm:$0xf]
        %v986 = vld [vmem:[%s372 + $0x88] sm:$0xf]
        %v987 = vld [vmem:[%s372 + $0xa8] sm:$0xf]
        %v988 = vld [vmem:[%s372 + $0xc8] sm:$0xf]
        %v989 = vld [vmem:[%s372 + $0xe8] sm:$0xf]
        %s990 = scalar_lea.vmem %s1, 192
        %v991 = vld [vmem:[%s990] sm:$0xf]
        %v992 = vld [vmem:[%s990 + $0x4] sm:$0xf]
        %v993 = vld [vmem:[%s990 + $0x8] sm:$0xf]
        %v994 = vld [vmem:[%s990 + $0xc] sm:$0xf]
        %v995 = vld [vmem:[%s990 + $0x10] sm:$0xf]
        %v996 = vld [vmem:[%s990 + $0x14] sm:$0xf]
        %v997 = vld [vmem:[%s990 + $0x18] sm:$0xf]
        %v998 = vld [vmem:[%s990 + $0x1c] sm:$0xf]
        %v999 = vld [vmem:[%s990 + $0x20] sm:$0xf]
        %v1000 = vld [vmem:[%s990 + $0x24] sm:$0xf]
        %v1001 = vld [vmem:[%s990 + $0x28] sm:$0xf]
        %v1002 = vld [vmem:[%s990 + $0x2c] sm:$0xf]
        %v1003 = vld [vmem:[%s990 + $0x30] sm:$0xf]
        %v1004 = vld [vmem:[%s990 + $0x34] sm:$0xf]
        %v1005 = vld [vmem:[%s990 + $0x38] sm:$0xf]
        %v1006 = vld [vmem:[%s990 + $0x3c] sm:$0xf]
        %v1015 = vunpack.c.l.b16 %v982
        %v1016 = vunpack.c.l.b16 %v983
        %v1017 = vunpack.c.l.b16 %v984
        %v1018 = vunpack.c.l.b16 %v985
        %v1019 = vunpack.c.l.b16 %v986
        %v1020 = vunpack.c.l.b16 %v987
        %v1021 = vunpack.c.l.b16 %v988
        %v1022 = vunpack.c.l.b16 %v989
        %v1023 = vpack.c.b16 %v1016, %v1015
        %v1024 = vpack.c.b16 %v1018, %v1017
        %v1025 = vpack.c.b16 %v1020, %v1019
        %v1026 = vpack.c.b16 %v1022, %v1021
        %v1047 = vunpack.c.l.b16 %v991
        %v1048 = vunpack.c.l.b16 %v992
        %v1049 = vunpack.c.l.b16 %v993
        %v1050 = vunpack.c.l.b16 %v994
        %v1051 = vunpack.c.l.b16 %v995
        %v1052 = vunpack.c.l.b16 %v996
        %v1053 = vunpack.c.l.b16 %v997
        %v1054 = vunpack.c.l.b16 %v998
        %v1055 = vunpack.c.l.b16 %v999
        %v1056 = vunpack.c.l.b16 %v1000
        %v1057 = vunpack.c.l.b16 %v1001
        %v1058 = vunpack.c.l.b16 %v1002
        %v1059 = vunpack.c.l.b16 %v1003
        %v1060 = vunpack.c.l.b16 %v1004
        %v1061 = vunpack.c.l.b16 %v1005
        %v1062 = vunpack.c.l.b16 %v1006
        %v1063 = vpack.c.b16 %v1048, %v1047
        %v1064 = vpack.c.b16 %v1050, %v1049
        %v1065 = vpack.c.b16 %v1052, %v1051
        %v1066 = vpack.c.b16 %v1054, %v1053
        %v1067 = vpack.c.b16 %v1056, %v1055
        %v1068 = vpack.c.b16 %v1058, %v1057
        %v1069 = vpack.c.b16 %v1060, %v1059
        %v1070 = vpack.c.b16 %v1062, %v1061
        %1079 = vmatprep.subr.bf16.mxu0 0
        %1080 = vmatpush1.bf16.msra.mxu0 %v1063
        %1081 = vmatprep.subr.bf16.mxu0 0
        %1082 = vmatpush1.bf16.msra.mxu0 %v1064
        %1083 = vmatprep.subr.bf16.mxu0 0
        %1084 = vmatpush1.bf16.msra.mxu0 %v1065
        %1085 = vmatprep.subr.bf16.mxu0 0
        %1086 = vmatpush1.bf16.msra.mxu0 %v1066
        %1087 = vmatprep.subr.bf16.mxu0 0
        %1088 = vmatpush1.bf16.msra.mxu0 %v1067
        %1089 = vmatprep.subr.bf16.mxu0 0
        %1090 = vmatpush1.bf16.msra.mxu0 %v1068
        %1091 = vmatprep.subr.bf16.mxu0 0
        %1092 = vmatpush1.bf16.msra.mxu0 %v1069
        %1093 = vmatprep.subr.bf16.mxu0 0
        %1094 = vmatpush1.bf16.msra.mxu0 %v1070
        %1095 = vmatprep.subr.bf16.mxu0 0
        %1096 = vmatpush1.bf16.msra.mxu0 0
        %1097 = vmatprep.subr.bf16.mxu0 0
        %1098 = vmatpush1.bf16.msra.mxu0 0
        %1099 = vmatprep.subr.bf16.mxu0 0
        %1100 = vmatpush1.bf16.msra.mxu0 0
        %1101 = vmatprep.subr.bf16.mxu0 0
        %1102 = vmatpush1.bf16.msra.mxu0 0
        %1103 = vmatprep.subr.bf16.mxu0 0
        %1104 = vmatpush1.bf16.msra.mxu0 0
        %1105 = vmatprep.subr.bf16.mxu0 0
        %1106 = vmatpush1.bf16.msra.mxu0 0
        %1107 = vmatprep.subr.bf16.mxu0 0
        %1108 = vmatpush1.bf16.msra.mxu0 0
        %1109 = vmatprep.subr.bf16.mxu0 0
        %1110 = vmatpush1.bf16.msra.mxu0 0
        %1111 = vmatprep.mubr.bf16.mxu0 0
        %1112 = vmatmul.mubr.bf16.gmra.mrb[0].mxu0 %v1023
        %v1113 = vpop.f32.mrb[0].mxu0
        %v1114 = vadd.f32 0.0, %v1113
        %v1115 = vpop.f32.mrb[0].mxu0
        %v1116 = vpop.f32.mrb[0].mxu0
        %v1117 = vadd.f32 0.0, %v1116
        %v1118 = vpop.f32.mrb[0].mxu0
        %1119 = vmatprep.mubr.bf16.mxu0 0
        %1120 = vmatmul.mubr.bf16.gmra.mrb[0].mxu0 %v1024
        %v1121 = vpop.f32.mrb[0].mxu0
        %v1122 = vadd.f32 0.0, %v1121
        %v1123 = vpop.f32.mrb[0].mxu0
        %v1124 = vpop.f32.mrb[0].mxu0
        %v1125 = vadd.f32 0.0, %v1124
        %v1126 = vpop.f32.mrb[0].mxu0
        %1127 = vmatprep.mubr.bf16.mxu0 0
        %1128 = vmatmul.mubr.bf16.gmra.mrb[0].mxu0 %v1025
        %v1129 = vpop.f32.mrb[0].mxu0
        %v1130 = vadd.f32 0.0, %v1129
        %v1131 = vpop.f32.mrb[0].mxu0
        %v1132 = vpop.f32.mrb[0].mxu0
        %v1133 = vadd.f32 0.0, %v1132
        %v1134 = vpop.f32.mrb[0].mxu0
        %1135 = vmatprep.mubr.bf16.mxu0 0
        %1136 = vmatmul.mubr.bf16.gmra.mrb[0].mxu0 %v1026
        %v1137 = vpop.f32.mrb[0].mxu0
        %v1138 = vadd.f32 0.0, %v1137
        %v1139 = vpop.f32.mrb[0].mxu0
        %v1140 = vpop.f32.mrb[0].mxu0
        %v1141 = vadd.f32 0.0, %v1140
        %v1142 = vpop.f32.mrb[0].mxu0
        %1143 = vdwg.mxu0
        %v1144 = vadd.f32 %v974, %v1114
        %v1145 = vadd.f32 %v975, %v1117
        %v1146 = vadd.f32 %v976, %v1122
        %v1147 = vadd.f32 %v977, %v1125
        %v1148 = vadd.f32 %v978, %v1130
        %v1149 = vadd.f32 %v979, %v1133
        %v1150 = vadd.f32 %v980, %v1138
        %v1151 = vadd.f32 %v981, %v1141
        %v1152 = vld [vmem:[%s372 + $0xc] sm:$0xf]
        %v1153 = vld [vmem:[%s372 + $0x2c] sm:$0xf]
        %v1154 = vld [vmem:[%s372 + $0x4c] sm:$0xf]
        %v1155 = vld [vmem:[%s372 + $0x6c] sm:$0xf]
        %v1156 = vld [vmem:[%s372 + $0x8c] sm:$0xf]
        %v1157 = vld [vmem:[%s372 + $0xac] sm:$0xf]
        %v1158 = vld [vmem:[%s372 + $0xcc] sm:$0xf]
        %v1159 = vld [vmem:[%s372 + $0xec] sm:$0xf]
        %s1160 = scalar_lea.vmem %s1, 256
        %v1161 = vld [vmem:[%s1160] sm:$0xf]
        %v1162 = vld [vmem:[%s1160 + $0x4] sm:$0xf]
        %v1163 = vld [vmem:[%s1160 + $0x8] sm:$0xf]
        %v1164 = vld [vmem:[%s1160 + $0xc] sm:$0xf]
        %v1165 = vld [vmem:[%s1160 + $0x10] sm:$0xf]
        %v1166 = vld [vmem:[%s1160 + $0x14] sm:$0xf]
        %v1167 = vld [vmem:[%s1160 + $0x18] sm:$0xf]
        %v1168 = vld [vmem:[%s1160 + $0x1c] sm:$0xf]
        %v1169 = vld [vmem:[%s1160 + $0x20] sm:$0xf]
        %v1170 = vld [vmem:[%s1160 + $0x24] sm:$0xf]
        %v1171 = vld [vmem:[%s1160 + $0x28] sm:$0xf]
        %v1172 = vld [vmem:[%s1160 + $0x2c] sm:$0xf]
        %v1173 = vld [vmem:[%s1160 + $0x30] sm:$0xf]
        %v1174 = vld [vmem:[%s1160 + $0x34] sm:$0xf]
        %v1175 = vld [vmem:[%s1160 + $0x38] sm:$0xf]
        %v1176 = vld [vmem:[%s1160 + $0x3c] sm:$0xf]
        %v1185 = vunpack.c.l.b16 %v1152
        %v1186 = vunpack.c.l.b16 %v1153
        %v1187 = vunpack.c.l.b16 %v1154
        %v1188 = vunpack.c.l.b16 %v1155
        %v1189 = vunpack.c.l.b16 %v1156
        %v1190 = vunpack.c.l.b16 %v1157
        %v1191 = vunpack.c.l.b16 %v1158
        %v1192 = vunpack.c.l.b16 %v1159
        %v1193 = vpack.c.b16 %v1186, %v1185
        %v1194 = vpack.c.b16 %v1188, %v1187
        %v1195 = vpack.c.b16 %v1190, %v1189
        %v1196 = vpack.c.b16 %v1192, %v1191
        %v1217 = vunpack.c.l.b16 %v1161
        %v1218 = vunpack.c.l.b16 %v1162
        %v1219 = vunpack.c.l.b16 %v1163
        %v1220 = vunpack.c.l.b16 %v1164
        %v1221 = vunpack.c.l.b16 %v1165
        %v1222 = vunpack.c.l.b16 %v1166
        %v1223 = vunpack.c.l.b16 %v1167
        %v1224 = vunpack.c.l.b16 %v1168
        %v1225 = vunpack.c.l.b16 %v1169
        %v1226 = vunpack.c.l.b16 %v1170
        %v1227 = vunpack.c.l.b16 %v1171
        %v1228 = vunpack.c.l.b16 %v1172
        %v1229 = vunpack.c.l.b16 %v1173
        %v1230 = vunpack.c.l.b16 %v1174
        %v1231 = vunpack.c.l.b16 %v1175
        %v1232 = vunpack.c.l.b16 %v1176
        %v1233 = vpack.c.b16 %v1218, %v1217
        %v1234 = vpack.c.b16 %v1220, %v1219
        %v1235 = vpack.c.b16 %v1222, %v1221
        %v1236 = vpack.c.b16 %v1224, %v1223
        %v1237 = vpack.c.b16 %v1226, %v1225
        %v1238 = vpack.c.b16 %v1228, %v1227
        %v1239 = vpack.c.b16 %v1230, %v1229
        %v1240 = vpack.c.b16 %v1232, %v1231
        %1249 = vmatprep.subr.bf16.mxu0 0
        %1250 = vmatpush1.bf16.msra.mxu0 %v1233
        %1251 = vmatprep.subr.bf16.mxu0 0
        %1252 = vmatpush1.bf16.msra.mxu0 %v1234
        %1253 = vmatprep.subr.bf16.mxu0 0
        %1254 = vmatpush1.bf16.msra.mxu0 %v1235
        %1255 = vmatprep.subr.bf16.mxu0 0
        %1256 = vmatpush1.bf16.msra.mxu0 %v1236
        %1257 = vmatprep.subr.bf16.mxu0 0
        %1258 = vmatpush1.bf16.msra.mxu0 %v1237
        %1259 = vmatprep.subr.bf16.mxu0 0
        %1260 = vmatpush1.bf16.msra.mxu0 %v1238
        %1261 = vmatprep.subr.bf16.mxu0 0
        %1262 = vmatpush1.bf16.msra.mxu0 %v1239
        %1263 = vmatprep.subr.bf16.mxu0 0
        %1264 = vmatpush1.bf16.msra.mxu0 %v1240
        %1265 = vmatprep.subr.bf16.mxu0 0
        %1266 = vmatpush1.bf16.msra.mxu0 0
        %1267 = vmatprep.subr.bf16.mxu0 0
        %1268 = vmatpush1.bf16.msra.mxu0 0
        %1269 = vmatprep.subr.bf16.mxu0 0
        %1270 = vmatpush1.bf16.msra.mxu0 0
        %1271 = vmatprep.subr.bf16.mxu0 0
        %1272 = vmatpush1.bf16.msra.mxu0 0
        %1273 = vmatprep.subr.bf16.mxu0 0
        %1274 = vmatpush1.bf16.msra.mxu0 0
        %1275 = vmatprep.subr.bf16.mxu0 0
        %1276 = vmatpush1.bf16.msra.mxu0 0
        %1277 = vmatprep.subr.bf16.mxu0 0
        %1278 = vmatpush1.bf16.msra.mxu0 0
        %1279 = vmatprep.subr.bf16.mxu0 0
        %1280 = vmatpush1.bf16.msra.mxu0 0
        %1281 = vmatprep.mubr.bf16.mxu0 0
        %1282 = vmatmul.mubr.bf16.gmra.mrb[0].mxu0 %v1193
        %v1283 = vpop.f32.mrb[0].mxu0
        %v1284 = vadd.f32 0.0, %v1283
        %v1285 = vpop.f32.mrb[0].mxu0
        %v1286 = vpop.f32.mrb[0].mxu0
        %v1287 = vadd.f32 0.0, %v1286
        %v1288 = vpop.f32.mrb[0].mxu0
        %1289 = vmatprep.mubr.bf16.mxu0 0
        %1290 = vmatmul.mubr.bf16.gmra.mrb[0].mxu0 %v1194
        %v1291 = vpop.f32.mrb[0].mxu0
        %v1292 = vadd.f32 0.0, %v1291
        %v1293 = vpop.f32.mrb[0].mxu0
        %v1294 = vpop.f32.mrb[0].mxu0
        %v1295 = vadd.f32 0.0, %v1294
        %v1296 = vpop.f32.mrb[0].mxu0
        %1297 = vmatprep.mubr.bf16.mxu0 0
        %1298 = vmatmul.mubr.bf16.gmra.mrb[0].mxu0 %v1195
        %v1299 = vpop.f32.mrb[0].mxu0
        %v1300 = vadd.f32 0.0, %v1299
        %v1301 = vpop.f32.mrb[0].mxu0
        %v1302 = vpop.f32.mrb[0].mxu0
        %v1303 = vadd.f32 0.0, %v1302
        %v1304 = vpop.f32.mrb[0].mxu0
        %1305 = vmatprep.mubr.bf16.mxu0 0
        %1306 = vmatmul.mubr.bf16.gmra.mrb[0].mxu0 %v1196
        %v1307 = vpop.f32.mrb[0].mxu0
        %v1308 = vadd.f32 0.0, %v1307
        %v1309 = vpop.f32.mrb[0].mxu0
        %v1310 = vpop.f32.mrb[0].mxu0
        %v1311 = vadd.f32 0.0, %v1310
        %v1312 = vpop.f32.mrb[0].mxu0
        %1313 = vdwg.mxu0
        %v1314 = vadd.f32 %v1144, %v1284
        %v1315 = vadd.f32 %v1145, %v1287
        %v1316 = vadd.f32 %v1146, %v1292
        %v1317 = vadd.f32 %v1147, %v1295
        %v1318 = vadd.f32 %v1148, %v1300
        %v1319 = vadd.f32 %v1149, %v1303
        %v1320 = vadd.f32 %v1150, %v1308
        %v1321 = vadd.f32 %v1151, %v1311
        %v1322 = vld [vmem:[%s372 + $0x8] sm:$0xf]
        %v1323 = vld [vmem:[%s372 + $0x18] sm:$0x1]
        %v1324 = vld [vmem:[%s372 + $0x28] sm:$0xf]
        %v1325 = vld [vmem:[%s372 + $0x38] sm:$0x1]
        %v1326 = vld [vmem:[%s372 + $0x48] sm:$0xf]
        %v1327 = vld [vmem:[%s372 + $0x58] sm:$0x1]
        %v1328 = vld [vmem:[%s372 + $0x68] sm:$0xf]
        %v1329 = vld [vmem:[%s372 + $0x78] sm:$0x1]
        %v1330 = vld [vmem:[%s372 + $0x88] sm:$0xf]
        %v1331 = vld [vmem:[%s372 + $0x98] sm:$0x1]
        %v1332 = vld [vmem:[%s372 + $0xa8] sm:$0xf]
        %v1333 = vld [vmem:[%s372 + $0xb8] sm:$0x1]
        %v1334 = vld [vmem:[%s372 + $0xc8] sm:$0xf]
        %v1335 = vld [vmem:[%s372 + $0xd8] sm:$0x1]
        %v1336 = vld [vmem:[%s372 + $0xe8] sm:$0xf]
        %v1337 = vld [vmem:[%s372 + $0xf8] sm:$0x1]
        %v1339 = vshrl.u32 %v1322, 16
        %v1341 = vrot.slane %v1339, 4
        %v1342 = vshll.u32 %v1322, 16
        %v1344 = vrot.slane %v1342, 5
        %v1345 = vor.u32 %v1341, %v1344
        %v1346 = vrot.slane %v1345, 4
        %v1348 = vshll.u32 %v1323, 16
        %v1350 = vrot.slane %v1348, 5
        %v1351 = vsel %vm715, %v1346, %v1350
        %v1353 = vshrl.u32 %v1324, 16
        %v1355 = vrot.slane %v1353, 4
        %v1356 = vshll.u32 %v1324, 16
        %v1358 = vrot.slane %v1356, 5
        %v1359 = vor.u32 %v1355, %v1358
        %v1360 = vrot.slane %v1359, 4
        %v1362 = vshll.u32 %v1325, 16
        %v1364 = vrot.slane %v1362, 5
        %v1365 = vsel %vm715, %v1360, %v1364
        %v1367 = vshrl.u32 %v1326, 16
        %v1369 = vrot.slane %v1367, 4
        %v1370 = vshll.u32 %v1326, 16
        %v1372 = vrot.slane %v1370, 5
        %v1373 = vor.u32 %v1369, %v1372
        %v1374 = vrot.slane %v1373, 4
        %v1376 = vshll.u32 %v1327, 16
        %v1378 = vrot.slane %v1376, 5
        %v1379 = vsel %vm715, %v1374, %v1378
        %v1381 = vshrl.u32 %v1328, 16
        %v1383 = vrot.slane %v1381, 4
        %v1384 = vshll.u32 %v1328, 16
        %v1386 = vrot.slane %v1384, 5
        %v1387 = vor.u32 %v1383, %v1386
        %v1388 = vrot.slane %v1387, 4
        %v1390 = vshll.u32 %v1329, 16
        %v1392 = vrot.slane %v1390, 5
        %v1393 = vsel %vm715, %v1388, %v1392
        %v1395 = vshrl.u32 %v1330, 16
        %v1397 = vrot.slane %v1395, 4
        %v1398 = vshll.u32 %v1330, 16
        %v1400 = vrot.slane %v1398, 5
        %v1401 = vor.u32 %v1397, %v1400
        %v1402 = vrot.slane %v1401, 4
        %v1404 = vshll.u32 %v1331, 16
        %v1406 = vrot.slane %v1404, 5
        %v1407 = vsel %vm715, %v1402, %v1406
        %v1409 = vshrl.u32 %v1332, 16
        %v1411 = vrot.slane %v1409, 4
        %v1412 = vshll.u32 %v1332, 16
        %v1414 = vrot.slane %v1412, 5
        %v1415 = vor.u32 %v1411, %v1414
        %v1416 = vrot.slane %v1415, 4
        %v1418 = vshll.u32 %v1333, 16
        %v1420 = vrot.slane %v1418, 5
        %v1421 = vsel %vm715, %v1416, %v1420
        %v1423 = vshrl.u32 %v1334, 16
        %v1425 = vrot.slane %v1423, 4
        %v1426 = vshll.u32 %v1334, 16
        %v1428 = vrot.slane %v1426, 5
        %v1429 = vor.u32 %v1425, %v1428
        %v1430 = vrot.slane %v1429, 4
        %v1432 = vshll.u32 %v1335, 16
        %v1434 = vrot.slane %v1432, 5
        %v1435 = vsel %vm715, %v1430, %v1434
        %v1437 = vshrl.u32 %v1336, 16
        %v1439 = vrot.slane %v1437, 4
        %v1440 = vshll.u32 %v1336, 16
        %v1442 = vrot.slane %v1440, 5
        %v1443 = vor.u32 %v1439, %v1442
        %v1444 = vrot.slane %v1443, 4
        %v1446 = vshll.u32 %v1337, 16
        %v1448 = vrot.slane %v1446, 5
        %v1449 = vsel %vm715, %v1444, %v1448
        %s1450 = scalar_lea.vmem %s1, 320
        %v1451 = vld [vmem:[%s1450] sm:$0xf]
        %v1452 = vld [vmem:[%s1450 + $0x4] sm:$0xf]
        %v1453 = vld [vmem:[%s1450 + $0x8] sm:$0xf]
        %v1454 = vld [vmem:[%s1450 + $0xc] sm:$0xf]
        %v1455 = vld [vmem:[%s1450 + $0x10] sm:$0xf]
        %v1456 = vld [vmem:[%s1450 + $0x14] sm:$0xf]
        %v1457 = vld [vmem:[%s1450 + $0x18] sm:$0xf]
        %v1458 = vld [vmem:[%s1450 + $0x1c] sm:$0xf]
        %v1459 = vld [vmem:[%s1450 + $0x20] sm:$0xf]
        %v1460 = vld [vmem:[%s1450 + $0x24] sm:$0xf]
        %v1461 = vld [vmem:[%s1450 + $0x28] sm:$0xf]
        %v1462 = vld [vmem:[%s1450 + $0x2c] sm:$0xf]
        %v1463 = vld [vmem:[%s1450 + $0x30] sm:$0xf]
        %v1464 = vld [vmem:[%s1450 + $0x34] sm:$0xf]
        %v1465 = vld [vmem:[%s1450 + $0x38] sm:$0xf]
        %v1466 = vld [vmem:[%s1450 + $0x3c] sm:$0xf]
        %v1467 = vunpack.c.l.b16 %v1351
        %v1468 = vunpack.c.l.b16 %v1365
        %v1469 = vunpack.c.l.b16 %v1379
        %v1470 = vunpack.c.l.b16 %v1393
        %v1471 = vunpack.c.l.b16 %v1407
        %v1472 = vunpack.c.l.b16 %v1421
        %v1473 = vunpack.c.l.b16 %v1435
        %v1474 = vunpack.c.l.b16 %v1449
        %v1475 = vpack.c.b16 %v1468, %v1467
        %v1476 = vpack.c.b16 %v1470, %v1469
        %v1477 = vpack.c.b16 %v1472, %v1471
        %v1478 = vpack.c.b16 %v1474, %v1473
        %v1499 = vunpack.c.l.b16 %v1451
        %v1500 = vunpack.c.l.b16 %v1452
        %v1501 = vunpack.c.l.b16 %v1453
        %v1502 = vunpack.c.l.b16 %v1454
        %v1503 = vunpack.c.l.b16 %v1455
        %v1504 = vunpack.c.l.b16 %v1456
        %v1505 = vunpack.c.l.b16 %v1457
        %v1506 = vunpack.c.l.b16 %v1458
        %v1507 = vunpack.c.l.b16 %v1459
        %v1508 = vunpack.c.l.b16 %v1460
        %v1509 = vunpack.c.l.b16 %v1461
        %v1510 = vunpack.c.l.b16 %v1462
        %v1511 = vunpack.c.l.b16 %v1463
        %v1512 = vunpack.c.l.b16 %v1464
        %v1513 = vunpack.c.l.b16 %v1465
        %v1514 = vunpack.c.l.b16 %v1466
        %v1515 = vpack.c.b16 %v1500, %v1499
        %v1516 = vpack.c.b16 %v1502, %v1501
        %v1517 = vpack.c.b16 %v1504, %v1503
        %v1518 = vpack.c.b16 %v1506, %v1505
        %v1519 = vpack.c.b16 %v1508, %v1507
        %v1520 = vpack.c.b16 %v1510, %v1509
        %v1521 = vpack.c.b16 %v1512, %v1511
        %v1522 = vpack.c.b16 %v1514, %v1513
        %1531 = vmatprep.subr.bf16.mxu0 0
        %1532 = vmatpush1.bf16.msra.mxu0 %v1515
        %1533 = vmatprep.subr.bf16.mxu0 0
        %1534 = vmatpush1.bf16.msra.mxu0 %v1516
        %1535 = vmatprep.subr.bf16.mxu0 0
        %1536 = vmatpush1.bf16.msra.mxu0 %v1517
        %1537 = vmatprep.subr.bf16.mxu0 0
        %1538 = vmatpush1.bf16.msra.mxu0 %v1518
        %1539 = vmatprep.subr.bf16.mxu0 0
        %1540 = vmatpush1.bf16.msra.mxu0 %v1519
        %1541 = vmatprep.subr.bf16.mxu0 0
        %1542 = vmatpush1.bf16.msra.mxu0 %v1520
        %1543 = vmatprep.subr.bf16.mxu0 0
        %1544 = vmatpush1.bf16.msra.mxu0 %v1521
        %1545 = vmatprep.subr.bf16.mxu0 0
        %1546 = vmatpush1.bf16.msra.mxu0 %v1522
        %1547 = vmatprep.subr.bf16.mxu0 0
        %1548 = vmatpush1.bf16.msra.mxu0 0
        %1549 = vmatprep.subr.bf16.mxu0 0
        %1550 = vmatpush1.bf16.msra.mxu0 0
        %1551 = vmatprep.subr.bf16.mxu0 0
        %1552 = vmatpush1.bf16.msra.mxu0 0
        %1553 = vmatprep.subr.bf16.mxu0 0
        %1554 = vmatpush1.bf16.msra.mxu0 0
        %1555 = vmatprep.subr.bf16.mxu0 0
        %1556 = vmatpush1.bf16.msra.mxu0 0
        %1557 = vmatprep.subr.bf16.mxu0 0
        %1558 = vmatpush1.bf16.msra.mxu0 0
        %1559 = vmatprep.subr.bf16.mxu0 0
        %1560 = vmatpush1.bf16.msra.mxu0 0
        %1561 = vmatprep.subr.bf16.mxu0 0
        %1562 = vmatpush1.bf16.msra.mxu0 0
        %1563 = vmatprep.mubr.bf16.mxu0 0
        %1564 = vmatmul.mubr.bf16.gmra.mrb[0].mxu0 %v1475
        %v1565 = vpop.f32.mrb[0].mxu0
        %v1566 = vadd.f32 0.0, %v1565
        %v1567 = vpop.f32.mrb[0].mxu0
        %v1568 = vpop.f32.mrb[0].mxu0
        %v1569 = vadd.f32 0.0, %v1568
        %v1570 = vpop.f32.mrb[0].mxu0
        %1571 = vmatprep.mubr.bf16.mxu0 0
        %1572 = vmatmul.mubr.bf16.gmra.mrb[0].mxu0 %v1476
        %v1573 = vpop.f32.mrb[0].mxu0
        %v1574 = vadd.f32 0.0, %v1573
        %v1575 = vpop.f32.mrb[0].mxu0
        %v1576 = vpop.f32.mrb[0].mxu0
        %v1577 = vadd.f32 0.0, %v1576
        %v1578 = vpop.f32.mrb[0].mxu0
        %1579 = vmatprep.mubr.bf16.mxu0 0
        %1580 = vmatmul.mubr.bf16.gmra.mrb[0].mxu0 %v1477
        %v1581 = vpop.f32.mrb[0].mxu0
        %v1582 = vadd.f32 0.0, %v1581
        %v1583 = vpop.f32.mrb[0].mxu0
        %v1584 = vpop.f32.mrb[0].mxu0
        %v1585 = vadd.f32 0.0, %v1584
        %v1586 = vpop.f32.mrb[0].mxu0
        %1587 = vmatprep.mubr.bf16.mxu0 0
        %1588 = vmatmul.mubr.bf16.gmra.mrb[0].mxu0 %v1478
        %v1589 = vpop.f32.mrb[0].mxu0
        %v1590 = vadd.f32 0.0, %v1589
        %v1591 = vpop.f32.mrb[0].mxu0
        %v1592 = vpop.f32.mrb[0].mxu0
        %v1593 = vadd.f32 0.0, %v1592
        %v1594 = vpop.f32.mrb[0].mxu0
        %1595 = vdwg.mxu0
        %v1596 = vadd.f32 %v1314, %v1566
        %v1597 = vadd.f32 %v1315, %v1569
        %v1598 = vadd.f32 %v1316, %v1574
        %v1599 = vadd.f32 %v1317, %v1577
        %v1600 = vadd.f32 %v1318, %v1582
        %v1601 = vadd.f32 %v1319, %v1585
        %v1602 = vadd.f32 %v1320, %v1590
        %v1603 = vadd.f32 %v1321, %v1593
        %s1604 = scalar_lea.vmem %s372, 32
        %v1605 = vld [vmem:[%s1604] sm:$0xf]
        %v1606 = vld [vmem:[%s1604 + $0x20] sm:$0xf]
        %v1607 = vld [vmem:[%s1604 + $0x40] sm:$0xf]
        %v1608 = vld [vmem:[%s1604 + $0x60] sm:$0xf]
        %v1609 = vld [vmem:[%s1604 + $0x80] sm:$0xf]
        %v1610 = vld [vmem:[%s1604 + $0xa0] sm:$0xf]
        %v1611 = vld [vmem:[%s1604 + $0xc0] sm:$0xf]
        %v1612 = vld [vmem:[%s1604 + $0xe0] sm:$0xf]
        %s1613 = scalar_lea.vmem %s1, 384
        %v1614 = vld [vmem:[%s1613] sm:$0xf]
        %v1615 = vld [vmem:[%s1613 + $0x4] sm:$0xf]
        %v1616 = vld [vmem:[%s1613 + $0x8] sm:$0xf]
        %v1617 = vld [vmem:[%s1613 + $0xc] sm:$0xf]
        %v1618 = vld [vmem:[%s1613 + $0x10] sm:$0xf]
        %v1619 = vld [vmem:[%s1613 + $0x14] sm:$0xf]
        %v1620 = vld [vmem:[%s1613 + $0x18] sm:$0xf]
        %v1621 = vld [vmem:[%s1613 + $0x1c] sm:$0xf]
        %v1622 = vld [vmem:[%s1613 + $0x20] sm:$0xf]
        %v1623 = vld [vmem:[%s1613 + $0x24] sm:$0xf]
        %v1624 = vld [vmem:[%s1613 + $0x28] sm:$0xf]
        %v1625 = vld [vmem:[%s1613 + $0x2c] sm:$0xf]
        %v1626 = vld [vmem:[%s1613 + $0x30] sm:$0xf]
        %v1627 = vld [vmem:[%s1613 + $0x34] sm:$0xf]
        %v1628 = vld [vmem:[%s1613 + $0x38] sm:$0xf]
        %v1629 = vld [vmem:[%s1613 + $0x3c] sm:$0xf]
        %v1638 = vunpack.c.l.b16 %v1605
        %v1639 = vunpack.c.l.b16 %v1606
        %v1640 = vunpack.c.l.b16 %v1607
        %v1641 = vunpack.c.l.b16 %v1608
        %v1642 = vunpack.c.l.b16 %v1609
        %v1643 = vunpack.c.l.b16 %v1610
        %v1644 = vunpack.c.l.b16 %v1611
        %v1645 = vunpack.c.l.b16 %v1612
        %v1646 = vpack.c.b16 %v1639, %v1638
        %v1647 = vpack.c.b16 %v1641, %v1640
        %v1648 = vpack.c.b16 %v1643, %v1642
        %v1649 = vpack.c.b16 %v1645, %v1644
        %v1670 = vunpack.c.l.b16 %v1614
        %v1671 = vunpack.c.l.b16 %v1615
        %v1672 = vunpack.c.l.b16 %v1616
        %v1673 = vunpack.c.l.b16 %v1617
        %v1674 = vunpack.c.l.b16 %v1618
        %v1675 = vunpack.c.l.b16 %v1619
        %v1676 = vunpack.c.l.b16 %v1620
        %v1677 = vunpack.c.l.b16 %v1621
        %v1678 = vunpack.c.l.b16 %v1622
        %v1679 = vunpack.c.l.b16 %v1623
        %v1680 = vunpack.c.l.b16 %v1624
        %v1681 = vunpack.c.l.b16 %v1625
        %v1682 = vunpack.c.l.b16 %v1626
        %v1683 = vunpack.c.l.b16 %v1627
        %v1684 = vunpack.c.l.b16 %v1628
        %v1685 = vunpack.c.l.b16 %v1629
        %v1686 = vpack.c.b16 %v1671, %v1670
        %v1687 = vpack.c.b16 %v1673, %v1672
        %v1688 = vpack.c.b16 %v1675, %v1674
        %v1689 = vpack.c.b16 %v1677, %v1676
        %v1690 = vpack.c.b16 %v1679, %v1678
        %v1691 = vpack.c.b16 %v1681, %v1680
        %v1692 = vpack.c.b16 %v1683, %v1682
        %v1693 = vpack.c.b16 %v1685, %v1684
        %1702 = vmatprep.subr.bf16.mxu0 0
        %1703 = vmatpush1.bf16.msra.mxu0 %v1686
        %1704 = vmatprep.subr.bf16.mxu0 0
        %1705 = vmatpush1.bf16.msra.mxu0 %v1687
        %1706 = vmatprep.subr.bf16.mxu0 0
        %1707 = vmatpush1.bf16.msra.mxu0 %v1688
        %1708 = vmatprep.subr.bf16.mxu0 0
        %1709 = vmatpush1.bf16.msra.mxu0 %v1689
        %1710 = vmatprep.subr.bf16.mxu0 0
        %1711 = vmatpush1.bf16.msra.mxu0 %v1690
        %1712 = vmatprep.subr.bf16.mxu0 0
        %1713 = vmatpush1.bf16.msra.mxu0 %v1691
        %1714 = vmatprep.subr.bf16.mxu0 0
        %1715 = vmatpush1.bf16.msra.mxu0 %v1692
        %1716 = vmatprep.subr.bf16.mxu0 0
        %1717 = vmatpush1.bf16.msra.mxu0 %v1693
        %1718 = vmatprep.subr.bf16.mxu0 0
        %1719 = vmatpush1.bf16.msra.mxu0 0
        %1720 = vmatprep.subr.bf16.mxu0 0
        %1721 = vmatpush1.bf16.msra.mxu0 0
        %1722 = vmatprep.subr.bf16.mxu0 0
        %1723 = vmatpush1.bf16.msra.mxu0 0
        %1724 = vmatprep.subr.bf16.mxu0 0
        %1725 = vmatpush1.bf16.msra.mxu0 0
        %1726 = vmatprep.subr.bf16.mxu0 0
        %1727 = vmatpush1.bf16.msra.mxu0 0
        %1728 = vmatprep.subr.bf16.mxu0 0
        %1729 = vmatpush1.bf16.msra.mxu0 0
        %1730 = vmatprep.subr.bf16.mxu0 0
        %1731 = vmatpush1.bf16.msra.mxu0 0
        %1732 = vmatprep.subr.bf16.mxu0 0
        %1733 = vmatpush1.bf16.msra.mxu0 0
        %1734 = vmatprep.mubr.bf16.mxu0 0
        %1735 = vmatmul.mubr.bf16.gmra.mrb[0].mxu0 %v1646
        %v1736 = vpop.f32.mrb[0].mxu0
        %v1737 = vadd.f32 0.0, %v1736
        %v1738 = vpop.f32.mrb[0].mxu0
        %v1739 = vpop.f32.mrb[0].mxu0
        %v1740 = vadd.f32 0.0, %v1739
        %v1741 = vpop.f32.mrb[0].mxu0
        %1742 = vmatprep.mubr.bf16.mxu0 0
        %1743 = vmatmul.mubr.bf16.gmra.mrb[0].mxu0 %v1647
        %v1744 = vpop.f32.mrb[0].mxu0
        %v1745 = vadd.f32 0.0, %v1744
        %v1746 = vpop.f32.mrb[0].mxu0
        %v1747 = vpop.f32.mrb[0].mxu0
        %v1748 = vadd.f32 0.0, %v1747
        %v1749 = vpop.f32.mrb[0].mxu0
        %1750 = vmatprep.mubr.bf16.mxu0 0
        %1751 = vmatmul.mubr.bf16.gmra.mrb[0].mxu0 %v1648
        %v1752 = vpop.f32.mrb[0].mxu0
        %v1753 = vadd.f32 0.0, %v1752
        %v1754 = vpop.f32.mrb[0].mxu0
        %v1755 = vpop.f32.mrb[0].mxu0
        %v1756 = vadd.f32 0.0, %v1755
        %v1757 = vpop.f32.mrb[0].mxu0
        %1758 = vmatprep.mubr.bf16.mxu0 0
        %1759 = vmatmul.mubr.bf16.gmra.mrb[0].mxu0 %v1649
        %v1760 = vpop.f32.mrb[0].mxu0
        %v1761 = vadd.f32 0.0, %v1760
        %v1762 = vpop.f32.mrb[0].mxu0
        %v1763 = vpop.f32.mrb[0].mxu0
        %v1764 = vadd.f32 0.0, %v1763
        %v1765 = vpop.f32.mrb[0].mxu0
        %1766 = vdwg.mxu0
        %v1767 = vadd.f32 %v1596, %v1737
        %v1768 = vadd.f32 %v1597, %v1740
        %v1769 = vadd.f32 %v1598, %v1745
        %v1770 = vadd.f32 %v1599, %v1748
        %v1771 = vadd.f32 %v1600, %v1753
        %v1772 = vadd.f32 %v1601, %v1756
        %v1773 = vadd.f32 %v1602, %v1761
        %v1774 = vadd.f32 %v1603, %v1764
        %v1775 = vld [vmem:[%s1604 + $0x4] sm:$0xf]
        %v1776 = vld [vmem:[%s1604 + $0x24] sm:$0xf]
        %v1777 = vld [vmem:[%s1604 + $0x44] sm:$0xf]
        %v1778 = vld [vmem:[%s1604 + $0x64] sm:$0xf]
        %v1779 = vld [vmem:[%s1604 + $0x84] sm:$0xf]
        %v1780 = vld [vmem:[%s1604 + $0xa4] sm:$0xf]
        %v1781 = vld [vmem:[%s1604 + $0xc4] sm:$0xf]
        %v1782 = vld [vmem:[%s1604 + $0xe4] sm:$0xf]
        %s1783 = scalar_lea.vmem %s1, 448
        %v1784 = vld [vmem:[%s1783] sm:$0xf]
        %v1785 = vld [vmem:[%s1783 + $0x4] sm:$0xf]
        %v1786 = vld [vmem:[%s1783 + $0x8] sm:$0xf]
        %v1787 = vld [vmem:[%s1783 + $0xc] sm:$0xf]
        %v1788 = vld [vmem:[%s1783 + $0x10] sm:$0xf]
        %v1789 = vld [vmem:[%s1783 + $0x14] sm:$0xf]
        %v1790 = vld [vmem:[%s1783 + $0x18] sm:$0xf]
        %v1791 = vld [vmem:[%s1783 + $0x1c] sm:$0xf]
        %v1792 = vld [vmem:[%s1783 + $0x20] sm:$0xf]
        %v1793 = vld [vmem:[%s1783 + $0x24] sm:$0xf]
        %v1794 = vld [vmem:[%s1783 + $0x28] sm:$0xf]
        %v1795 = vld [vmem:[%s1783 + $0x2c] sm:$0xf]
        %v1796 = vld [vmem:[%s1783 + $0x30] sm:$0xf]
        %v1797 = vld [vmem:[%s1783 + $0x34] sm:$0xf]
        %v1798 = vld [vmem:[%s1783 + $0x38] sm:$0xf]
        %v1799 = vld [vmem:[%s1783 + $0x3c] sm:$0xf]
        %v1808 = vunpack.c.l.b16 %v1775
        %v1809 = vunpack.c.l.b16 %v1776
        %v1810 = vunpack.c.l.b16 %v1777
        %v1811 = vunpack.c.l.b16 %v1778
        %v1812 = vunpack.c.l.b16 %v1779
        %v1813 = vunpack.c.l.b16 %v1780
        %v1814 = vunpack.c.l.b16 %v1781
        %v1815 = vunpack.c.l.b16 %v1782
        %v1816 = vpack.c.b16 %v1809, %v1808
        %v1817 = vpack.c.b16 %v1811, %v1810
        %v1818 = vpack.c.b16 %v1813, %v1812
        %v1819 = vpack.c.b16 %v1815, %v1814
        %v1840 = vunpack.c.l.b16 %v1784
        %v1841 = vunpack.c.l.b16 %v1785
        %v1842 = vunpack.c.l.b16 %v1786
        %v1843 = vunpack.c.l.b16 %v1787
        %v1844 = vunpack.c.l.b16 %v1788
        %v1845 = vunpack.c.l.b16 %v1789
        %v1846 = vunpack.c.l.b16 %v1790
        %v1847 = vunpack.c.l.b16 %v1791
        %v1848 = vunpack.c.l.b16 %v1792
        %v1849 = vunpack.c.l.b16 %v1793
        %v1850 = vunpack.c.l.b16 %v1794
        %v1851 = vunpack.c.l.b16 %v1795
        %v1852 = vunpack.c.l.b16 %v1796
        %v1853 = vunpack.c.l.b16 %v1797
        %v1854 = vunpack.c.l.b16 %v1798
        %v1855 = vunpack.c.l.b16 %v1799
        %v1856 = vpack.c.b16 %v1841, %v1840
        %v1857 = vpack.c.b16 %v1843, %v1842
        %v1858 = vpack.c.b16 %v1845, %v1844
        %v1859 = vpack.c.b16 %v1847, %v1846
        %v1860 = vpack.c.b16 %v1849, %v1848
        %v1861 = vpack.c.b16 %v1851, %v1850
        %v1862 = vpack.c.b16 %v1853, %v1852
        %v1863 = vpack.c.b16 %v1855, %v1854
        %1872 = vmatprep.subr.bf16.mxu0 0
        %1873 = vmatpush1.bf16.msra.mxu0 %v1856
        %1874 = vmatprep.subr.bf16.mxu0 0
        %1875 = vmatpush1.bf16.msra.mxu0 %v1857
        %1876 = vmatprep.subr.bf16.mxu0 0
        %1877 = vmatpush1.bf16.msra.mxu0 %v1858
        %1878 = vmatprep.subr.bf16.mxu0 0
        %1879 = vmatpush1.bf16.msra.mxu0 %v1859
        %1880 = vmatprep.subr.bf16.mxu0 0
        %1881 = vmatpush1.bf16.msra.mxu0 %v1860
        %1882 = vmatprep.subr.bf16.mxu0 0
        %1883 = vmatpush1.bf16.msra.mxu0 %v1861
        %1884 = vmatprep.subr.bf16.mxu0 0
        %1885 = vmatpush1.bf16.msra.mxu0 %v1862
        %1886 = vmatprep.subr.bf16.mxu0 0
        %1887 = vmatpush1.bf16.msra.mxu0 %v1863
        %1888 = vmatprep.subr.bf16.mxu0 0
        %1889 = vmatpush1.bf16.msra.mxu0 0
        %1890 = vmatprep.subr.bf16.mxu0 0
        %1891 = vmatpush1.bf16.msra.mxu0 0
        %1892 = vmatprep.subr.bf16.mxu0 0
        %1893 = vmatpush1.bf16.msra.mxu0 0
        %1894 = vmatprep.subr.bf16.mxu0 0
        %1895 = vmatpush1.bf16.msra.mxu0 0
        %1896 = vmatprep.subr.bf16.mxu0 0
        %1897 = vmatpush1.bf16.msra.mxu0 0
        %1898 = vmatprep.subr.bf16.mxu0 0
        %1899 = vmatpush1.bf16.msra.mxu0 0
        %1900 = vmatprep.subr.bf16.mxu0 0
        %1901 = vmatpush1.bf16.msra.mxu0 0
        %1902 = vmatprep.subr.bf16.mxu0 0
        %1903 = vmatpush1.bf16.msra.mxu0 0
        %1904 = vmatprep.mubr.bf16.mxu0 0
        %1905 = vmatmul.mubr.bf16.gmra.mrb[0].mxu0 %v1816
        %v1906 = vpop.f32.mrb[0].mxu0
        %v1907 = vadd.f32 0.0, %v1906
        %v1908 = vpop.f32.mrb[0].mxu0
        %v1909 = vpop.f32.mrb[0].mxu0
        %v1910 = vadd.f32 0.0, %v1909
        %v1911 = vpop.f32.mrb[0].mxu0
        %1912 = vmatprep.mubr.bf16.mxu0 0
        %1913 = vmatmul.mubr.bf16.gmra.mrb[0].mxu0 %v1817
        %v1914 = vpop.f32.mrb[0].mxu0
        %v1915 = vadd.f32 0.0, %v1914
        %v1916 = vpop.f32.mrb[0].mxu0
        %v1917 = vpop.f32.mrb[0].mxu0
        %v1918 = vadd.f32 0.0, %v1917
        %v1919 = vpop.f32.mrb[0].mxu0
        %1920 = vmatprep.mubr.bf16.mxu0 0
        %1921 = vmatmul.mubr.bf16.gmra.mrb[0].mxu0 %v1818
        %v1922 = vpop.f32.mrb[0].mxu0
        %v1923 = vadd.f32 0.0, %v1922
        %v1924 = vpop.f32.mrb[0].mxu0
        %v1925 = vpop.f32.mrb[0].mxu0
        %v1926 = vadd.f32 0.0, %v1925
        %v1927 = vpop.f32.mrb[0].mxu0
        %1928 = vmatprep.mubr.bf16.mxu0 0
        %1929 = vmatmul.mubr.bf16.gmra.mrb[0].mxu0 %v1819
        %v1930 = vpop.f32.mrb[0].mxu0
        %v1931 = vadd.f32 0.0, %v1930
        %v1932 = vpop.f32.mrb[0].mxu0
        %v1933 = vpop.f32.mrb[0].mxu0
        %v1934 = vadd.f32 0.0, %v1933
        %v1935 = vpop.f32.mrb[0].mxu0
        %1936 = vdwg.mxu0
        %v1937 = vadd.f32 %v1767, %v1907
        %v1938 = vadd.f32 %v1768, %v1910
        %v1939 = vadd.f32 %v1769, %v1915
        %v1940 = vadd.f32 %v1770, %v1918
        %v1941 = vadd.f32 %v1771, %v1923
        %v1942 = vadd.f32 %v1772, %v1926
        %v1943 = vadd.f32 %v1773, %v1931
        %v1944 = vadd.f32 %v1774, %v1934
        %v1945 = vld [vmem:[%s1604] sm:$0xf]
        %v1946 = vld [vmem:[%s1604 + $0x10] sm:$0x1]
        %v1947 = vld [vmem:[%s1604 + $0x20] sm:$0xf]
        %v1948 = vld [vmem:[%s1604 + $0x30] sm:$0x1]
        %v1949 = vld [vmem:[%s1604 + $0x40] sm:$0xf]
        %v1950 = vld [vmem:[%s1604 + $0x50] sm:$0x1]
        %v1951 = vld [vmem:[%s1604 + $0x60] sm:$0xf]
        %v1952 = vld [vmem:[%s1604 + $0x70] sm:$0x1]
        %v1953 = vld [vmem:[%s1604 + $0x80] sm:$0xf]
        %v1954 = vld [vmem:[%s1604 + $0x90] sm:$0x1]
        %v1955 = vld [vmem:[%s1604 + $0xa0] sm:$0xf]
        %v1956 = vld [vmem:[%s1604 + $0xb0] sm:$0x1]
        %v1957 = vld [vmem:[%s1604 + $0xc0] sm:$0xf]
        %v1958 = vld [vmem:[%s1604 + $0xd0] sm:$0x1]
        %v1959 = vld [vmem:[%s1604 + $0xe0] sm:$0xf]
        %v1960 = vld [vmem:[%s1604 + $0xf0] sm:$0x1]
        %v1962 = vshrl.u32 %v1945, 16
        %v1964 = vrot.slane %v1962, 4
        %v1965 = vshll.u32 %v1945, 16
        %v1967 = vrot.slane %v1965, 5
        %v1968 = vor.u32 %v1964, %v1967
        %v1969 = vrot.slane %v1968, 4
        %v1971 = vshll.u32 %v1946, 16
        %v1973 = vrot.slane %v1971, 5
        %v1974 = vsel %vm715, %v1969, %v1973
        %v1976 = vshrl.u32 %v1947, 16
        %v1978 = vrot.slane %v1976, 4
        %v1979 = vshll.u32 %v1947, 16
        %v1981 = vrot.slane %v1979, 5
        %v1982 = vor.u32 %v1978, %v1981
        %v1983 = vrot.slane %v1982, 4
        %v1985 = vshll.u32 %v1948, 16
        %v1987 = vrot.slane %v1985, 5
        %v1988 = vsel %vm715, %v1983, %v1987
        %v1990 = vshrl.u32 %v1949, 16
        %v1992 = vrot.slane %v1990, 4
        %v1993 = vshll.u32 %v1949, 16
        %v1995 = vrot.slane %v1993, 5
        %v1996 = vor.u32 %v1992, %v1995
        %v1997 = vrot.slane %v1996, 4
        %v1999 = vshll.u32 %v1950, 16
        %v2001 = vrot.slane %v1999, 5
        %v2002 = vsel %vm715, %v1997, %v2001
        %v2004 = vshrl.u32 %v1951, 16
        %v2006 = vrot.slane %v2004, 4
        %v2007 = vshll.u32 %v1951, 16
        %v2009 = vrot.slane %v2007, 5
        %v2010 = vor.u32 %v2006, %v2009
        %v2011 = vrot.slane %v2010, 4
        %v2013 = vshll.u32 %v1952, 16
        %v2015 = vrot.slane %v2013, 5
        %v2016 = vsel %vm715, %v2011, %v2015
        %v2018 = vshrl.u32 %v1953, 16
        %v2020 = vrot.slane %v2018, 4
        %v2021 = vshll.u32 %v1953, 16
        %v2023 = vrot.slane %v2021, 5
        %v2024 = vor.u32 %v2020, %v2023
        %v2025 = vrot.slane %v2024, 4
        %v2027 = vshll.u32 %v1954, 16
        %v2029 = vrot.slane %v2027, 5
        %v2030 = vsel %vm715, %v2025, %v2029
        %v2032 = vshrl.u32 %v1955, 16
        %v2034 = vrot.slane %v2032, 4
        %v2035 = vshll.u32 %v1955, 16
        %v2037 = vrot.slane %v2035, 5
        %v2038 = vor.u32 %v2034, %v2037
        %v2039 = vrot.slane %v2038, 4
        %v2041 = vshll.u32 %v1956, 16
        %v2043 = vrot.slane %v2041, 5
        %v2044 = vsel %vm715, %v2039, %v2043
        %v2046 = vshrl.u32 %v1957, 16
        %v2048 = vrot.slane %v2046, 4
        %v2049 = vshll.u32 %v1957, 16
        %v2051 = vrot.slane %v2049, 5
        %v2052 = vor.u32 %v2048, %v2051
        %v2053 = vrot.slane %v2052, 4
        %v2055 = vshll.u32 %v1958, 16
        %v2057 = vrot.slane %v2055, 5
        %v2058 = vsel %vm715, %v2053, %v2057
        %v2060 = vshrl.u32 %v1959, 16
        %v2062 = vrot.slane %v2060, 4
        %v2063 = vshll.u32 %v1959, 16
        %v2065 = vrot.slane %v2063, 5
        %v2066 = vor.u32 %v2062, %v2065
        %v2067 = vrot.slane %v2066, 4
        %v2069 = vshll.u32 %v1960, 16
        %v2071 = vrot.slane %v2069, 5
        %v2072 = vsel %vm715, %v2067, %v2071
        %s2073 = scalar_lea.vmem %s1, 512
        %v2074 = vld [vmem:[%s2073] sm:$0xf]
        %v2075 = vld [vmem:[%s2073 + $0x4] sm:$0xf]
        %v2076 = vld [vmem:[%s2073 + $0x8] sm:$0xf]
        %v2077 = vld [vmem:[%s2073 + $0xc] sm:$0xf]
        %v2078 = vld [vmem:[%s2073 + $0x10] sm:$0xf]
        %v2079 = vld [vmem:[%s2073 + $0x14] sm:$0xf]
        %v2080 = vld [vmem:[%s2073 + $0x18] sm:$0xf]
        %v2081 = vld [vmem:[%s2073 + $0x1c] sm:$0xf]
        %v2082 = vld [vmem:[%s2073 + $0x20] sm:$0xf]
        %v2083 = vld [vmem:[%s2073 + $0x24] sm:$0xf]
        %v2084 = vld [vmem:[%s2073 + $0x28] sm:$0xf]
        %v2085 = vld [vmem:[%s2073 + $0x2c] sm:$0xf]
        %v2086 = vld [vmem:[%s2073 + $0x30] sm:$0xf]
        %v2087 = vld [vmem:[%s2073 + $0x34] sm:$0xf]
        %v2088 = vld [vmem:[%s2073 + $0x38] sm:$0xf]
        %v2089 = vld [vmem:[%s2073 + $0x3c] sm:$0xf]
        %v2090 = vunpack.c.l.b16 %v1974
        %v2091 = vunpack.c.l.b16 %v1988
        %v2092 = vunpack.c.l.b16 %v2002
        %v2093 = vunpack.c.l.b16 %v2016
        %v2094 = vunpack.c.l.b16 %v2030
        %v2095 = vunpack.c.l.b16 %v2044
        %v2096 = vunpack.c.l.b16 %v2058
        %v2097 = vunpack.c.l.b16 %v2072
        %v2098 = vpack.c.b16 %v2091, %v2090
        %v2099 = vpack.c.b16 %v2093, %v2092
        %v2100 = vpack.c.b16 %v2095, %v2094
        %v2101 = vpack.c.b16 %v2097, %v2096
        %v2122 = vunpack.c.l.b16 %v2074
        %v2123 = vunpack.c.l.b16 %v2075
        %v2124 = vunpack.c.l.b16 %v2076
        %v2125 = vunpack.c.l.b16 %v2077
        %v2126 = vunpack.c.l.b16 %v2078
        %v2127 = vunpack.c.l.b16 %v2079
        %v2128 = vunpack.c.l.b16 %v2080
        %v2129 = vunpack.c.l.b16 %v2081
        %v2130 = vunpack.c.l.b16 %v2082
        %v2131 = vunpack.c.l.b16 %v2083
        %v2132 = vunpack.c.l.b16 %v2084
        %v2133 = vunpack.c.l.b16 %v2085
        %v2134 = vunpack.c.l.b16 %v2086
        %v2135 = vunpack.c.l.b16 %v2087
        %v2136 = vunpack.c.l.b16 %v2088
        %v2137 = vunpack.c.l.b16 %v2089
        %v2138 = vpack.c.b16 %v2123, %v2122
        %v2139 = vpack.c.b16 %v2125, %v2124
        %v2140 = vpack.c.b16 %v2127, %v2126
        %v2141 = vpack.c.b16 %v2129, %v2128
        %v2142 = vpack.c.b16 %v2131, %v2130
        %v2143 = vpack.c.b16 %v2133, %v2132
        %v2144 = vpack.c.b16 %v2135, %v2134
        %v2145 = vpack.c.b16 %v2137, %v2136
        %2154 = vmatprep.subr.bf16.mxu0 0
        %2155 = vmatpush1.bf16.msra.mxu0 %v2138
        %2156 = vmatprep.subr.bf16.mxu0 0
        %2157 = vmatpush1.bf16.msra.mxu0 %v2139
        %2158 = vmatprep.subr.bf16.mxu0 0
        %2159 = vmatpush1.bf16.msra.mxu0 %v2140
        %2160 = vmatprep.subr.bf16.mxu0 0
        %2161 = vmatpush1.bf16.msra.mxu0 %v2141
        %2162 = vmatprep.subr.bf16.mxu0 0
        %2163 = vmatpush1.bf16.msra.mxu0 %v2142
        %2164 = vmatprep.subr.bf16.mxu0 0
        %2165 = vmatpush1.bf16.msra.mxu0 %v2143
        %2166 = vmatprep.subr.bf16.mxu0 0
        %2167 = vmatpush1.bf16.msra.mxu0 %v2144
        %2168 = vmatprep.subr.bf16.mxu0 0
        %2169 = vmatpush1.bf16.msra.mxu0 %v2145
        %2170 = vmatprep.subr.bf16.mxu0 0
        %2171 = vmatpush1.bf16.msra.mxu0 0
        %2172 = vmatprep.subr.bf16.mxu0 0
        %2173 = vmatpush1.bf16.msra.mxu0 0
        %2174 = vmatprep.subr.bf16.mxu0 0
        %2175 = vmatpush1.bf16.msra.mxu0 0
        %2176 = vmatprep.subr.bf16.mxu0 0
        %2177 = vmatpush1.bf16.msra.mxu0 0
        %2178 = vmatprep.subr.bf16.mxu0 0
        %2179 = vmatpush1.bf16.msra.mxu0 0
        %2180 = vmatprep.subr.bf16.mxu0 0
        %2181 = vmatpush1.bf16.msra.mxu0 0
        %2182 = vmatprep.subr.bf16.mxu0 0
        %2183 = vmatpush1.bf16.msra.mxu0 0
        %2184 = vmatprep.subr.bf16.mxu0 0
        %2185 = vmatpush1.bf16.msra.mxu0 0
        %2186 = vmatprep.mubr.bf16.mxu0 0
        %2187 = vmatmul.mubr.bf16.gmra.mrb[0].mxu0 %v2098
        %v2188 = vpop.f32.mrb[0].mxu0
        %v2189 = vadd.f32 0.0, %v2188
        %v2190 = vpop.f32.mrb[0].mxu0
        %v2191 = vpop.f32.mrb[0].mxu0
        %v2192 = vadd.f32 0.0, %v2191
        %v2193 = vpop.f32.mrb[0].mxu0
        %2194 = vmatprep.mubr.bf16.mxu0 0
        %2195 = vmatmul.mubr.bf16.gmra.mrb[0].mxu0 %v2099
        %v2196 = vpop.f32.mrb[0].mxu0
        %v2197 = vadd.f32 0.0, %v2196
        %v2198 = vpop.f32.mrb[0].mxu0
        %v2199 = vpop.f32.mrb[0].mxu0
        %v2200 = vadd.f32 0.0, %v2199
        %v2201 = vpop.f32.mrb[0].mxu0
        %2202 = vmatprep.mubr.bf16.mxu0 0
        %2203 = vmatmul.mubr.bf16.gmra.mrb[0].mxu0 %v2100
        %v2204 = vpop.f32.mrb[0].mxu0
        %v2205 = vadd.f32 0.0, %v2204
        %v2206 = vpop.f32.mrb[0].mxu0
        %v2207 = vpop.f32.mrb[0].mxu0
        %v2208 = vadd.f32 0.0, %v2207
        %v2209 = vpop.f32.mrb[0].mxu0
        %2210 = vmatprep.mubr.bf16.mxu0 0
        %2211 = vmatmul.mubr.bf16.gmra.mrb[0].mxu0 %v2101
        %v2212 = vpop.f32.mrb[0].mxu0
        %v2213 = vadd.f32 0.0, %v2212
        %v2214 = vpop.f32.mrb[0].mxu0
        %v2215 = vpop.f32.mrb[0].mxu0
        %v2216 = vadd.f32 0.0, %v2215
        %v2217 = vpop.f32.mrb[0].mxu0
        %2218 = vdwg.mxu0
        %v2219 = vadd.f32 %v1937, %v2189
        %v2220 = vadd.f32 %v1938, %v2192
        %v2221 = vadd.f32 %v1939, %v2197
        %v2222 = vadd.f32 %v1940, %v2200
        %v2223 = vadd.f32 %v1941, %v2205
        %v2224 = vadd.f32 %v1942, %v2208
        %v2225 = vadd.f32 %v1943, %v2213
        %v2226 = vadd.f32 %v1944, %v2216
        %v2227 = vld [vmem:[%s2] sm:$0x1]
        %v2229 = vlaneseq
        %v2230 = vshrl.u32 %v2229, 7
        %v2231 = vsub.s32 0, %v2230
        %v2232 = vrot.slane %v2227, %v2231
        %v2234 = vmul.f32 %v2219, %v2232
        %v2235 = vmul.f32 %v2220, %v2232
        %v2236 = vmul.f32 %v2221, %v2232
        %v2237 = vmul.f32 %v2222, %v2232
        %v2238 = vmul.f32 %v2223, %v2232
        %v2239 = vmul.f32 %v2224, %v2232
        %v2240 = vmul.f32 %v2225, %v2232
        %v2241 = vmul.f32 %v2226, %v2232
        %v2242 = vld [vmem:[%s3] sm:$0x1]
        %v2244 = vlaneseq
        %v2245 = vshrl.u32 %v2244, 7
        %v2246 = vsub.s32 0, %v2245
        %v2247 = vrot.slane %v2242, %v2246
        %v2249 = vadd.f32 %v2234, %v2247
        %v2250 = vadd.f32 %v2235, %v2247
        %v2251 = vadd.f32 %v2236, %v2247
        %v2252 = vadd.f32 %v2237, %v2247
        %v2253 = vadd.f32 %v2238, %v2247
        %v2254 = vadd.f32 %v2239, %v2247
        %v2255 = vadd.f32 %v2240, %v2247
        %v2256 = vadd.f32 %v2241, %v2247
        %v2257 = vmax.f32 %v2249, 0.0
        %v2258 = vmax.f32 %v2250, 0.0
        %v2259 = vmax.f32 %v2251, 0.0
        %v2260 = vmax.f32 %v2252, 0.0
        %v2261 = vmax.f32 %v2253, 0.0
        %v2262 = vmax.f32 %v2254, 0.0
        %v2263 = vmax.f32 %v2255, 0.0
        %v2264 = vmax.f32 %v2256, 0.0
        %2265 = vst [vmem:[#allocation2] sm:$0xf] 0
        %2266 = vst [vmem:[#allocation2 + $0x4] sm:$0x1] 0
        %2267 = vst [vmem:[#allocation2 + $0x8] sm:$0xf] 0
        %2268 = vst [vmem:[#allocation2 + $0xc] sm:$0x1] 0
        %2269 = vst [vmem:[#allocation2 + $0x10] sm:$0xf] 0
        %2270 = vst [vmem:[#allocation2 + $0x14] sm:$0x1] 0
        %2271 = vst [vmem:[#allocation2 + $0x18] sm:$0xf] 0
        %2272 = vst [vmem:[#allocation2 + $0x1c] sm:$0x1] 0
        %2273 = vst [vmem:[#allocation2 + $0x20] sm:$0xf] 0
        %2274 = vst [vmem:[#allocation2 + $0x24] sm:$0x1] 0
        %2275 = vst [vmem:[#allocation2 + $0x28] sm:$0xf] 0
        %2276 = vst [vmem:[#allocation2 + $0x2c] sm:$0x1] 0
        %2277 = vst [vmem:[#allocation2 + $0x30] sm:$0xf] 0
        %2278 = vst [vmem:[#allocation2 + $0x34] sm:$0x1] 0
        %2279 = vst [vmem:[#allocation2 + $0x38] sm:$0xf] 0
        %2280 = vst [vmem:[#allocation2 + $0x3c] sm:$0x1] 0
        %2281 = vst [vmem:[#allocation2 + $0x40] sm:$0xf] 0
        %2282 = vst [vmem:[#allocation2 + $0x44] sm:$0x1] 0
        %2283 = vst [vmem:[#allocation2 + $0x48] sm:$0xf] 0
        %2284 = vst [vmem:[#allocation2 + $0x4c] sm:$0x1] 0
        %v2285 = vpack.c.bf16 %v2257, %v2257
        %v2286 = vpack.c.bf16 %v2258, %v2258
        %v2287 = vpack.c.bf16 %v2259, %v2259
        %v2288 = vpack.c.bf16 %v2260, %v2260
        %v2289 = vpack.c.bf16 %v2261, %v2261
        %v2290 = vpack.c.bf16 %v2262, %v2262
        %v2291 = vpack.c.bf16 %v2263, %v2263
        %v2292 = vpack.c.bf16 %v2264, %v2264
        %v2301 = vunpack.c.l.b16 %v2285
        %v2302 = vunpack.c.l.b16 %v2286
        %v2303 = vunpack.c.l.b16 %v2287
        %v2304 = vunpack.c.l.b16 %v2288
        %v2305 = vunpack.c.l.b16 %v2289
        %v2306 = vunpack.c.l.b16 %v2290
        %v2307 = vunpack.c.l.b16 %v2291
        %v2308 = vunpack.c.l.b16 %v2292
        %v2309 = vpack.c.b16 %v2301, %v2301
        %v2310 = vpack.c.b16 %v2302, %v2302
        %v2311 = vpack.c.b16 %v2303, %v2303
        %v2312 = vpack.c.b16 %v2304, %v2304
        %v2313 = vpack.c.b16 %v2305, %v2305
        %v2314 = vpack.c.b16 %v2306, %v2306
        %v2315 = vpack.c.b16 %v2307, %v2307
        %v2316 = vpack.c.b16 %v2308, %v2308
        %v2318 = vshrl.u32 %v2309, 16
        %v2320 = vrot.slane %v2318, 7
        %v2321 = vshll.u32 %v2309, 16
        %v2323 = vor.u32 %v2320, %v2321
        %v2324 = vrot.slane %v2320, 4
        %v2326 = vshrl.u32 %v2310, 16
        %v2328 = vrot.slane %v2326, 7
        %v2329 = vshll.u32 %v2310, 16
        %v2331 = vor.u32 %v2328, %v2329
        %v2332 = vrot.slane %v2328, 4
        %v2334 = vshrl.u32 %v2311, 16
        %v2336 = vrot.slane %v2334, 7
        %v2337 = vshll.u32 %v2311, 16
        %v2339 = vor.u32 %v2336, %v2337
        %v2340 = vrot.slane %v2336, 4
        %v2342 = vshrl.u32 %v2312, 16
        %v2344 = vrot.slane %v2342, 7
        %v2345 = vshll.u32 %v2312, 16
        %v2347 = vor.u32 %v2344, %v2345
        %v2348 = vrot.slane %v2344, 4
        %v2350 = vshrl.u32 %v2313, 16
        %v2352 = vrot.slane %v2350, 7
        %v2353 = vshll.u32 %v2313, 16
        %v2355 = vor.u32 %v2352, %v2353
        %v2356 = vrot.slane %v2352, 4
        %v2358 = vshrl.u32 %v2314, 16
        %v2360 = vrot.slane %v2358, 7
        %v2361 = vshll.u32 %v2314, 16
        %v2363 = vor.u32 %v2360, %v2361
        %v2364 = vrot.slane %v2360, 4
        %v2366 = vshrl.u32 %v2315, 16
        %v2368 = vrot.slane %v2366, 7
        %v2369 = vshll.u32 %v2315, 16
        %v2371 = vor.u32 %v2368, %v2369
        %v2372 = vrot.slane %v2368, 4
        %v2374 = vshrl.u32 %v2316, 16
        %v2376 = vrot.slane %v2374, 7
        %v2377 = vshll.u32 %v2316, 16
        %v2379 = vor.u32 %v2376, %v2377
        %v2380 = vrot.slane %v2376, 4
        %s2397 = scalar_lea.vmem [#allocation2], 8
        %vm2398 = vcmask 1043456
        %vm2399 = vsmask.f32 7938
        %vm2400 = vmand %vm2398, %vm2399
        %v2401 = vld [vmem:[%s2397] sm:$0xf]
        %v2402 = vsel %vm2400, %v2323, %v2401
        %2403 = vst [vmem:[%s2397] sm:$0xf] %v2402
        %vm2404 = vcmask 1040384
        %vm2405 = vsmask.f32 256
        %vm2406 = vmand %vm2404, %vm2405
        %v2407 = vld [vmem:[%s2397 + $0x4] sm:$0x1]
        %v2408 = vsel %vm2406, %v2324, %v2407
        %2409 = vst [vmem:[%s2397 + $0x4] sm:$0x1] %v2408
        %v2410 = vld [vmem:[%s2397 + $0x8] sm:$0xf]
        %v2411 = vsel %vm2400, %v2331, %v2410
        %2412 = vst [vmem:[%s2397 + $0x8] sm:$0xf] %v2411
        %v2413 = vld [vmem:[%s2397 + $0xc] sm:$0x1]
        %v2414 = vsel %vm2406, %v2332, %v2413
        %2415 = vst [vmem:[%s2397 + $0xc] sm:$0x1] %v2414
        %v2416 = vld [vmem:[%s2397 + $0x10] sm:$0xf]
        %v2417 = vsel %vm2400, %v2339, %v2416
        %2418 = vst [vmem:[%s2397 + $0x10] sm:$0xf] %v2417
        %v2419 = vld [vmem:[%s2397 + $0x14] sm:$0x1]
        %v2420 = vsel %vm2406, %v2340, %v2419
        %2421 = vst [vmem:[%s2397 + $0x14] sm:$0x1] %v2420
        %v2422 = vld [vmem:[%s2397 + $0x18] sm:$0xf]
        %v2423 = vsel %vm2400, %v2347, %v2422
        %2424 = vst [vmem:[%s2397 + $0x18] sm:$0xf] %v2423
        %v2425 = vld [vmem:[%s2397 + $0x1c] sm:$0x1]
        %v2426 = vsel %vm2406, %v2348, %v2425
        %2427 = vst [vmem:[%s2397 + $0x1c] sm:$0x1] %v2426
        %v2428 = vld [vmem:[%s2397 + $0x20] sm:$0xf]
        %v2429 = vsel %vm2400, %v2355, %v2428
        %2430 = vst [vmem:[%s2397 + $0x20] sm:$0xf] %v2429
        %v2431 = vld [vmem:[%s2397 + $0x24] sm:$0x1]
        %v2432 = vsel %vm2406, %v2356, %v2431
        %2433 = vst [vmem:[%s2397 + $0x24] sm:$0x1] %v2432
        %v2434 = vld [vmem:[%s2397 + $0x28] sm:$0xf]
        %v2435 = vsel %vm2400, %v2363, %v2434
        %2436 = vst [vmem:[%s2397 + $0x28] sm:$0xf] %v2435
        %v2437 = vld [vmem:[%s2397 + $0x2c] sm:$0x1]
        %v2438 = vsel %vm2406, %v2364, %v2437
        %2439 = vst [vmem:[%s2397 + $0x2c] sm:$0x1] %v2438
        %v2440 = vld [vmem:[%s2397 + $0x30] sm:$0xf]
        %v2441 = vsel %vm2400, %v2371, %v2440
        %2442 = vst [vmem:[%s2397 + $0x30] sm:$0xf] %v2441
        %v2443 = vld [vmem:[%s2397 + $0x34] sm:$0x1]
        %v2444 = vsel %vm2406, %v2372, %v2443
        %2445 = vst [vmem:[%s2397 + $0x34] sm:$0x1] %v2444
        %v2446 = vld [vmem:[%s2397 + $0x38] sm:$0xf]
        %v2447 = vsel %vm2400, %v2379, %v2446
        %2448 = vst [vmem:[%s2397 + $0x38] sm:$0xf] %v2447
        %v2449 = vld [vmem:[%s2397 + $0x3c] sm:$0x1]
        %v2450 = vsel %vm2406, %v2380, %v2449
        %2451 = vst [vmem:[%s2397 + $0x3c] sm:$0x1] %v2450
        %v2452 = vld [vmem:[#allocation2] sm:$0xf]
        %v2453 = vld [vmem:[#allocation2 + $0x8] sm:$0xf]
        %v2454 = vld [vmem:[#allocation2 + $0x10] sm:$0xf]
        %v2455 = vld [vmem:[#allocation2 + $0x18] sm:$0xf]
        %v2456 = vld [vmem:[#allocation2 + $0x20] sm:$0xf]
        %v2457 = vld [vmem:[#allocation2 + $0x28] sm:$0xf]
        %v2458 = vld [vmem:[#allocation2 + $0x30] sm:$0xf]
        %v2459 = vld [vmem:[#allocation2 + $0x38] sm:$0xf]
        %v2460 = vld [vmem:[#allocation3] sm:$0xf]
        %v2461 = vld [vmem:[#allocation3 + $0x4] sm:$0xf]
        %v2462 = vld [vmem:[#allocation3 + $0x8] sm:$0xf]
        %v2463 = vld [vmem:[#allocation3 + $0xc] sm:$0xf]
        %v2464 = vld [vmem:[#allocation3 + $0x10] sm:$0xf]
        %v2465 = vld [vmem:[#allocation3 + $0x14] sm:$0xf]
        %v2466 = vld [vmem:[#allocation3 + $0x18] sm:$0xf]
        %v2467 = vld [vmem:[#allocation3 + $0x1c] sm:$0xf]
        %v2468 = vld [vmem:[#allocation3 + $0x20] sm:$0xf]
        %v2469 = vld [vmem:[#allocation3 + $0x24] sm:$0xf]
        %v2470 = vld [vmem:[#allocation3 + $0x28] sm:$0xf]
        %v2471 = vld [vmem:[#allocation3 + $0x2c] sm:$0xf]
        %v2472 = vld [vmem:[#allocation3 + $0x30] sm:$0xf]
        %v2473 = vld [vmem:[#allocation3 + $0x34] sm:$0xf]
        %v2474 = vld [vmem:[#allocation3 + $0x38] sm:$0xf]
        %v2475 = vld [vmem:[#allocation3 + $0x3c] sm:$0xf]
        %v2476 = vld [vmem:[#allocation2 + $0x4] sm:$0x1]
        %v2477 = vld [vmem:[#allocation2 + $0xc] sm:$0x1]
        %v2478 = vld [vmem:[#allocation2 + $0x14] sm:$0x1]
        %v2479 = vld [vmem:[#allocation2 + $0x1c] sm:$0x1]
        %v2480 = vld [vmem:[#allocation2 + $0x24] sm:$0x1]
        %v2481 = vld [vmem:[#allocation2 + $0x2c] sm:$0x1]
        %v2482 = vld [vmem:[#allocation2 + $0x34] sm:$0x1]
        %v2483 = vld [vmem:[#allocation2 + $0x3c] sm:$0x1]
        %v2485 = vshrl.u32 %v2452, 16
        %v2487 = vrot.slane %v2485, 4
        %v2488 = vshll.u32 %v2452, 16
        %v2490 = vrot.slane %v2488, 5
        %v2491 = vor.u32 %v2487, %v2490
        %v2492 = vrot.slane %v2491, 4
        %v2494 = vshll.u32 %v2476, 16
        %v2496 = vrot.slane %v2494, 5
        %v2497 = vsel %vm715, %v2492, %v2496
        %v2499 = vshrl.u32 %v2453, 16
        %v2501 = vrot.slane %v2499, 4
        %v2502 = vshll.u32 %v2453, 16
        %v2504 = vrot.slane %v2502, 5
        %v2505 = vor.u32 %v2501, %v2504
        %v2506 = vrot.slane %v2505, 4
        %v2508 = vshll.u32 %v2477, 16
        %v2510 = vrot.slane %v2508, 5
        %v2511 = vsel %vm715, %v2506, %v2510
        %v2513 = vshrl.u32 %v2454, 16
        %v2515 = vrot.slane %v2513, 4
        %v2516 = vshll.u32 %v2454, 16
        %v2518 = vrot.slane %v2516, 5
        %v2519 = vor.u32 %v2515, %v2518
        %v2520 = vrot.slane %v2519, 4
        %v2522 = vshll.u32 %v2478, 16
        %v2524 = vrot.slane %v2522, 5
        %v2525 = vsel %vm715, %v2520, %v2524
        %v2527 = vshrl.u32 %v2455, 16
        %v2529 = vrot.slane %v2527, 4
        %v2530 = vshll.u32 %v2455, 16
        %v2532 = vrot.slane %v2530, 5
        %v2533 = vor.u32 %v2529, %v2532
        %v2534 = vrot.slane %v2533, 4
        %v2536 = vshll.u32 %v2479, 16
        %v2538 = vrot.slane %v2536, 5
        %v2539 = vsel %vm715, %v2534, %v2538
        %v2541 = vshrl.u32 %v2456, 16
        %v2543 = vrot.slane %v2541, 4
        %v2544 = vshll.u32 %v2456, 16
        %v2546 = vrot.slane %v2544, 5
        %v2547 = vor.u32 %v2543, %v2546
        %v2548 = vrot.slane %v2547, 4
        %v2550 = vshll.u32 %v2480, 16
        %v2552 = vrot.slane %v2550, 5
        %v2553 = vsel %vm715, %v2548, %v2552
        %v2555 = vshrl.u32 %v2457, 16
        %v2557 = vrot.slane %v2555, 4
        %v2558 = vshll.u32 %v2457, 16
        %v2560 = vrot.slane %v2558, 5
        %v2561 = vor.u32 %v2557, %v2560
        %v2562 = vrot.slane %v2561, 4
        %v2564 = vshll.u32 %v2481, 16
        %v2566 = vrot.slane %v2564, 5
        %v2567 = vsel %vm715, %v2562, %v2566
        %v2569 = vshrl.u32 %v2458, 16
        %v2571 = vrot.slane %v2569, 4
        %v2572 = vshll.u32 %v2458, 16
        %v2574 = vrot.slane %v2572, 5
        %v2575 = vor.u32 %v2571, %v2574
        %v2576 = vrot.slane %v2575, 4
        %v2578 = vshll.u32 %v2482, 16
        %v2580 = vrot.slane %v2578, 5
        %v2581 = vsel %vm715, %v2576, %v2580
        %v2583 = vshrl.u32 %v2459, 16
        %v2585 = vrot.slane %v2583, 4
        %v2586 = vshll.u32 %v2459, 16
        %v2588 = vrot.slane %v2586, 5
        %v2589 = vor.u32 %v2585, %v2588
        %v2590 = vrot.slane %v2589, 4
        %v2592 = vshll.u32 %v2483, 16
        %v2594 = vrot.slane %v2592, 5
        %v2595 = vsel %vm715, %v2590, %v2594
        %s2596 = scalar_lea.vmem [#allocation3], 64
        %v2597 = vld [vmem:[%s2596] sm:$0xf]
        %v2598 = vld [vmem:[%s2596 + $0x4] sm:$0xf]
        %v2599 = vld [vmem:[%s2596 + $0x8] sm:$0xf]
        %v2600 = vld [vmem:[%s2596 + $0xc] sm:$0xf]
        %v2601 = vld [vmem:[%s2596 + $0x10] sm:$0xf]
        %v2602 = vld [vmem:[%s2596 + $0x14] sm:$0xf]
        %v2603 = vld [vmem:[%s2596 + $0x18] sm:$0xf]
        %v2604 = vld [vmem:[%s2596 + $0x1c] sm:$0xf]
        %v2605 = vld [vmem:[%s2596 + $0x20] sm:$0xf]
        %v2606 = vld [vmem:[%s2596 + $0x24] sm:$0xf]
        %v2607 = vld [vmem:[%s2596 + $0x28] sm:$0xf]
        %v2608 = vld [vmem:[%s2596 + $0x2c] sm:$0xf]
        %v2609 = vld [vmem:[%s2596 + $0x30] sm:$0xf]
        %v2610 = vld [vmem:[%s2596 + $0x34] sm:$0xf]
        %v2611 = vld [vmem:[%s2596 + $0x38] sm:$0xf]
        %v2612 = vld [vmem:[%s2596 + $0x3c] sm:$0xf]
        %v2613 = vunpack.c.l.b16 %v2497
        %v2614 = vunpack.c.l.b16 %v2511
        %v2615 = vunpack.c.l.b16 %v2525
        %v2616 = vunpack.c.l.b16 %v2539
        %v2617 = vunpack.c.l.b16 %v2553
        %v2618 = vunpack.c.l.b16 %v2567
        %v2619 = vunpack.c.l.b16 %v2581
        %v2620 = vunpack.c.l.b16 %v2595
        %v2621 = vpack.c.b16 %v2614, %v2613
        %v2622 = vpack.c.b16 %v2616, %v2615
        %v2623 = vpack.c.b16 %v2618, %v2617
        %v2624 = vpack.c.b16 %v2620, %v2619
        %v2645 = vunpack.c.l.b16 %v2597
        %v2646 = vunpack.c.l.b16 %v2598
        %v2647 = vunpack.c.l.b16 %v2599
        %v2648 = vunpack.c.l.b16 %v2600
        %v2649 = vunpack.c.l.b16 %v2601
        %v2650 = vunpack.c.l.b16 %v2602
        %v2651 = vunpack.c.l.b16 %v2603
        %v2652 = vunpack.c.l.b16 %v2604
        %v2653 = vunpack.c.l.b16 %v2605
        %v2654 = vunpack.c.l.b16 %v2606
        %v2655 = vunpack.c.l.b16 %v2607
        %v2656 = vunpack.c.l.b16 %v2608
        %v2657 = vunpack.c.l.b16 %v2609
        %v2658 = vunpack.c.l.b16 %v2610
        %v2659 = vunpack.c.l.b16 %v2611
        %v2660 = vunpack.c.l.b16 %v2612
        %v2661 = vpack.c.b16 %v2646, %v2645
        %v2662 = vpack.c.b16 %v2648, %v2647
        %v2663 = vpack.c.b16 %v2650, %v2649
        %v2664 = vpack.c.b16 %v2652, %v2651
        %v2665 = vpack.c.b16 %v2654, %v2653
        %v2666 = vpack.c.b16 %v2656, %v2655
        %v2667 = vpack.c.b16 %v2658, %v2657
        %v2668 = vpack.c.b16 %v2660, %v2659
        %2677 = vmatprep.subr.bf16.mxu0 0
        %2678 = vmatpush1.bf16.msra.mxu0 %v2661
        %2679 = vmatprep.subr.bf16.mxu0 0
        %2680 = vmatpush1.bf16.msra.mxu0 %v2662
        %2681 = vmatprep.subr.bf16.mxu0 0
        %2682 = vmatpush1.bf16.msra.mxu0 %v2663
        %2683 = vmatprep.subr.bf16.mxu0 0
        %2684 = vmatpush1.bf16.msra.mxu0 %v2664
        %2685 = vmatprep.subr.bf16.mxu0 0
        %2686 = vmatpush1.bf16.msra.mxu0 %v2665
        %2687 = vmatprep.subr.bf16.mxu0 0
        %2688 = vmatpush1.bf16.msra.mxu0 %v2666
        %2689 = vmatprep.subr.bf16.mxu0 0
        %2690 = vmatpush1.bf16.msra.mxu0 %v2667
        %2691 = vmatprep.subr.bf16.mxu0 0
        %2692 = vmatpush1.bf16.msra.mxu0 %v2668
        %2693 = vmatprep.subr.bf16.mxu0 0
        %2694 = vmatpush1.bf16.msra.mxu0 0
        %2695 = vmatprep.subr.bf16.mxu0 0
        %2696 = vmatpush1.bf16.msra.mxu0 0
        %2697 = vmatprep.subr.bf16.mxu0 0
        %2698 = vmatpush1.bf16.msra.mxu0 0
        %2699 = vmatprep.subr.bf16.mxu0 0
        %2700 = vmatpush1.bf16.msra.mxu0 0
        %2701 = vmatprep.subr.bf16.mxu0 0
        %2702 = vmatpush1.bf16.msra.mxu0 0
        %2703 = vmatprep.subr.bf16.mxu0 0
        %2704 = vmatpush1.bf16.msra.mxu0 0
        %2705 = vmatprep.subr.bf16.mxu0 0
        %2706 = vmatpush1.bf16.msra.mxu0 0
        %2707 = vmatprep.subr.bf16.mxu0 0
        %2708 = vmatpush1.bf16.msra.mxu0 0
        %2709 = vmatprep.mubr.bf16.mxu0 0
        %2710 = vmatmul.mubr.bf16.gmra.mrb[0].mxu0 %v2621
        %v2711 = vpop.f32.mrb[0].mxu0
        %v2712 = vadd.f32 0.0, %v2711
        %v2713 = vpop.f32.mrb[0].mxu0
        %v2714 = vpop.f32.mrb[0].mxu0
        %v2715 = vadd.f32 0.0, %v2714
        %v2716 = vpop.f32.mrb[0].mxu0
        %2717 = vmatprep.mubr.bf16.mxu0 0
        %2718 = vmatmul.mubr.bf16.gmra.mrb[0].mxu0 %v2622
        %v2719 = vpop.f32.mrb[0].mxu0
        %v2720 = vadd.f32 0.0, %v2719
        %v2721 = vpop.f32.mrb[0].mxu0
        %v2722 = vpop.f32.mrb[0].mxu0
        %v2723 = vadd.f32 0.0, %v2722
        %v2724 = vpop.f32.mrb[0].mxu0
        %2725 = vmatprep.mubr.bf16.mxu0 0
        %2726 = vmatmul.mubr.bf16.gmra.mrb[0].mxu0 %v2623
        %v2727 = vpop.f32.mrb[0].mxu0
        %v2728 = vadd.f32 0.0, %v2727
        %v2729 = vpop.f32.mrb[0].mxu0
        %v2730 = vpop.f32.mrb[0].mxu0
        %v2731 = vadd.f32 0.0, %v2730
        %v2732 = vpop.f32.mrb[0].mxu0
        %2733 = vmatprep.mubr.bf16.mxu0 0
        %2734 = vmatmul.mubr.bf16.gmra.mrb[0].mxu0 %v2624
        %v2735 = vpop.f32.mrb[0].mxu0
        %v2736 = vadd.f32 0.0, %v2735
        %v2737 = vpop.f32.mrb[0].mxu0
        %v2738 = vpop.f32.mrb[0].mxu0
        %v2739 = vadd.f32 0.0, %v2738
        %v2740 = vpop.f32.mrb[0].mxu0
        %2741 = vdwg.mxu0
        %v2750 = vunpack.c.l.b16 %v2452
        %v2751 = vunpack.c.l.b16 %v2453
        %v2752 = vunpack.c.l.b16 %v2454
        %v2753 = vunpack.c.l.b16 %v2455
        %v2754 = vunpack.c.l.b16 %v2456
        %v2755 = vunpack.c.l.b16 %v2457
        %v2756 = vunpack.c.l.b16 %v2458
        %v2757 = vunpack.c.l.b16 %v2459
        %v2758 = vpack.c.b16 %v2751, %v2750
        %v2759 = vpack.c.b16 %v2753, %v2752
        %v2760 = vpack.c.b16 %v2755, %v2754
        %v2761 = vpack.c.b16 %v2757, %v2756
        %v2782 = vunpack.c.l.b16 %v2460
        %v2783 = vunpack.c.l.b16 %v2461
        %v2784 = vunpack.c.l.b16 %v2462
        %v2785 = vunpack.c.l.b16 %v2463
        %v2786 = vunpack.c.l.b16 %v2464
        %v2787 = vunpack.c.l.b16 %v2465
        %v2788 = vunpack.c.l.b16 %v2466
        %v2789 = vunpack.c.l.b16 %v2467
        %v2790 = vunpack.c.l.b16 %v2468
        %v2791 = vunpack.c.l.b16 %v2469
        %v2792 = vunpack.c.l.b16 %v2470
        %v2793 = vunpack.c.l.b16 %v2471
        %v2794 = vunpack.c.l.b16 %v2472
        %v2795 = vunpack.c.l.b16 %v2473
        %v2796 = vunpack.c.l.b16 %v2474
        %v2797 = vunpack.c.l.b16 %v2475
        %v2798 = vpack.c.b16 %v2783, %v2782
        %v2799 = vpack.c.b16 %v2785, %v2784
        %v2800 = vpack.c.b16 %v2787, %v2786
        %v2801 = vpack.c.b16 %v2789, %v2788
        %v2802 = vpack.c.b16 %v2791, %v2790
        %v2803 = vpack.c.b16 %v2793, %v2792
        %v2804 = vpack.c.b16 %v2795, %v2794
        %v2805 = vpack.c.b16 %v2797, %v2796
        %2814 = vmatprep.subr.bf16.mxu0 0
        %2815 = vmatpush1.bf16.msra.mxu0 %v2798
        %2816 = vmatprep.subr.bf16.mxu0 0
        %2817 = vmatpush1.bf16.msra.mxu0 %v2799
        %2818 = vmatprep.subr.bf16.mxu0 0
        %2819 = vmatpush1.bf16.msra.mxu0 %v2800
        %2820 = vmatprep.subr.bf16.mxu0 0
        %2821 = vmatpush1.bf16.msra.mxu0 %v2801
        %2822 = vmatprep.subr.bf16.mxu0 0
        %2823 = vmatpush1.bf16.msra.mxu0 %v2802
        %2824 = vmatprep.subr.bf16.mxu0 0
        %2825 = vmatpush1.bf16.msra.mxu0 %v2803
        %2826 = vmatprep.subr.bf16.mxu0 0
        %2827 = vmatpush1.bf16.msra.mxu0 %v2804
        %2828 = vmatprep.subr.bf16.mxu0 0
        %2829 = vmatpush1.bf16.msra.mxu0 %v2805
        %2830 = vmatprep.subr.bf16.mxu0 0
        %2831 = vmatpush1.bf16.msra.mxu0 0
        %2832 = vmatprep.subr.bf16.mxu0 0
        %2833 = vmatpush1.bf16.msra.mxu0 0
        %2834 = vmatprep.subr.bf16.mxu0 0
        %2835 = vmatpush1.bf16.msra.mxu0 0
        %2836 = vmatprep.subr.bf16.mxu0 0
        %2837 = vmatpush1.bf16.msra.mxu0 0
        %2838 = vmatprep.subr.bf16.mxu0 0
        %2839 = vmatpush1.bf16.msra.mxu0 0
        %2840 = vmatprep.subr.bf16.mxu0 0
        %2841 = vmatpush1.bf16.msra.mxu0 0
        %2842 = vmatprep.subr.bf16.mxu0 0
        %2843 = vmatpush1.bf16.msra.mxu0 0
        %2844 = vmatprep.subr.bf16.mxu0 0
        %2845 = vmatpush1.bf16.msra.mxu0 0
        %2846 = vmatprep.mubr.bf16.mxu0 0
        %2847 = vmatmul.mubr.bf16.gmra.mrb[0].mxu0 %v2758
        %v2848 = vpop.f32.mrb[0].mxu0
        %v2849 = vadd.f32 %v2712, %v2848
        %v2850 = vpop.f32.mrb[0].mxu0
        %v2851 = vpop.f32.mrb[0].mxu0
        %v2852 = vadd.f32 %v2715, %v2851
        %v2853 = vpop.f32.mrb[0].mxu0
        %2854 = vmatprep.mubr.bf16.mxu0 0
        %2855 = vmatmul.mubr.bf16.gmra.mrb[0].mxu0 %v2759
        %v2856 = vpop.f32.mrb[0].mxu0
        %v2857 = vadd.f32 %v2720, %v2856
        %v2858 = vpop.f32.mrb[0].mxu0
        %v2859 = vpop.f32.mrb[0].mxu0
        %v2860 = vadd.f32 %v2723, %v2859
        %v2861 = vpop.f32.mrb[0].mxu0
        %2862 = vmatprep.mubr.bf16.mxu0 0
        %2863 = vmatmul.mubr.bf16.gmra.mrb[0].mxu0 %v2760
        %v2864 = vpop.f32.mrb[0].mxu0
        %v2865 = vadd.f32 %v2728, %v2864
        %v2866 = vpop.f32.mrb[0].mxu0
        %v2867 = vpop.f32.mrb[0].mxu0
        %v2868 = vadd.f32 %v2731, %v2867
        %v2869 = vpop.f32.mrb[0].mxu0
        %2870 = vmatprep.mubr.bf16.mxu0 0
        %2871 = vmatmul.mubr.bf16.gmra.mrb[0].mxu0 %v2761
        %v2872 = vpop.f32.mrb[0].mxu0
        %v2873 = vadd.f32 %v2736, %v2872
        %v2874 = vpop.f32.mrb[0].mxu0
        %v2875 = vpop.f32.mrb[0].mxu0
        %v2876 = vadd.f32 %v2739, %v2875
        %v2877 = vpop.f32.mrb[0].mxu0
        %2878 = vdwg.mxu0
        %v2879 = vld [vmem:[#allocation2] sm:$0xe]
        %v2880 = vld [vmem:[#allocation2 + $0x8] sm:$0xe]
        %v2881 = vld [vmem:[#allocation2 + $0x10] sm:$0xe]
        %v2882 = vld [vmem:[#allocation2 + $0x18] sm:$0xe]
        %v2883 = vld [vmem:[#allocation2 + $0x20] sm:$0xe]
        %v2884 = vld [vmem:[#allocation2 + $0x28] sm:$0xe]
        %v2885 = vld [vmem:[#allocation2 + $0x30] sm:$0xe]
        %v2886 = vld [vmem:[#allocation2 + $0x38] sm:$0xe]
        %vm2903 = vcmask 1042432
        %vm2904 = vcmask 1046532
        %vm2905 = vmor %vm2903, %vm2904
        %v2906 = vrot.slane %v2879, 5
        %v2907 = vrot.slane %v2906, 4
        %v2908 = vrot.slane %v2476, 5
        %v2909 = vsel %vm2905, %v2907, %v2908
        %v2910 = vrot.slane %v2880, 5
        %v2911 = vrot.slane %v2910, 4
        %v2912 = vrot.slane %v2477, 5
        %v2913 = vsel %vm2905, %v2911, %v2912
        %v2914 = vrot.slane %v2881, 5
        %v2915 = vrot.slane %v2914, 4
        %v2916 = vrot.slane %v2478, 5
        %v2917 = vsel %vm2905, %v2915, %v2916
        %v2918 = vrot.slane %v2882, 5
        %v2919 = vrot.slane %v2918, 4
        %v2920 = vrot.slane %v2479, 5
        %v2921 = vsel %vm2905, %v2919, %v2920
        %v2922 = vrot.slane %v2883, 5
        %v2923 = vrot.slane %v2922, 4
        %v2924 = vrot.slane %v2480, 5
        %v2925 = vsel %vm2905, %v2923, %v2924
        %v2926 = vrot.slane %v2884, 5
        %v2927 = vrot.slane %v2926, 4
        %v2928 = vrot.slane %v2481, 5
        %v2929 = vsel %vm2905, %v2927, %v2928
        %v2930 = vrot.slane %v2885, 5
        %v2931 = vrot.slane %v2930, 4
        %v2932 = vrot.slane %v2482, 5
        %v2933 = vsel %vm2905, %v2931, %v2932
        %v2934 = vrot.slane %v2886, 5
        %v2935 = vrot.slane %v2934, 4
        %v2936 = vrot.slane %v2483, 5
        %v2937 = vsel %vm2905, %v2935, %v2936
        %s2938 = scalar_lea.vmem [#allocation3], 128
        %v2939 = vld [vmem:[%s2938] sm:$0xf]
        %v2940 = vld [vmem:[%s2938 + $0x4] sm:$0xf]
        %v2941 = vld [vmem:[%s2938 + $0x8] sm:$0xf]
        %v2942 = vld [vmem:[%s2938 + $0xc] sm:$0xf]
        %v2943 = vld [vmem:[%s2938 + $0x10] sm:$0xf]
        %v2944 = vld [vmem:[%s2938 + $0x14] sm:$0xf]
        %v2945 = vld [vmem:[%s2938 + $0x18] sm:$0xf]
        %v2946 = vld [vmem:[%s2938 + $0x1c] sm:$0xf]
        %v2947 = vld [vmem:[%s2938 + $0x20] sm:$0xf]
        %v2948 = vld [vmem:[%s2938 + $0x24] sm:$0xf]
        %v2949 = vld [vmem:[%s2938 + $0x28] sm:$0xf]
        %v2950 = vld [vmem:[%s2938 + $0x2c] sm:$0xf]
        %v2951 = vld [vmem:[%s2938 + $0x30] sm:$0xf]
        %v2952 = vld [vmem:[%s2938 + $0x34] sm:$0xf]
        %v2953 = vld [vmem:[%s2938 + $0x38] sm:$0xf]
        %v2954 = vld [vmem:[%s2938 + $0x3c] sm:$0xf]
        %v2955 = vunpack.c.l.b16 %v2909
        %v2956 = vunpack.c.l.b16 %v2913
        %v2957 = vunpack.c.l.b16 %v2917
        %v2958 = vunpack.c.l.b16 %v2921
        %v2959 = vunpack.c.l.b16 %v2925
        %v2960 = vunpack.c.l.b16 %v2929
        %v2961 = vunpack.c.l.b16 %v2933
        %v2962 = vunpack.c.l.b16 %v2937
        %v2963 = vpack.c.b16 %v2956, %v2955
        %v2964 = vpack.c.b16 %v2958, %v2957
        %v2965 = vpack.c.b16 %v2960, %v2959
        %v2966 = vpack.c.b16 %v2962, %v2961
        %v2987 = vunpack.c.l.b16 %v2939
        %v2988 = vunpack.c.l.b16 %v2940
        %v2989 = vunpack.c.l.b16 %v2941
        %v2990 = vunpack.c.l.b16 %v2942
        %v2991 = vunpack.c.l.b16 %v2943
        %v2992 = vunpack.c.l.b16 %v2944
        %v2993 = vunpack.c.l.b16 %v2945
        %v2994 = vunpack.c.l.b16 %v2946
        %v2995 = vunpack.c.l.b16 %v2947
        %v2996 = vunpack.c.l.b16 %v2948
        %v2997 = vunpack.c.l.b16 %v2949
        %v2998 = vunpack.c.l.b16 %v2950
        %v2999 = vunpack.c.l.b16 %v2951
        %v3000 = vunpack.c.l.b16 %v2952
        %v3001 = vunpack.c.l.b16 %v2953
        %v3002 = vunpack.c.l.b16 %v2954
        %v3003 = vpack.c.b16 %v2988, %v2987
        %v3004 = vpack.c.b16 %v2990, %v2989
        %v3005 = vpack.c.b16 %v2992, %v2991
        %v3006 = vpack.c.b16 %v2994, %v2993
        %v3007 = vpack.c.b16 %v2996, %v2995
        %v3008 = vpack.c.b16 %v2998, %v2997
        %v3009 = vpack.c.b16 %v3000, %v2999
        %v3010 = vpack.c.b16 %v3002, %v3001
        %3019 = vmatprep.subr.bf16.mxu0 0
        %3020 = vmatpush1.bf16.msra.mxu0 %v3003
        %3021 = vmatprep.subr.bf16.mxu0 0
        %3022 = vmatpush1.bf16.msra.mxu0 %v3004
        %3023 = vmatprep.subr.bf16.mxu0 0
        %3024 = vmatpush1.bf16.msra.mxu0 %v3005
        %3025 = vmatprep.subr.bf16.mxu0 0
        %3026 = vmatpush1.bf16.msra.mxu0 %v3006
        %3027 = vmatprep.subr.bf16.mxu0 0
        %3028 = vmatpush1.bf16.msra.mxu0 %v3007
        %3029 = vmatprep.subr.bf16.mxu0 0
        %3030 = vmatpush1.bf16.msra.mxu0 %v3008
        %3031 = vmatprep.subr.bf16.mxu0 0
        %3032 = vmatpush1.bf16.msra.mxu0 %v3009
        %3033 = vmatprep.subr.bf16.mxu0 0
        %3034 = vmatpush1.bf16.msra.mxu0 %v3010
        %3035 = vmatprep.subr.bf16.mxu0 0
        %3036 = vmatpush1.bf16.msra.mxu0 0
        %3037 = vmatprep.subr.bf16.mxu0 0
        %3038 = vmatpush1.bf16.msra.mxu0 0
        %3039 = vmatprep.subr.bf16.mxu0 0
        %3040 = vmatpush1.bf16.msra.mxu0 0
        %3041 = vmatprep.subr.bf16.mxu0 0
        %3042 = vmatpush1.bf16.msra.mxu0 0
        %3043 = vmatprep.subr.bf16.mxu0 0
        %3044 = vmatpush1.bf16.msra.mxu0 0
        %3045 = vmatprep.subr.bf16.mxu0 0
        %3046 = vmatpush1.bf16.msra.mxu0 0
        %3047 = vmatprep.subr.bf16.mxu0 0
        %3048 = vmatpush1.bf16.msra.mxu0 0
        %3049 = vmatprep.subr.bf16.mxu0 0
        %3050 = vmatpush1.bf16.msra.mxu0 0
        %3051 = vmatprep.mubr.bf16.mxu0 0
        %3052 = vmatmul.mubr.bf16.gmra.mrb[0].mxu0 %v2963
        %v3053 = vpop.f32.mrb[0].mxu0
        %v3054 = vadd.f32 0.0, %v3053
        %v3055 = vpop.f32.mrb[0].mxu0
        %v3056 = vpop.f32.mrb[0].mxu0
        %v3057 = vadd.f32 0.0, %v3056
        %v3058 = vpop.f32.mrb[0].mxu0
        %3059 = vmatprep.mubr.bf16.mxu0 0
        %3060 = vmatmul.mubr.bf16.gmra.mrb[0].mxu0 %v2964
        %v3061 = vpop.f32.mrb[0].mxu0
        %v3062 = vadd.f32 0.0, %v3061
        %v3063 = vpop.f32.mrb[0].mxu0
        %v3064 = vpop.f32.mrb[0].mxu0
        %v3065 = vadd.f32 0.0, %v3064
        %v3066 = vpop.f32.mrb[0].mxu0
        %3067 = vmatprep.mubr.bf16.mxu0 0
        %3068 = vmatmul.mubr.bf16.gmra.mrb[0].mxu0 %v2965
        %v3069 = vpop.f32.mrb[0].mxu0
        %v3070 = vadd.f32 0.0, %v3069
        %v3071 = vpop.f32.mrb[0].mxu0
        %v3072 = vpop.f32.mrb[0].mxu0
        %v3073 = vadd.f32 0.0, %v3072
        %v3074 = vpop.f32.mrb[0].mxu0
        %3075 = vmatprep.mubr.bf16.mxu0 0
        %3076 = vmatmul.mubr.bf16.gmra.mrb[0].mxu0 %v2966
        %v3077 = vpop.f32.mrb[0].mxu0
        %v3078 = vadd.f32 0.0, %v3077
        %v3079 = vpop.f32.mrb[0].mxu0
        %v3080 = vpop.f32.mrb[0].mxu0
        %v3081 = vadd.f32 0.0, %v3080
        %v3082 = vpop.f32.mrb[0].mxu0
        %3083 = vdwg.mxu0
        %v3084 = vadd.f32 %v2849, %v3054
        %v3085 = vadd.f32 %v2852, %v3057
        %v3086 = vadd.f32 %v2857, %v3062
        %v3087 = vadd.f32 %v2860, %v3065
        %v3088 = vadd.f32 %v2865, %v3070
        %v3089 = vadd.f32 %v2868, %v3073
        %v3090 = vadd.f32 %v2873, %v3078
        %v3091 = vadd.f32 %v2876, %v3081
        %v3092 = vld [vmem:[%s2397] sm:$0xf]
        %v3093 = vld [vmem:[%s2397 + $0x8] sm:$0xf]
        %v3094 = vld [vmem:[%s2397 + $0x10] sm:$0xf]
        %v3095 = vld [vmem:[%s2397 + $0x18] sm:$0xf]
        %v3096 = vld [vmem:[%s2397 + $0x20] sm:$0xf]
        %v3097 = vld [vmem:[%s2397 + $0x28] sm:$0xf]
        %v3098 = vld [vmem:[%s2397 + $0x30] sm:$0xf]
        %v3099 = vld [vmem:[%s2397 + $0x38] sm:$0xf]
        %s3100 = scalar_lea.vmem [#allocation3], 192
        %v3101 = vld [vmem:[%s3100] sm:$0xf]
        %v3102 = vld [vmem:[%s3100 + $0x4] sm:$0xf]
        %v3103 = vld [vmem:[%s3100 + $0x8] sm:$0xf]
        %v3104 = vld [vmem:[%s3100 + $0xc] sm:$0xf]
        %v3105 = vld [vmem:[%s3100 + $0x10] sm:$0xf]
        %v3106 = vld [vmem:[%s3100 + $0x14] sm:$0xf]
        %v3107 = vld [vmem:[%s3100 + $0x18] sm:$0xf]
        %v3108 = vld [vmem:[%s3100 + $0x1c] sm:$0xf]
        %v3109 = vld [vmem:[%s3100 + $0x20] sm:$0xf]
        %v3110 = vld [vmem:[%s3100 + $0x24] sm:$0xf]
        %v3111 = vld [vmem:[%s3100 + $0x28] sm:$0xf]
        %v3112 = vld [vmem:[%s3100 + $0x2c] sm:$0xf]
        %v3113 = vld [vmem:[%s3100 + $0x30] sm:$0xf]
        %v3114 = vld [vmem:[%s3100 + $0x34] sm:$0xf]
        %v3115 = vld [vmem:[%s3100 + $0x38] sm:$0xf]
        %v3116 = vld [vmem:[%s3100 + $0x3c] sm:$0xf]
        %v3125 = vunpack.c.l.b16 %v3092
        %v3126 = vunpack.c.l.b16 %v3093
        %v3127 = vunpack.c.l.b16 %v3094
        %v3128 = vunpack.c.l.b16 %v3095
        %v3129 = vunpack.c.l.b16 %v3096
        %v3130 = vunpack.c.l.b16 %v3097
        %v3131 = vunpack.c.l.b16 %v3098
        %v3132 = vunpack.c.l.b16 %v3099
        %v3133 = vpack.c.b16 %v3126, %v3125
        %v3134 = vpack.c.b16 %v3128, %v3127
        %v3135 = vpack.c.b16 %v3130, %v3129
        %v3136 = vpack.c.b16 %v3132, %v3131
        %v3157 = vunpack.c.l.b16 %v3101
        %v3158 = vunpack.c.l.b16 %v3102
        %v3159 = vunpack.c.l.b16 %v3103
        %v3160 = vunpack.c.l.b16 %v3104
        %v3161 = vunpack.c.l.b16 %v3105
        %v3162 = vunpack.c.l.b16 %v3106
        %v3163 = vunpack.c.l.b16 %v3107
        %v3164 = vunpack.c.l.b16 %v3108
        %v3165 = vunpack.c.l.b16 %v3109
        %v3166 = vunpack.c.l.b16 %v3110
        %v3167 = vunpack.c.l.b16 %v3111
        %v3168 = vunpack.c.l.b16 %v3112
        %v3169 = vunpack.c.l.b16 %v3113
        %v3170 = vunpack.c.l.b16 %v3114
        %v3171 = vunpack.c.l.b16 %v3115
        %v3172 = vunpack.c.l.b16 %v3116
        %v3173 = vpack.c.b16 %v3158, %v3157
        %v3174 = vpack.c.b16 %v3160, %v3159
        %v3175 = vpack.c.b16 %v3162, %v3161
        %v3176 = vpack.c.b16 %v3164, %v3163
        %v3177 = vpack.c.b16 %v3166, %v3165
        %v3178 = vpack.c.b16 %v3168, %v3167
        %v3179 = vpack.c.b16 %v3170, %v3169
        %v3180 = vpack.c.b16 %v3172, %v3171
        %3189 = vmatprep.subr.bf16.mxu0 0
        %3190 = vmatpush1.bf16.msra.mxu0 %v3173
        %3191 = vmatprep.subr.bf16.mxu0 0
        %3192 = vmatpush1.bf16.msra.mxu0 %v3174
        %3193 = vmatprep.subr.bf16.mxu0 0
        %3194 = vmatpush1.bf16.msra.mxu0 %v3175
        %3195 = vmatprep.subr.bf16.mxu0 0
        %3196 = vmatpush1.bf16.msra.mxu0 %v3176
        %3197 = vmatprep.subr.bf16.mxu0 0
        %3198 = vmatpush1.bf16.msra.mxu0 %v3177
        %3199 = vmatprep.subr.bf16.mxu0 0
        %3200 = vmatpush1.bf16.msra.mxu0 %v3178
        %3201 = vmatprep.subr.bf16.mxu0 0
        %3202 = vmatpush1.bf16.msra.mxu0 %v3179
        %3203 = vmatprep.subr.bf16.mxu0 0
        %3204 = vmatpush1.bf16.msra.mxu0 %v3180
        %3205 = vmatprep.subr.bf16.mxu0 0
        %3206 = vmatpush1.bf16.msra.mxu0 0
        %3207 = vmatprep.subr.bf16.mxu0 0
        %3208 = vmatpush1.bf16.msra.mxu0 0
        %3209 = vmatprep.subr.bf16.mxu0 0
        %3210 = vmatpush1.bf16.msra.mxu0 0
        %3211 = vmatprep.subr.bf16.mxu0 0
        %3212 = vmatpush1.bf16.msra.mxu0 0
        %3213 = vmatprep.subr.bf16.mxu0 0
        %3214 = vmatpush1.bf16.msra.mxu0 0
        %3215 = vmatprep.subr.bf16.mxu0 0
        %3216 = vmatpush1.bf16.msra.mxu0 0
        %3217 = vmatprep.subr.bf16.mxu0 0
        %3218 = vmatpush1.bf16.msra.mxu0 0
        %3219 = vmatprep.subr.bf16.mxu0 0
        %3220 = vmatpush1.bf16.msra.mxu0 0
        %3221 = vmatprep.mubr.bf16.mxu0 0
        %3222 = vmatmul.mubr.bf16.gmra.mrb[0].mxu0 %v3133
        %v3223 = vpop.f32.mrb[0].mxu0
        %v3224 = vadd.f32 0.0, %v3223
        %v3225 = vpop.f32.mrb[0].mxu0
        %v3226 = vpop.f32.mrb[0].mxu0
        %v3227 = vadd.f32 0.0, %v3226
        %v3228 = vpop.f32.mrb[0].mxu0
        %3229 = vmatprep.mubr.bf16.mxu0 0
        %3230 = vmatmul.mubr.bf16.gmra.mrb[0].mxu0 %v3134
        %v3231 = vpop.f32.mrb[0].mxu0
        %v3232 = vadd.f32 0.0, %v3231
        %v3233 = vpop.f32.mrb[0].mxu0
        %v3234 = vpop.f32.mrb[0].mxu0
        %v3235 = vadd.f32 0.0, %v3234
        %v3236 = vpop.f32.mrb[0].mxu0
        %3237 = vmatprep.mubr.bf16.mxu0 0
        %3238 = vmatmul.mubr.bf16.gmra.mrb[0].mxu0 %v3135
        %v3239 = vpop.f32.mrb[0].mxu0
        %v3240 = vadd.f32 0.0, %v3239
        %v3241 = vpop.f32.mrb[0].mxu0
        %v3242 = vpop.f32.mrb[0].mxu0
        %v3243 = vadd.f32 0.0, %v3242
        %v3244 = vpop.f32.mrb[0].mxu0
        %3245 = vmatprep.mubr.bf16.mxu0 0
        %3246 = vmatmul.mubr.bf16.gmra.mrb[0].mxu0 %v3136
        %v3247 = vpop.f32.mrb[0].mxu0
        %v3248 = vadd.f32 0.0, %v3247
        %v3249 = vpop.f32.mrb[0].mxu0
        %v3250 = vpop.f32.mrb[0].mxu0
        %v3251 = vadd.f32 0.0, %v3250
        %v3252 = vpop.f32.mrb[0].mxu0
        %3253 = vdwg.mxu0
        %v3254 = vadd.f32 %v3084, %v3224
        %v3255 = vadd.f32 %v3085, %v3227
        %v3256 = vadd.f32 %v3086, %v3232
        %v3257 = vadd.f32 %v3087, %v3235
        %v3258 = vadd.f32 %v3088, %v3240
        %v3259 = vadd.f32 %v3089, %v3243
        %v3260 = vadd.f32 %v3090, %v3248
        %v3261 = vadd.f32 %v3091, %v3251
        %v3262 = vld [vmem:[%s2397] sm:$0xf]
        %v3263 = vld [vmem:[%s2397 + $0x4] sm:$0x1]
        %v3264 = vld [vmem:[%s2397 + $0x8] sm:$0xf]
        %v3265 = vld [vmem:[%s2397 + $0xc] sm:$0x1]
        %v3266 = vld [vmem:[%s2397 + $0x10] sm:$0xf]
        %v3267 = vld [vmem:[%s2397 + $0x14] sm:$0x1]
        %v3268 = vld [vmem:[%s2397 + $0x18] sm:$0xf]
        %v3269 = vld [vmem:[%s2397 + $0x1c] sm:$0x1]
        %v3270 = vld [vmem:[%s2397 + $0x20] sm:$0xf]
        %v3271 = vld [vmem:[%s2397 + $0x24] sm:$0x1]
        %v3272 = vld [vmem:[%s2397 + $0x28] sm:$0xf]
        %v3273 = vld [vmem:[%s2397 + $0x2c] sm:$0x1]
        %v3274 = vld [vmem:[%s2397 + $0x30] sm:$0xf]
        %v3275 = vld [vmem:[%s2397 + $0x34] sm:$0x1]
        %v3276 = vld [vmem:[%s2397 + $0x38] sm:$0xf]
        %v3277 = vld [vmem:[%s2397 + $0x3c] sm:$0x1]
        %v3279 = vshrl.u32 %v3262, 16
        %v3281 = vrot.slane %v3279, 4
        %v3282 = vshll.u32 %v3262, 16
        %v3284 = vrot.slane %v3282, 5
        %v3285 = vor.u32 %v3281, %v3284
        %v3286 = vrot.slane %v3285, 4
        %v3288 = vshll.u32 %v3263, 16
        %v3290 = vrot.slane %v3288, 5
        %v3291 = vsel %vm715, %v3286, %v3290
        %v3293 = vshrl.u32 %v3264, 16
        %v3295 = vrot.slane %v3293, 4
        %v3296 = vshll.u32 %v3264, 16
        %v3298 = vrot.slane %v3296, 5
        %v3299 = vor.u32 %v3295, %v3298
        %v3300 = vrot.slane %v3299, 4
        %v3302 = vshll.u32 %v3265, 16
        %v3304 = vrot.slane %v3302, 5
        %v3305 = vsel %vm715, %v3300, %v3304
        %v3307 = vshrl.u32 %v3266, 16
        %v3309 = vrot.slane %v3307, 4
        %v3310 = vshll.u32 %v3266, 16
        %v3312 = vrot.slane %v3310, 5
        %v3313 = vor.u32 %v3309, %v3312
        %v3314 = vrot.slane %v3313, 4
        %v3316 = vshll.u32 %v3267, 16
        %v3318 = vrot.slane %v3316, 5
        %v3319 = vsel %vm715, %v3314, %v3318
        %v3321 = vshrl.u32 %v3268, 16
        %v3323 = vrot.slane %v3321, 4
        %v3324 = vshll.u32 %v3268, 16
        %v3326 = vrot.slane %v3324, 5
        %v3327 = vor.u32 %v3323, %v3326
        %v3328 = vrot.slane %v3327, 4
        %v3330 = vshll.u32 %v3269, 16
        %v3332 = vrot.slane %v3330, 5
        %v3333 = vsel %vm715, %v3328, %v3332
        %v3335 = vshrl.u32 %v3270, 16
        %v3337 = vrot.slane %v3335, 4
        %v3338 = vshll.u32 %v3270, 16
        %v3340 = vrot.slane %v3338, 5
        %v3341 = vor.u32 %v3337, %v3340
        %v3342 = vrot.slane %v3341, 4
        %v3344 = vshll.u32 %v3271, 16
        %v3346 = vrot.slane %v3344, 5
        %v3347 = vsel %vm715, %v3342, %v3346
        %v3349 = vshrl.u32 %v3272, 16
        %v3351 = vrot.slane %v3349, 4
        %v3352 = vshll.u32 %v3272, 16
        %v3354 = vrot.slane %v3352, 5
        %v3355 = vor.u32 %v3351, %v3354
        %v3356 = vrot.slane %v3355, 4
        %v3358 = vshll.u32 %v3273, 16
        %v3360 = vrot.slane %v3358, 5
        %v3361 = vsel %vm715, %v3356, %v3360
        %v3363 = vshrl.u32 %v3274, 16
        %v3365 = vrot.slane %v3363, 4
        %v3366 = vshll.u32 %v3274, 16
        %v3368 = vrot.slane %v3366, 5
        %v3369 = vor.u32 %v3365, %v3368
        %v3370 = vrot.slane %v3369, 4
        %v3372 = vshll.u32 %v3275, 16
        %v3374 = vrot.slane %v3372, 5
        %v3375 = vsel %vm715, %v3370, %v3374
        %v3377 = vshrl.u32 %v3276, 16
        %v3379 = vrot.slane %v3377, 4
        %v3380 = vshll.u32 %v3276, 16
        %v3382 = vrot.slane %v3380, 5
        %v3383 = vor.u32 %v3379, %v3382
        %v3384 = vrot.slane %v3383, 4
        %v3386 = vshll.u32 %v3277, 16
        %v3388 = vrot.slane %v3386, 5
        %v3389 = vsel %vm715, %v3384, %v3388
        %s3390 = scalar_lea.vmem [#allocation3], 256
        %v3391 = vld [vmem:[%s3390] sm:$0xf]
        %v3392 = vld [vmem:[%s3390 + $0x4] sm:$0xf]
        %v3393 = vld [vmem:[%s3390 + $0x8] sm:$0xf]
        %v3394 = vld [vmem:[%s3390 + $0xc] sm:$0xf]
        %v3395 = vld [vmem:[%s3390 + $0x10] sm:$0xf]
        %v3396 = vld [vmem:[%s3390 + $0x14] sm:$0xf]
        %v3397 = vld [vmem:[%s3390 + $0x18] sm:$0xf]
        %v3398 = vld [vmem:[%s3390 + $0x1c] sm:$0xf]
        %v3399 = vld [vmem:[%s3390 + $0x20] sm:$0xf]
        %v3400 = vld [vmem:[%s3390 + $0x24] sm:$0xf]
        %v3401 = vld [vmem:[%s3390 + $0x28] sm:$0xf]
        %v3402 = vld [vmem:[%s3390 + $0x2c] sm:$0xf]
        %v3403 = vld [vmem:[%s3390 + $0x30] sm:$0xf]
        %v3404 = vld [vmem:[%s3390 + $0x34] sm:$0xf]
        %v3405 = vld [vmem:[%s3390 + $0x38] sm:$0xf]
        %v3406 = vld [vmem:[%s3390 + $0x3c] sm:$0xf]
        %v3407 = vunpack.c.l.b16 %v3291
        %v3408 = vunpack.c.l.b16 %v3305
        %v3409 = vunpack.c.l.b16 %v3319
        %v3410 = vunpack.c.l.b16 %v3333
        %v3411 = vunpack.c.l.b16 %v3347
        %v3412 = vunpack.c.l.b16 %v3361
        %v3413 = vunpack.c.l.b16 %v3375
        %v3414 = vunpack.c.l.b16 %v3389
        %v3415 = vpack.c.b16 %v3408, %v3407
        %v3416 = vpack.c.b16 %v3410, %v3409
        %v3417 = vpack.c.b16 %v3412, %v3411
        %v3418 = vpack.c.b16 %v3414, %v3413
        %v3439 = vunpack.c.l.b16 %v3391
        %v3440 = vunpack.c.l.b16 %v3392
        %v3441 = vunpack.c.l.b16 %v3393
        %v3442 = vunpack.c.l.b16 %v3394
        %v3443 = vunpack.c.l.b16 %v3395
        %v3444 = vunpack.c.l.b16 %v3396
        %v3445 = vunpack.c.l.b16 %v3397
        %v3446 = vunpack.c.l.b16 %v3398
        %v3447 = vunpack.c.l.b16 %v3399
        %v3448 = vunpack.c.l.b16 %v3400
        %v3449 = vunpack.c.l.b16 %v3401
        %v3450 = vunpack.c.l.b16 %v3402
        %v3451 = vunpack.c.l.b16 %v3403
        %v3452 = vunpack.c.l.b16 %v3404
        %v3453 = vunpack.c.l.b16 %v3405
        %v3454 = vunpack.c.l.b16 %v3406
        %v3455 = vpack.c.b16 %v3440, %v3439
        %v3456 = vpack.c.b16 %v3442, %v3441
        %v3457 = vpack.c.b16 %v3444, %v3443
        %v3458 = vpack.c.b16 %v3446, %v3445
        %v3459 = vpack.c.b16 %v3448, %v3447
        %v3460 = vpack.c.b16 %v3450, %v3449
        %v3461 = vpack.c.b16 %v3452, %v3451
        %v3462 = vpack.c.b16 %v3454, %v3453
        %3471 = vmatprep.subr.bf16.mxu0 0
        %3472 = vmatpush1.bf16.msra.mxu0 %v3455
        %3473 = vmatprep.subr.bf16.mxu0 0
        %3474 = vmatpush1.bf16.msra.mxu0 %v3456
        %3475 = vmatprep.subr.bf16.mxu0 0
        %3476 = vmatpush1.bf16.msra.mxu0 %v3457
        %3477 = vmatprep.subr.bf16.mxu0 0
        %3478 = vmatpush1.bf16.msra.mxu0 %v3458
        %3479 = vmatprep.subr.bf16.mxu0 0
        %3480 = vmatpush1.bf16.msra.mxu0 %v3459
        %3481 = vmatprep.subr.bf16.mxu0 0
        %3482 = vmatpush1.bf16.msra.mxu0 %v3460
        %3483 = vmatprep.subr.bf16.mxu0 0
        %3484 = vmatpush1.bf16.msra.mxu0 %v3461
        %3485 = vmatprep.subr.bf16.mxu0 0
        %3486 = vmatpush1.bf16.msra.mxu0 %v3462
        %3487 = vmatprep.subr.bf16.mxu0 0
        %3488 = vmatpush1.bf16.msra.mxu0 0
        %3489 = vmatprep.subr.bf16.mxu0 0
        %3490 = vmatpush1.bf16.msra.mxu0 0
        %3491 = vmatprep.subr.bf16.mxu0 0
        %3492 = vmatpush1.bf16.msra.mxu0 0
        %3493 = vmatprep.subr.bf16.mxu0 0
        %3494 = vmatpush1.bf16.msra.mxu0 0
        %3495 = vmatprep.subr.bf16.mxu0 0
        %3496 = vmatpush1.bf16.msra.mxu0 0
        %3497 = vmatprep.subr.bf16.mxu0 0
        %3498 = vmatpush1.bf16.msra.mxu0 0
        %3499 = vmatprep.subr.bf16.mxu0 0
        %3500 = vmatpush1.bf16.msra.mxu0 0
        %3501 = vmatprep.subr.bf16.mxu0 0
        %3502 = vmatpush1.bf16.msra.mxu0 0
        %3503 = vmatprep.mubr.bf16.mxu0 0
        %3504 = vmatmul.mubr.bf16.gmra.mrb[0].mxu0 %v3415
        %v3505 = vpop.f32.mrb[0].mxu0
        %v3506 = vadd.f32 0.0, %v3505
        %v3507 = vpop.f32.mrb[0].mxu0
        %v3508 = vpop.f32.mrb[0].mxu0
        %v3509 = vadd.f32 0.0, %v3508
        %v3510 = vpop.f32.mrb[0].mxu0
        %3511 = vmatprep.mubr.bf16.mxu0 0
        %3512 = vmatmul.mubr.bf16.gmra.mrb[0].mxu0 %v3416
        %v3513 = vpop.f32.mrb[0].mxu0
        %v3514 = vadd.f32 0.0, %v3513
        %v3515 = vpop.f32.mrb[0].mxu0
        %v3516 = vpop.f32.mrb[0].mxu0
        %v3517 = vadd.f32 0.0, %v3516
        %v3518 = vpop.f32.mrb[0].mxu0
        %3519 = vmatprep.mubr.bf16.mxu0 0
        %3520 = vmatmul.mubr.bf16.gmra.mrb[0].mxu0 %v3417
        %v3521 = vpop.f32.mrb[0].mxu0
        %v3522 = vadd.f32 0.0, %v3521
        %v3523 = vpop.f32.mrb[0].mxu0
        %v3524 = vpop.f32.mrb[0].mxu0
        %v3525 = vadd.f32 0.0, %v3524
        %v3526 = vpop.f32.mrb[0].mxu0
        %3527 = vmatprep.mubr.bf16.mxu0 0
        %3528 = vmatmul.mubr.bf16.gmra.mrb[0].mxu0 %v3418
        %v3529 = vpop.f32.mrb[0].mxu0
        %v3530 = vadd.f32 0.0, %v3529
        %v3531 = vpop.f32.mrb[0].mxu0
        %v3532 = vpop.f32.mrb[0].mxu0
        %v3533 = vadd.f32 0.0, %v3532
        %v3534 = vpop.f32.mrb[0].mxu0
        %3535 = vdwg.mxu0
        %v3536 = vadd.f32 %v3254, %v3506
        %v3537 = vadd.f32 %v3255, %v3509
        %v3538 = vadd.f32 %v3256, %v3514
        %v3539 = vadd.f32 %v3257, %v3517
        %v3540 = vadd.f32 %v3258, %v3522
        %v3541 = vadd.f32 %v3259, %v3525
        %v3542 = vadd.f32 %v3260, %v3530
        %v3543 = vadd.f32 %v3261, %v3533
        %v3544 = vld [vmem:[%s2397] sm:$0xe]
        %v3545 = vld [vmem:[%s2397 + $0x8] sm:$0xe]
        %v3546 = vld [vmem:[%s2397 + $0x10] sm:$0xe]
        %v3547 = vld [vmem:[%s2397 + $0x18] sm:$0xe]
        %v3548 = vld [vmem:[%s2397 + $0x20] sm:$0xe]
        %v3549 = vld [vmem:[%s2397 + $0x28] sm:$0xe]
        %v3550 = vld [vmem:[%s2397 + $0x30] sm:$0xe]
        %v3551 = vld [vmem:[%s2397 + $0x38] sm:$0xe]
        %v3568 = vrot.slane %v3544, 5
        %v3569 = vrot.slane %v3568, 4
        %v3570 = vrot.slane %v3263, 5
        %v3571 = vsel %vm2905, %v3569, %v3570
        %v3572 = vrot.slane %v3545, 5
        %v3573 = vrot.slane %v3572, 4
        %v3574 = vrot.slane %v3265, 5
        %v3575 = vsel %vm2905, %v3573, %v3574
        %v3576 = vrot.slane %v3546, 5
        %v3577 = vrot.slane %v3576, 4
        %v3578 = vrot.slane %v3267, 5
        %v3579 = vsel %vm2905, %v3577, %v3578
        %v3580 = vrot.slane %v3547, 5
        %v3581 = vrot.slane %v3580, 4
        %v3582 = vrot.slane %v3269, 5
        %v3583 = vsel %vm2905, %v3581, %v3582
        %v3584 = vrot.slane %v3548, 5
        %v3585 = vrot.slane %v3584, 4
        %v3586 = vrot.slane %v3271, 5
        %v3587 = vsel %vm2905, %v3585, %v3586
        %v3588 = vrot.slane %v3549, 5
        %v3589 = vrot.slane %v3588, 4
        %v3590 = vrot.slane %v3273, 5
        %v3591 = vsel %vm2905, %v3589, %v3590
        %v3592 = vrot.slane %v3550, 5
        %v3593 = vrot.slane %v3592, 4
        %v3594 = vrot.slane %v3275, 5
        %v3595 = vsel %vm2905, %v3593, %v3594
        %v3596 = vrot.slane %v3551, 5
        %v3597 = vrot.slane %v3596, 4
        %v3598 = vrot.slane %v3277, 5
        %v3599 = vsel %vm2905, %v3597, %v3598
        %s3600 = scalar_lea.vmem [#allocation3], 320
        %v3601 = vld [vmem:[%s3600] sm:$0xf]
        %v3602 = vld [vmem:[%s3600 + $0x4] sm:$0xf]
        %v3603 = vld [vmem:[%s3600 + $0x8] sm:$0xf]
        %v3604 = vld [vmem:[%s3600 + $0xc] sm:$0xf]
        %v3605 = vld [vmem:[%s3600 + $0x10] sm:$0xf]
        %v3606 = vld [vmem:[%s3600 + $0x14] sm:$0xf]
        %v3607 = vld [vmem:[%s3600 + $0x18] sm:$0xf]
        %v3608 = vld [vmem:[%s3600 + $0x1c] sm:$0xf]
        %v3609 = vld [vmem:[%s3600 + $0x20] sm:$0xf]
        %v3610 = vld [vmem:[%s3600 + $0x24] sm:$0xf]
        %v3611 = vld [vmem:[%s3600 + $0x28] sm:$0xf]
        %v3612 = vld [vmem:[%s3600 + $0x2c] sm:$0xf]
        %v3613 = vld [vmem:[%s3600 + $0x30] sm:$0xf]
        %v3614 = vld [vmem:[%s3600 + $0x34] sm:$0xf]
        %v3615 = vld [vmem:[%s3600 + $0x38] sm:$0xf]
        %v3616 = vld [vmem:[%s3600 + $0x3c] sm:$0xf]
        %v3617 = vunpack.c.l.b16 %v3571
        %v3618 = vunpack.c.l.b16 %v3575
        %v3619 = vunpack.c.l.b16 %v3579
        %v3620 = vunpack.c.l.b16 %v3583
        %v3621 = vunpack.c.l.b16 %v3587
        %v3622 = vunpack.c.l.b16 %v3591
        %v3623 = vunpack.c.l.b16 %v3595
        %v3624 = vunpack.c.l.b16 %v3599
        %v3625 = vpack.c.b16 %v3618, %v3617
        %v3626 = vpack.c.b16 %v3620, %v3619
        %v3627 = vpack.c.b16 %v3622, %v3621
        %v3628 = vpack.c.b16 %v3624, %v3623
        %v3649 = vunpack.c.l.b16 %v3601
        %v3650 = vunpack.c.l.b16 %v3602
        %v3651 = vunpack.c.l.b16 %v3603
        %v3652 = vunpack.c.l.b16 %v3604
        %v3653 = vunpack.c.l.b16 %v3605
        %v3654 = vunpack.c.l.b16 %v3606
        %v3655 = vunpack.c.l.b16 %v3607
        %v3656 = vunpack.c.l.b16 %v3608
        %v3657 = vunpack.c.l.b16 %v3609
        %v3658 = vunpack.c.l.b16 %v3610
        %v3659 = vunpack.c.l.b16 %v3611
        %v3660 = vunpack.c.l.b16 %v3612
        %v3661 = vunpack.c.l.b16 %v3613
        %v3662 = vunpack.c.l.b16 %v3614
        %v3663 = vunpack.c.l.b16 %v3615
        %v3664 = vunpack.c.l.b16 %v3616
        %v3665 = vpack.c.b16 %v3650, %v3649
        %v3666 = vpack.c.b16 %v3652, %v3651
        %v3667 = vpack.c.b16 %v3654, %v3653
        %v3668 = vpack.c.b16 %v3656, %v3655
        %v3669 = vpack.c.b16 %v3658, %v3657
        %v3670 = vpack.c.b16 %v3660, %v3659
        %v3671 = vpack.c.b16 %v3662, %v3661
        %v3672 = vpack.c.b16 %v3664, %v3663
        %3681 = vmatprep.subr.bf16.mxu0 0
        %3682 = vmatpush1.bf16.msra.mxu0 %v3665
        %3683 = vmatprep.subr.bf16.mxu0 0
        %3684 = vmatpush1.bf16.msra.mxu0 %v3666
        %3685 = vmatprep.subr.bf16.mxu0 0
        %3686 = vmatpush1.bf16.msra.mxu0 %v3667
        %3687 = vmatprep.subr.bf16.mxu0 0
        %3688 = vmatpush1.bf16.msra.mxu0 %v3668
        %3689 = vmatprep.subr.bf16.mxu0 0
        %3690 = vmatpush1.bf16.msra.mxu0 %v3669
        %3691 = vmatprep.subr.bf16.mxu0 0
        %3692 = vmatpush1.bf16.msra.mxu0 %v3670
        %3693 = vmatprep.subr.bf16.mxu0 0
        %3694 = vmatpush1.bf16.msra.mxu0 %v3671
        %3695 = vmatprep.subr.bf16.mxu0 0
        %3696 = vmatpush1.bf16.msra.mxu0 %v3672
        %3697 = vmatprep.subr.bf16.mxu0 0
        %3698 = vmatpush1.bf16.msra.mxu0 0
        %3699 = vmatprep.subr.bf16.mxu0 0
        %3700 = vmatpush1.bf16.msra.mxu0 0
        %3701 = vmatprep.subr.bf16.mxu0 0
        %3702 = vmatpush1.bf16.msra.mxu0 0
        %3703 = vmatprep.subr.bf16.mxu0 0
        %3704 = vmatpush1.bf16.msra.mxu0 0
        %3705 = vmatprep.subr.bf16.mxu0 0
        %3706 = vmatpush1.bf16.msra.mxu0 0
        %3707 = vmatprep.subr.bf16.mxu0 0
        %3708 = vmatpush1.bf16.msra.mxu0 0
        %3709 = vmatprep.subr.bf16.mxu0 0
        %3710 = vmatpush1.bf16.msra.mxu0 0
        %3711 = vmatprep.subr.bf16.mxu0 0
        %3712 = vmatpush1.bf16.msra.mxu0 0
        %3713 = vmatprep.mubr.bf16.mxu0 0
        %3714 = vmatmul.mubr.bf16.gmra.mrb[0].mxu0 %v3625
        %v3715 = vpop.f32.mrb[0].mxu0
        %v3716 = vadd.f32 0.0, %v3715
        %v3717 = vpop.f32.mrb[0].mxu0
        %v3718 = vpop.f32.mrb[0].mxu0
        %v3719 = vadd.f32 0.0, %v3718
        %v3720 = vpop.f32.mrb[0].mxu0
        %3721 = vmatprep.mubr.bf16.mxu0 0
        %3722 = vmatmul.mubr.bf16.gmra.mrb[0].mxu0 %v3626
        %v3723 = vpop.f32.mrb[0].mxu0
        %v3724 = vadd.f32 0.0, %v3723
        %v3725 = vpop.f32.mrb[0].mxu0
        %v3726 = vpop.f32.mrb[0].mxu0
        %v3727 = vadd.f32 0.0, %v3726
        %v3728 = vpop.f32.mrb[0].mxu0
        %3729 = vmatprep.mubr.bf16.mxu0 0
        %3730 = vmatmul.mubr.bf16.gmra.mrb[0].mxu0 %v3627
        %v3731 = vpop.f32.mrb[0].mxu0
        %v3732 = vadd.f32 0.0, %v3731
        %v3733 = vpop.f32.mrb[0].mxu0
        %v3734 = vpop.f32.mrb[0].mxu0
        %v3735 = vadd.f32 0.0, %v3734
        %v3736 = vpop.f32.mrb[0].mxu0
        %3737 = vmatprep.mubr.bf16.mxu0 0
        %3738 = vmatmul.mubr.bf16.gmra.mrb[0].mxu0 %v3628
        %v3739 = vpop.f32.mrb[0].mxu0
        %v3740 = vadd.f32 0.0, %v3739
        %v3741 = vpop.f32.mrb[0].mxu0
        %v3742 = vpop.f32.mrb[0].mxu0
        %v3743 = vadd.f32 0.0, %v3742
        %v3744 = vpop.f32.mrb[0].mxu0
        %3745 = vdwg.mxu0
        %v3746 = vadd.f32 %v3536, %v3716
        %v3747 = vadd.f32 %v3537, %v3719
        %v3748 = vadd.f32 %v3538, %v3724
        %v3749 = vadd.f32 %v3539, %v3727
        %v3750 = vadd.f32 %v3540, %v3732
        %v3751 = vadd.f32 %v3541, %v3735
        %v3752 = vadd.f32 %v3542, %v3740
        %v3753 = vadd.f32 %v3543, %v3743
        %s3754 = scalar_lea.vmem [#allocation2], 16
        %v3755 = vld [vmem:[%s3754] sm:$0xf]
        %v3756 = vld [vmem:[%s3754 + $0x8] sm:$0xf]
        %v3757 = vld [vmem:[%s3754 + $0x10] sm:$0xf]
        %v3758 = vld [vmem:[%s3754 + $0x18] sm:$0xf]
        %v3759 = vld [vmem:[%s3754 + $0x20] sm:$0xf]
        %v3760 = vld [vmem:[%s3754 + $0x28] sm:$0xf]
        %v3761 = vld [vmem:[%s3754 + $0x30] sm:$0xf]
        %v3762 = vld [vmem:[%s3754 + $0x38] sm:$0xf]
        %s3763 = scalar_lea.vmem [#allocation3], 384
        %v3764 = vld [vmem:[%s3763] sm:$0xf]
        %v3765 = vld [vmem:[%s3763 + $0x4] sm:$0xf]
        %v3766 = vld [vmem:[%s3763 + $0x8] sm:$0xf]
        %v3767 = vld [vmem:[%s3763 + $0xc] sm:$0xf]
        %v3768 = vld [vmem:[%s3763 + $0x10] sm:$0xf]
        %v3769 = vld [vmem:[%s3763 + $0x14] sm:$0xf]
        %v3770 = vld [vmem:[%s3763 + $0x18] sm:$0xf]
        %v3771 = vld [vmem:[%s3763 + $0x1c] sm:$0xf]
        %v3772 = vld [vmem:[%s3763 + $0x20] sm:$0xf]
        %v3773 = vld [vmem:[%s3763 + $0x24] sm:$0xf]
        %v3774 = vld [vmem:[%s3763 + $0x28] sm:$0xf]
        %v3775 = vld [vmem:[%s3763 + $0x2c] sm:$0xf]
        %v3776 = vld [vmem:[%s3763 + $0x30] sm:$0xf]
        %v3777 = vld [vmem:[%s3763 + $0x34] sm:$0xf]
        %v3778 = vld [vmem:[%s3763 + $0x38] sm:$0xf]
        %v3779 = vld [vmem:[%s3763 + $0x3c] sm:$0xf]
        %v3788 = vunpack.c.l.b16 %v3755
        %v3789 = vunpack.c.l.b16 %v3756
        %v3790 = vunpack.c.l.b16 %v3757
        %v3791 = vunpack.c.l.b16 %v3758
        %v3792 = vunpack.c.l.b16 %v3759
        %v3793 = vunpack.c.l.b16 %v3760
        %v3794 = vunpack.c.l.b16 %v3761
        %v3795 = vunpack.c.l.b16 %v3762
        %v3796 = vpack.c.b16 %v3789, %v3788
        %v3797 = vpack.c.b16 %v3791, %v3790
        %v3798 = vpack.c.b16 %v3793, %v3792
        %v3799 = vpack.c.b16 %v3795, %v3794
        %v3820 = vunpack.c.l.b16 %v3764
        %v3821 = vunpack.c.l.b16 %v3765
        %v3822 = vunpack.c.l.b16 %v3766
        %v3823 = vunpack.c.l.b16 %v3767
        %v3824 = vunpack.c.l.b16 %v3768
        %v3825 = vunpack.c.l.b16 %v3769
        %v3826 = vunpack.c.l.b16 %v3770
        %v3827 = vunpack.c.l.b16 %v3771
        %v3828 = vunpack.c.l.b16 %v3772
        %v3829 = vunpack.c.l.b16 %v3773
        %v3830 = vunpack.c.l.b16 %v3774
        %v3831 = vunpack.c.l.b16 %v3775
        %v3832 = vunpack.c.l.b16 %v3776
        %v3833 = vunpack.c.l.b16 %v3777
        %v3834 = vunpack.c.l.b16 %v3778
        %v3835 = vunpack.c.l.b16 %v3779
        %v3836 = vpack.c.b16 %v3821, %v3820
        %v3837 = vpack.c.b16 %v3823, %v3822
        %v3838 = vpack.c.b16 %v3825, %v3824
        %v3839 = vpack.c.b16 %v3827, %v3826
        %v3840 = vpack.c.b16 %v3829, %v3828
        %v3841 = vpack.c.b16 %v3831, %v3830
        %v3842 = vpack.c.b16 %v3833, %v3832
        %v3843 = vpack.c.b16 %v3835, %v3834
        %3852 = vmatprep.subr.bf16.mxu0 0
        %3853 = vmatpush1.bf16.msra.mxu0 %v3836
        %3854 = vmatprep.subr.bf16.mxu0 0
        %3855 = vmatpush1.bf16.msra.mxu0 %v3837
        %3856 = vmatprep.subr.bf16.mxu0 0
        %3857 = vmatpush1.bf16.msra.mxu0 %v3838
        %3858 = vmatprep.subr.bf16.mxu0 0
        %3859 = vmatpush1.bf16.msra.mxu0 %v3839
        %3860 = vmatprep.subr.bf16.mxu0 0
        %3861 = vmatpush1.bf16.msra.mxu0 %v3840
        %3862 = vmatprep.subr.bf16.mxu0 0
        %3863 = vmatpush1.bf16.msra.mxu0 %v3841
        %3864 = vmatprep.subr.bf16.mxu0 0
        %3865 = vmatpush1.bf16.msra.mxu0 %v3842
        %3866 = vmatprep.subr.bf16.mxu0 0
        %3867 = vmatpush1.bf16.msra.mxu0 %v3843
        %3868 = vmatprep.subr.bf16.mxu0 0
        %3869 = vmatpush1.bf16.msra.mxu0 0
        %3870 = vmatprep.subr.bf16.mxu0 0
        %3871 = vmatpush1.bf16.msra.mxu0 0
        %3872 = vmatprep.subr.bf16.mxu0 0
        %3873 = vmatpush1.bf16.msra.mxu0 0
        %3874 = vmatprep.subr.bf16.mxu0 0
        %3875 = vmatpush1.bf16.msra.mxu0 0
        %3876 = vmatprep.subr.bf16.mxu0 0
        %3877 = vmatpush1.bf16.msra.mxu0 0
        %3878 = vmatprep.subr.bf16.mxu0 0
        %3879 = vmatpush1.bf16.msra.mxu0 0
        %3880 = vmatprep.subr.bf16.mxu0 0
        %3881 = vmatpush1.bf16.msra.mxu0 0
        %3882 = vmatprep.subr.bf16.mxu0 0
        %3883 = vmatpush1.bf16.msra.mxu0 0
        %3884 = vmatprep.mubr.bf16.mxu0 0
        %3885 = vmatmul.mubr.bf16.gmra.mrb[0].mxu0 %v3796
        %v3886 = vpop.f32.mrb[0].mxu0
        %v3887 = vadd.f32 0.0, %v3886
        %v3888 = vpop.f32.mrb[0].mxu0
        %v3889 = vpop.f32.mrb[0].mxu0
        %v3890 = vadd.f32 0.0, %v3889
        %v3891 = vpop.f32.mrb[0].mxu0
        %3892 = vmatprep.mubr.bf16.mxu0 0
        %3893 = vmatmul.mubr.bf16.gmra.mrb[0].mxu0 %v3797
        %v3894 = vpop.f32.mrb[0].mxu0
        %v3895 = vadd.f32 0.0, %v3894
        %v3896 = vpop.f32.mrb[0].mxu0
        %v3897 = vpop.f32.mrb[0].mxu0
        %v3898 = vadd.f32 0.0, %v3897
        %v3899 = vpop.f32.mrb[0].mxu0
        %3900 = vmatprep.mubr.bf16.mxu0 0
        %3901 = vmatmul.mubr.bf16.gmra.mrb[0].mxu0 %v3798
        %v3902 = vpop.f32.mrb[0].mxu0
        %v3903 = vadd.f32 0.0, %v3902
        %v3904 = vpop.f32.mrb[0].mxu0
        %v3905 = vpop.f32.mrb[0].mxu0
        %v3906 = vadd.f32 0.0, %v3905
        %v3907 = vpop.f32.mrb[0].mxu0
        %3908 = vmatprep.mubr.bf16.mxu0 0
        %3909 = vmatmul.mubr.bf16.gmra.mrb[0].mxu0 %v3799
        %v3910 = vpop.f32.mrb[0].mxu0
        %v3911 = vadd.f32 0.0, %v3910
        %v3912 = vpop.f32.mrb[0].mxu0
        %v3913 = vpop.f32.mrb[0].mxu0
        %v3914 = vadd.f32 0.0, %v3913
        %v3915 = vpop.f32.mrb[0].mxu0
        %3916 = vdwg.mxu0
        %v3917 = vadd.f32 %v3746, %v3887
        %v3918 = vadd.f32 %v3747, %v3890
        %v3919 = vadd.f32 %v3748, %v3895
        %v3920 = vadd.f32 %v3749, %v3898
        %v3921 = vadd.f32 %v3750, %v3903
        %v3922 = vadd.f32 %v3751, %v3906
        %v3923 = vadd.f32 %v3752, %v3911
        %v3924 = vadd.f32 %v3753, %v3914
        %v3925 = vld [vmem:[%s3754] sm:$0xf]
        %v3926 = vld [vmem:[%s3754 + $0x4] sm:$0x1]
        %v3927 = vld [vmem:[%s3754 + $0x8] sm:$0xf]
        %v3928 = vld [vmem:[%s3754 + $0xc] sm:$0x1]
        %v3929 = vld [vmem:[%s3754 + $0x10] sm:$0xf]
        %v3930 = vld [vmem:[%s3754 + $0x14] sm:$0x1]
        %v3931 = vld [vmem:[%s3754 + $0x18] sm:$0xf]
        %v3932 = vld [vmem:[%s3754 + $0x1c] sm:$0x1]
        %v3933 = vld [vmem:[%s3754 + $0x20] sm:$0xf]
        %v3934 = vld [vmem:[%s3754 + $0x24] sm:$0x1]
        %v3935 = vld [vmem:[%s3754 + $0x28] sm:$0xf]
        %v3936 = vld [vmem:[%s3754 + $0x2c] sm:$0x1]
        %v3937 = vld [vmem:[%s3754 + $0x30] sm:$0xf]
        %v3938 = vld [vmem:[%s3754 + $0x34] sm:$0x1]
        %v3939 = vld [vmem:[%s3754 + $0x38] sm:$0xf]
        %v3940 = vld [vmem:[%s3754 + $0x3c] sm:$0x1]
        %v3942 = vshrl.u32 %v3925, 16
        %v3944 = vrot.slane %v3942, 4
        %v3945 = vshll.u32 %v3925, 16
        %v3947 = vrot.slane %v3945, 5
        %v3948 = vor.u32 %v3944, %v3947
        %v3949 = vrot.slane %v3948, 4
        %v3951 = vshll.u32 %v3926, 16
        %v3953 = vrot.slane %v3951, 5
        %v3954 = vsel %vm715, %v3949, %v3953
        %v3956 = vshrl.u32 %v3927, 16
        %v3958 = vrot.slane %v3956, 4
        %v3959 = vshll.u32 %v3927, 16
        %v3961 = vrot.slane %v3959, 5
        %v3962 = vor.u32 %v3958, %v3961
        %v3963 = vrot.slane %v3962, 4
        %v3965 = vshll.u32 %v3928, 16
        %v3967 = vrot.slane %v3965, 5
        %v3968 = vsel %vm715, %v3963, %v3967
        %v3970 = vshrl.u32 %v3929, 16
        %v3972 = vrot.slane %v3970, 4
        %v3973 = vshll.u32 %v3929, 16
        %v3975 = vrot.slane %v3973, 5
        %v3976 = vor.u32 %v3972, %v3975
        %v3977 = vrot.slane %v3976, 4
        %v3979 = vshll.u32 %v3930, 16
        %v3981 = vrot.slane %v3979, 5
        %v3982 = vsel %vm715, %v3977, %v3981
        %v3984 = vshrl.u32 %v3931, 16
        %v3986 = vrot.slane %v3984, 4
        %v3987 = vshll.u32 %v3931, 16
        %v3989 = vrot.slane %v3987, 5
        %v3990 = vor.u32 %v3986, %v3989
        %v3991 = vrot.slane %v3990, 4
        %v3993 = vshll.u32 %v3932, 16
        %v3995 = vrot.slane %v3993, 5
        %v3996 = vsel %vm715, %v3991, %v3995
        %v3998 = vshrl.u32 %v3933, 16
        %v4000 = vrot.slane %v3998, 4
        %v4001 = vshll.u32 %v3933, 16
        %v4003 = vrot.slane %v4001, 5
        %v4004 = vor.u32 %v4000, %v4003
        %v4005 = vrot.slane %v4004, 4
        %v4007 = vshll.u32 %v3934, 16
        %v4009 = vrot.slane %v4007, 5
        %v4010 = vsel %vm715, %v4005, %v4009
        %v4012 = vshrl.u32 %v3935, 16
        %v4014 = vrot.slane %v4012, 4
        %v4015 = vshll.u32 %v3935, 16
        %v4017 = vrot.slane %v4015, 5
        %v4018 = vor.u32 %v4014, %v4017
        %v4019 = vrot.slane %v4018, 4
        %v4021 = vshll.u32 %v3936, 16
        %v4023 = vrot.slane %v4021, 5
        %v4024 = vsel %vm715, %v4019, %v4023
        %v4026 = vshrl.u32 %v3937, 16
        %v4028 = vrot.slane %v4026, 4
        %v4029 = vshll.u32 %v3937, 16
        %v4031 = vrot.slane %v4029, 5
        %v4032 = vor.u32 %v4028, %v4031
        %v4033 = vrot.slane %v4032, 4
        %v4035 = vshll.u32 %v3938, 16
        %v4037 = vrot.slane %v4035, 5
        %v4038 = vsel %vm715, %v4033, %v4037
        %v4040 = vshrl.u32 %v3939, 16
        %v4042 = vrot.slane %v4040, 4
        %v4043 = vshll.u32 %v3939, 16
        %v4045 = vrot.slane %v4043, 5
        %v4046 = vor.u32 %v4042, %v4045
        %v4047 = vrot.slane %v4046, 4
        %v4049 = vshll.u32 %v3940, 16
        %v4051 = vrot.slane %v4049, 5
        %v4052 = vsel %vm715, %v4047, %v4051
        %s4053 = scalar_lea.vmem [#allocation3], 448
        %v4054 = vld [vmem:[%s4053] sm:$0xf]
        %v4055 = vld [vmem:[%s4053 + $0x4] sm:$0xf]
        %v4056 = vld [vmem:[%s4053 + $0x8] sm:$0xf]
        %v4057 = vld [vmem:[%s4053 + $0xc] sm:$0xf]
        %v4058 = vld [vmem:[%s4053 + $0x10] sm:$0xf]
        %v4059 = vld [vmem:[%s4053 + $0x14] sm:$0xf]
        %v4060 = vld [vmem:[%s4053 + $0x18] sm:$0xf]
        %v4061 = vld [vmem:[%s4053 + $0x1c] sm:$0xf]
        %v4062 = vld [vmem:[%s4053 + $0x20] sm:$0xf]
        %v4063 = vld [vmem:[%s4053 + $0x24] sm:$0xf]
        %v4064 = vld [vmem:[%s4053 + $0x28] sm:$0xf]
        %v4065 = vld [vmem:[%s4053 + $0x2c] sm:$0xf]
        %v4066 = vld [vmem:[%s4053 + $0x30] sm:$0xf]
        %v4067 = vld [vmem:[%s4053 + $0x34] sm:$0xf]
        %v4068 = vld [vmem:[%s4053 + $0x38] sm:$0xf]
        %v4069 = vld [vmem:[%s4053 + $0x3c] sm:$0xf]
        %v4070 = vunpack.c.l.b16 %v3954
        %v4071 = vunpack.c.l.b16 %v3968
        %v4072 = vunpack.c.l.b16 %v3982
        %v4073 = vunpack.c.l.b16 %v3996
        %v4074 = vunpack.c.l.b16 %v4010
        %v4075 = vunpack.c.l.b16 %v4024
        %v4076 = vunpack.c.l.b16 %v4038
        %v4077 = vunpack.c.l.b16 %v4052
        %v4078 = vpack.c.b16 %v4071, %v4070
        %v4079 = vpack.c.b16 %v4073, %v4072
        %v4080 = vpack.c.b16 %v4075, %v4074
        %v4081 = vpack.c.b16 %v4077, %v4076
        %v4102 = vunpack.c.l.b16 %v4054
        %v4103 = vunpack.c.l.b16 %v4055
        %v4104 = vunpack.c.l.b16 %v4056
        %v4105 = vunpack.c.l.b16 %v4057
        %v4106 = vunpack.c.l.b16 %v4058
        %v4107 = vunpack.c.l.b16 %v4059
        %v4108 = vunpack.c.l.b16 %v4060
        %v4109 = vunpack.c.l.b16 %v4061
        %v4110 = vunpack.c.l.b16 %v4062
        %v4111 = vunpack.c.l.b16 %v4063
        %v4112 = vunpack.c.l.b16 %v4064
        %v4113 = vunpack.c.l.b16 %v4065
        %v4114 = vunpack.c.l.b16 %v4066
        %v4115 = vunpack.c.l.b16 %v4067
        %v4116 = vunpack.c.l.b16 %v4068
        %v4117 = vunpack.c.l.b16 %v4069
        %v4118 = vpack.c.b16 %v4103, %v4102
        %v4119 = vpack.c.b16 %v4105, %v4104
        %v4120 = vpack.c.b16 %v4107, %v4106
        %v4121 = vpack.c.b16 %v4109, %v4108
        %v4122 = vpack.c.b16 %v4111, %v4110
        %v4123 = vpack.c.b16 %v4113, %v4112
        %v4124 = vpack.c.b16 %v4115, %v4114
        %v4125 = vpack.c.b16 %v4117, %v4116
        %4134 = vmatprep.subr.bf16.mxu0 0
        %4135 = vmatpush1.bf16.msra.mxu0 %v4118
        %4136 = vmatprep.subr.bf16.mxu0 0
        %4137 = vmatpush1.bf16.msra.mxu0 %v4119
        %4138 = vmatprep.subr.bf16.mxu0 0
        %4139 = vmatpush1.bf16.msra.mxu0 %v4120
        %4140 = vmatprep.subr.bf16.mxu0 0
        %4141 = vmatpush1.bf16.msra.mxu0 %v4121
        %4142 = vmatprep.subr.bf16.mxu0 0
        %4143 = vmatpush1.bf16.msra.mxu0 %v4122
        %4144 = vmatprep.subr.bf16.mxu0 0
        %4145 = vmatpush1.bf16.msra.mxu0 %v4123
        %4146 = vmatprep.subr.bf16.mxu0 0
        %4147 = vmatpush1.bf16.msra.mxu0 %v4124
        %4148 = vmatprep.subr.bf16.mxu0 0
        %4149 = vmatpush1.bf16.msra.mxu0 %v4125
        %4150 = vmatprep.subr.bf16.mxu0 0
        %4151 = vmatpush1.bf16.msra.mxu0 0
        %4152 = vmatprep.subr.bf16.mxu0 0
        %4153 = vmatpush1.bf16.msra.mxu0 0
        %4154 = vmatprep.subr.bf16.mxu0 0
        %4155 = vmatpush1.bf16.msra.mxu0 0
        %4156 = vmatprep.subr.bf16.mxu0 0
        %4157 = vmatpush1.bf16.msra.mxu0 0
        %4158 = vmatprep.subr.bf16.mxu0 0
        %4159 = vmatpush1.bf16.msra.mxu0 0
        %4160 = vmatprep.subr.bf16.mxu0 0
        %4161 = vmatpush1.bf16.msra.mxu0 0
        %4162 = vmatprep.subr.bf16.mxu0 0
        %4163 = vmatpush1.bf16.msra.mxu0 0
        %4164 = vmatprep.subr.bf16.mxu0 0
        %4165 = vmatpush1.bf16.msra.mxu0 0
        %4166 = vmatprep.mubr.bf16.mxu0 0
        %4167 = vmatmul.mubr.bf16.gmra.mrb[0].mxu0 %v4078
        %v4168 = vpop.f32.mrb[0].mxu0
        %v4169 = vadd.f32 0.0, %v4168
        %v4170 = vpop.f32.mrb[0].mxu0
        %v4171 = vpop.f32.mrb[0].mxu0
        %v4172 = vadd.f32 0.0, %v4171
        %v4173 = vpop.f32.mrb[0].mxu0
        %4174 = vmatprep.mubr.bf16.mxu0 0
        %4175 = vmatmul.mubr.bf16.gmra.mrb[0].mxu0 %v4079
        %v4176 = vpop.f32.mrb[0].mxu0
        %v4177 = vadd.f32 0.0, %v4176
        %v4178 = vpop.f32.mrb[0].mxu0
        %v4179 = vpop.f32.mrb[0].mxu0
        %v4180 = vadd.f32 0.0, %v4179
        %v4181 = vpop.f32.mrb[0].mxu0
        %4182 = vmatprep.mubr.bf16.mxu0 0
        %4183 = vmatmul.mubr.bf16.gmra.mrb[0].mxu0 %v4080
        %v4184 = vpop.f32.mrb[0].mxu0
        %v4185 = vadd.f32 0.0, %v4184
        %v4186 = vpop.f32.mrb[0].mxu0
        %v4187 = vpop.f32.mrb[0].mxu0
        %v4188 = vadd.f32 0.0, %v4187
        %v4189 = vpop.f32.mrb[0].mxu0
        %4190 = vmatprep.mubr.bf16.mxu0 0
        %4191 = vmatmul.mubr.bf16.gmra.mrb[0].mxu0 %v4081
        %v4192 = vpop.f32.mrb[0].mxu0
        %v4193 = vadd.f32 0.0, %v4192
        %v4194 = vpop.f32.mrb[0].mxu0
        %v4195 = vpop.f32.mrb[0].mxu0
        %v4196 = vadd.f32 0.0, %v4195
        %v4197 = vpop.f32.mrb[0].mxu0
        %4198 = vdwg.mxu0
        %v4199 = vadd.f32 %v3917, %v4169
        %v4200 = vadd.f32 %v3918, %v4172
        %v4201 = vadd.f32 %v3919, %v4177
        %v4202 = vadd.f32 %v3920, %v4180
        %v4203 = vadd.f32 %v3921, %v4185
        %v4204 = vadd.f32 %v3922, %v4188
        %v4205 = vadd.f32 %v3923, %v4193
        %v4206 = vadd.f32 %v3924, %v4196
        %v4207 = vld [vmem:[%s3754] sm:$0xe]
        %v4208 = vld [vmem:[%s3754 + $0x8] sm:$0xe]
        %v4209 = vld [vmem:[%s3754 + $0x10] sm:$0xe]
        %v4210 = vld [vmem:[%s3754 + $0x18] sm:$0xe]
        %v4211 = vld [vmem:[%s3754 + $0x20] sm:$0xe]
        %v4212 = vld [vmem:[%s3754 + $0x28] sm:$0xe]
        %v4213 = vld [vmem:[%s3754 + $0x30] sm:$0xe]
        %v4214 = vld [vmem:[%s3754 + $0x38] sm:$0xe]
        %v4231 = vrot.slane %v4207, 5
        %v4232 = vrot.slane %v4231, 4
        %v4233 = vrot.slane %v3926, 5
        %v4234 = vsel %vm2905, %v4232, %v4233
        %v4235 = vrot.slane %v4208, 5
        %v4236 = vrot.slane %v4235, 4
        %v4237 = vrot.slane %v3928, 5
        %v4238 = vsel %vm2905, %v4236, %v4237
        %v4239 = vrot.slane %v4209, 5
        %v4240 = vrot.slane %v4239, 4
        %v4241 = vrot.slane %v3930, 5
        %v4242 = vsel %vm2905, %v4240, %v4241
        %v4243 = vrot.slane %v4210, 5
        %v4244 = vrot.slane %v4243, 4
        %v4245 = vrot.slane %v3932, 5
        %v4246 = vsel %vm2905, %v4244, %v4245
        %v4247 = vrot.slane %v4211, 5
        %v4248 = vrot.slane %v4247, 4
        %v4249 = vrot.slane %v3934, 5
        %v4250 = vsel %vm2905, %v4248, %v4249
        %v4251 = vrot.slane %v4212, 5
        %v4252 = vrot.slane %v4251, 4
        %v4253 = vrot.slane %v3936, 5
        %v4254 = vsel %vm2905, %v4252, %v4253
        %v4255 = vrot.slane %v4213, 5
        %v4256 = vrot.slane %v4255, 4
        %v4257 = vrot.slane %v3938, 5
        %v4258 = vsel %vm2905, %v4256, %v4257
        %v4259 = vrot.slane %v4214, 5
        %v4260 = vrot.slane %v4259, 4
        %v4261 = vrot.slane %v3940, 5
        %v4262 = vsel %vm2905, %v4260, %v4261
        %s4263 = scalar_lea.vmem [#allocation3], 512
        %v4264 = vld [vmem:[%s4263] sm:$0xf]
        %v4265 = vld [vmem:[%s4263 + $0x4] sm:$0xf]
        %v4266 = vld [vmem:[%s4263 + $0x8] sm:$0xf]
        %v4267 = vld [vmem:[%s4263 + $0xc] sm:$0xf]
        %v4268 = vld [vmem:[%s4263 + $0x10] sm:$0xf]
        %v4269 = vld [vmem:[%s4263 + $0x14] sm:$0xf]
        %v4270 = vld [vmem:[%s4263 + $0x18] sm:$0xf]
        %v4271 = vld [vmem:[%s4263 + $0x1c] sm:$0xf]
        %v4272 = vld [vmem:[%s4263 + $0x20] sm:$0xf]
        %v4273 = vld [vmem:[%s4263 + $0x24] sm:$0xf]
        %v4274 = vld [vmem:[%s4263 + $0x28] sm:$0xf]
        %v4275 = vld [vmem:[%s4263 + $0x2c] sm:$0xf]
        %v4276 = vld [vmem:[%s4263 + $0x30] sm:$0xf]
        %v4277 = vld [vmem:[%s4263 + $0x34] sm:$0xf]
        %v4278 = vld [vmem:[%s4263 + $0x38] sm:$0xf]
        %v4279 = vld [vmem:[%s4263 + $0x3c] sm:$0xf]
        %v4280 = vunpack.c.l.b16 %v4234
        %v4281 = vunpack.c.l.b16 %v4238
        %v4282 = vunpack.c.l.b16 %v4242
        %v4283 = vunpack.c.l.b16 %v4246
        %v4284 = vunpack.c.l.b16 %v4250
        %v4285 = vunpack.c.l.b16 %v4254
        %v4286 = vunpack.c.l.b16 %v4258
        %v4287 = vunpack.c.l.b16 %v4262
        %v4288 = vpack.c.b16 %v4281, %v4280
        %v4289 = vpack.c.b16 %v4283, %v4282
        %v4290 = vpack.c.b16 %v4285, %v4284
        %v4291 = vpack.c.b16 %v4287, %v4286
        %v4312 = vunpack.c.l.b16 %v4264
        %v4313 = vunpack.c.l.b16 %v4265
        %v4314 = vunpack.c.l.b16 %v4266
        %v4315 = vunpack.c.l.b16 %v4267
        %v4316 = vunpack.c.l.b16 %v4268
        %v4317 = vunpack.c.l.b16 %v4269
        %v4318 = vunpack.c.l.b16 %v4270
        %v4319 = vunpack.c.l.b16 %v4271
        %v4320 = vunpack.c.l.b16 %v4272
        %v4321 = vunpack.c.l.b16 %v4273
        %v4322 = vunpack.c.l.b16 %v4274
        %v4323 = vunpack.c.l.b16 %v4275
        %v4324 = vunpack.c.l.b16 %v4276
        %v4325 = vunpack.c.l.b16 %v4277
        %v4326 = vunpack.c.l.b16 %v4278
        %v4327 = vunpack.c.l.b16 %v4279
        %v4328 = vpack.c.b16 %v4313, %v4312
        %v4329 = vpack.c.b16 %v4315, %v4314
        %v4330 = vpack.c.b16 %v4317, %v4316
        %v4331 = vpack.c.b16 %v4319, %v4318
        %v4332 = vpack.c.b16 %v4321, %v4320
        %v4333 = vpack.c.b16 %v4323, %v4322
        %v4334 = vpack.c.b16 %v4325, %v4324
        %v4335 = vpack.c.b16 %v4327, %v4326
        %4344 = vmatprep.subr.bf16.mxu0 0
        %4345 = vmatpush1.bf16.msra.mxu0 %v4328
        %4346 = vmatprep.subr.bf16.mxu0 0
        %4347 = vmatpush1.bf16.msra.mxu0 %v4329
        %4348 = vmatprep.subr.bf16.mxu0 0
        %4349 = vmatpush1.bf16.msra.mxu0 %v4330
        %4350 = vmatprep.subr.bf16.mxu0 0
        %4351 = vmatpush1.bf16.msra.mxu0 %v4331
        %4352 = vmatprep.subr.bf16.mxu0 0
        %4353 = vmatpush1.bf16.msra.mxu0 %v4332
        %4354 = vmatprep.subr.bf16.mxu0 0
        %4355 = vmatpush1.bf16.msra.mxu0 %v4333
        %4356 = vmatprep.subr.bf16.mxu0 0
        %4357 = vmatpush1.bf16.msra.mxu0 %v4334
        %4358 = vmatprep.subr.bf16.mxu0 0
        %4359 = vmatpush1.bf16.msra.mxu0 %v4335
        %4360 = vmatprep.subr.bf16.mxu0 0
        %4361 = vmatpush1.bf16.msra.mxu0 0
        %4362 = vmatprep.subr.bf16.mxu0 0
        %4363 = vmatpush1.bf16.msra.mxu0 0
        %4364 = vmatprep.subr.bf16.mxu0 0
        %4365 = vmatpush1.bf16.msra.mxu0 0
        %4366 = vmatprep.subr.bf16.mxu0 0
        %4367 = vmatpush1.bf16.msra.mxu0 0
        %4368 = vmatprep.subr.bf16.mxu0 0
        %4369 = vmatpush1.bf16.msra.mxu0 0
        %4370 = vmatprep.subr.bf16.mxu0 0
        %4371 = vmatpush1.bf16.msra.mxu0 0
        %4372 = vmatprep.subr.bf16.mxu0 0
        %4373 = vmatpush1.bf16.msra.mxu0 0
        %4374 = vmatprep.subr.bf16.mxu0 0
        %4375 = vmatpush1.bf16.msra.mxu0 0
        %4376 = vmatprep.mubr.bf16.mxu0 0
        %4377 = vmatmul.mubr.bf16.gmra.mrb[0].mxu0 %v4288
        %v4378 = vpop.f32.mrb[0].mxu0
        %v4379 = vadd.f32 0.0, %v4378
        %v4380 = vpop.f32.mrb[0].mxu0
        %v4381 = vpop.f32.mrb[0].mxu0
        %v4382 = vadd.f32 0.0, %v4381
        %v4383 = vpop.f32.mrb[0].mxu0
        %4384 = vmatprep.mubr.bf16.mxu0 0
        %4385 = vmatmul.mubr.bf16.gmra.mrb[0].mxu0 %v4289
        %v4386 = vpop.f32.mrb[0].mxu0
        %v4387 = vadd.f32 0.0, %v4386
        %v4388 = vpop.f32.mrb[0].mxu0
        %v4389 = vpop.f32.mrb[0].mxu0
        %v4390 = vadd.f32 0.0, %v4389
        %v4391 = vpop.f32.mrb[0].mxu0
        %4392 = vmatprep.mubr.bf16.mxu0 0
        %4393 = vmatmul.mubr.bf16.gmra.mrb[0].mxu0 %v4290
        %v4394 = vpop.f32.mrb[0].mxu0
        %v4395 = vadd.f32 0.0, %v4394
        %v4396 = vpop.f32.mrb[0].mxu0
        %v4397 = vpop.f32.mrb[0].mxu0
        %v4398 = vadd.f32 0.0, %v4397
        %v4399 = vpop.f32.mrb[0].mxu0
        %4400 = vmatprep.mubr.bf16.mxu0 0
        %4401 = vmatmul.mubr.bf16.gmra.mrb[0].mxu0 %v4291
        %v4402 = vpop.f32.mrb[0].mxu0
        %v4403 = vadd.f32 0.0, %v4402
        %v4404 = vpop.f32.mrb[0].mxu0
        %v4405 = vpop.f32.mrb[0].mxu0
        %v4406 = vadd.f32 0.0, %v4405
        %v4407 = vpop.f32.mrb[0].mxu0
        %4408 = vdwg.mxu0
        %v4409 = vadd.f32 %v4199, %v4379
        %v4410 = vadd.f32 %v4200, %v4382
        %v4411 = vadd.f32 %v4201, %v4387
        %v4412 = vadd.f32 %v4202, %v4390
        %v4413 = vadd.f32 %v4203, %v4395
        %v4414 = vadd.f32 %v4204, %v4398
        %v4415 = vadd.f32 %v4205, %v4403
        %v4416 = vadd.f32 %v4206, %v4406
        %v4417 = vld [vmem:[%s5] sm:$0x1]
        %v4419 = vlaneseq
        %v4420 = vshrl.u32 %v4419, 7
        %v4421 = vsub.s32 0, %v4420
        %v4422 = vrot.slane %v4417, %v4421
        %v4424 = vmul.f32 %v4409, %v4422
        %v4425 = vmul.f32 %v4410, %v4422
        %v4426 = vmul.f32 %v4411, %v4422
        %v4427 = vmul.f32 %v4412, %v4422
        %v4428 = vmul.f32 %v4413, %v4422
        %v4429 = vmul.f32 %v4414, %v4422
        %v4430 = vmul.f32 %v4415, %v4422
        %v4431 = vmul.f32 %v4416, %v4422
        %v4432 = vld [vmem:[%s6] sm:$0x1]
        %v4434 = vlaneseq
        %v4435 = vshrl.u32 %v4434, 7
        %v4436 = vsub.s32 0, %v4435
        %v4437 = vrot.slane %v4432, %v4436
        %v4439 = vadd.f32 %v4424, %v4437
        %v4440 = vadd.f32 %v4425, %v4437
        %v4441 = vadd.f32 %v4426, %v4437
        %v4442 = vadd.f32 %v4427, %v4437
        %v4443 = vadd.f32 %v4428, %v4437
        %v4444 = vadd.f32 %v4429, %v4437
        %v4445 = vadd.f32 %v4430, %v4437
        %v4446 = vadd.f32 %v4431, %v4437
        %v4447 = vld [vmem:[%s372 + $0xc] sm:$0xf]
        %v4448 = vld [vmem:[%s372 + $0x2c] sm:$0xf]
        %v4449 = vld [vmem:[%s372 + $0x4c] sm:$0xf]
        %v4450 = vld [vmem:[%s372 + $0x6c] sm:$0xf]
        %v4451 = vld [vmem:[%s372 + $0x8c] sm:$0xf]
        %v4452 = vld [vmem:[%s372 + $0xac] sm:$0xf]
        %v4453 = vld [vmem:[%s372 + $0xcc] sm:$0xf]
        %v4454 = vld [vmem:[%s372 + $0xec] sm:$0xf]
        %v4455 = vld [vmem:[%s7] sm:$0xf]
        %v4456 = vld [vmem:[%s7 + $0x4] sm:$0xf]
        %v4457 = vld [vmem:[%s7 + $0x8] sm:$0xf]
        %v4458 = vld [vmem:[%s7 + $0xc] sm:$0xf]
        %v4459 = vld [vmem:[%s7 + $0x10] sm:$0xf]
        %v4460 = vld [vmem:[%s7 + $0x14] sm:$0xf]
        %v4461 = vld [vmem:[%s7 + $0x18] sm:$0xf]
        %v4462 = vld [vmem:[%s7 + $0x1c] sm:$0xf]
        %v4463 = vld [vmem:[%s7 + $0x20] sm:$0xf]
        %v4464 = vld [vmem:[%s7 + $0x24] sm:$0xf]
        %v4465 = vld [vmem:[%s7 + $0x28] sm:$0xf]
        %v4466 = vld [vmem:[%s7 + $0x2c] sm:$0xf]
        %v4467 = vld [vmem:[%s7 + $0x30] sm:$0xf]
        %v4468 = vld [vmem:[%s7 + $0x34] sm:$0xf]
        %v4469 = vld [vmem:[%s7 + $0x38] sm:$0xf]
        %v4470 = vld [vmem:[%s7 + $0x3c] sm:$0xf]
        %v4479 = vunpack.c.l.b16 %v4447
        %v4480 = vunpack.c.l.b16 %v4448
        %v4481 = vunpack.c.l.b16 %v4449
        %v4482 = vunpack.c.l.b16 %v4450
        %v4483 = vunpack.c.l.b16 %v4451
        %v4484 = vunpack.c.l.b16 %v4452
        %v4485 = vunpack.c.l.b16 %v4453
        %v4486 = vunpack.c.l.b16 %v4454
        %v4487 = vpack.c.b16 %v4480, %v4479
        %v4488 = vpack.c.b16 %v4482, %v4481
        %v4489 = vpack.c.b16 %v4484, %v4483
        %v4490 = vpack.c.b16 %v4486, %v4485
        %v4511 = vunpack.c.l.b16 %v4455
        %v4512 = vunpack.c.l.b16 %v4456
        %v4513 = vunpack.c.l.b16 %v4457
        %v4514 = vunpack.c.l.b16 %v4458
        %v4515 = vunpack.c.l.b16 %v4459
        %v4516 = vunpack.c.l.b16 %v4460
        %v4517 = vunpack.c.l.b16 %v4461
        %v4518 = vunpack.c.l.b16 %v4462
        %v4519 = vunpack.c.l.b16 %v4463
        %v4520 = vunpack.c.l.b16 %v4464
        %v4521 = vunpack.c.l.b16 %v4465
        %v4522 = vunpack.c.l.b16 %v4466
        %v4523 = vunpack.c.l.b16 %v4467
        %v4524 = vunpack.c.l.b16 %v4468
        %v4525 = vunpack.c.l.b16 %v4469
        %v4526 = vunpack.c.l.b16 %v4470
        %v4527 = vpack.c.b16 %v4512, %v4511
        %v4528 = vpack.c.b16 %v4514, %v4513
        %v4529 = vpack.c.b16 %v4516, %v4515
        %v4530 = vpack.c.b16 %v4518, %v4517
        %v4531 = vpack.c.b16 %v4520, %v4519
        %v4532 = vpack.c.b16 %v4522, %v4521
        %v4533 = vpack.c.b16 %v4524, %v4523
        %v4534 = vpack.c.b16 %v4526, %v4525
        %4543 = vmatprep.subr.bf16.mxu0 0
        %4544 = vmatpush1.bf16.msra.mxu0 %v4527
        %4545 = vmatprep.subr.bf16.mxu0 0
        %4546 = vmatpush1.bf16.msra.mxu0 %v4528
        %4547 = vmatprep.subr.bf16.mxu0 0
        %4548 = vmatpush1.bf16.msra.mxu0 %v4529
        %4549 = vmatprep.subr.bf16.mxu0 0
        %4550 = vmatpush1.bf16.msra.mxu0 %v4530
        %4551 = vmatprep.subr.bf16.mxu0 0
        %4552 = vmatpush1.bf16.msra.mxu0 %v4531
        %4553 = vmatprep.subr.bf16.mxu0 0
        %4554 = vmatpush1.bf16.msra.mxu0 %v4532
        %4555 = vmatprep.subr.bf16.mxu0 0
        %4556 = vmatpush1.bf16.msra.mxu0 %v4533
        %4557 = vmatprep.subr.bf16.mxu0 0
        %4558 = vmatpush1.bf16.msra.mxu0 %v4534
        %4559 = vmatprep.subr.bf16.mxu0 0
        %4560 = vmatpush1.bf16.msra.mxu0 0
        %4561 = vmatprep.subr.bf16.mxu0 0
        %4562 = vmatpush1.bf16.msra.mxu0 0
        %4563 = vmatprep.subr.bf16.mxu0 0
        %4564 = vmatpush1.bf16.msra.mxu0 0
        %4565 = vmatprep.subr.bf16.mxu0 0
        %4566 = vmatpush1.bf16.msra.mxu0 0
        %4567 = vmatprep.subr.bf16.mxu0 0
        %4568 = vmatpush1.bf16.msra.mxu0 0
        %4569 = vmatprep.subr.bf16.mxu0 0
        %4570 = vmatpush1.bf16.msra.mxu0 0
        %4571 = vmatprep.subr.bf16.mxu0 0
        %4572 = vmatpush1.bf16.msra.mxu0 0
        %4573 = vmatprep.subr.bf16.mxu0 0
        %4574 = vmatpush1.bf16.msra.mxu0 0
        %4575 = vmatprep.mubr.bf16.mxu0 0
        %4576 = vmatmul.mubr.bf16.gmra.mrb[0].mxu0 %v4487
        %v4577 = vpop.f32.mrb[0].mxu0
        %v4578 = vadd.f32 0.0, %v4577
        %v4579 = vpop.f32.mrb[0].mxu0
        %v4580 = vpop.f32.mrb[0].mxu0
        %v4581 = vadd.f32 0.0, %v4580
        %v4582 = vpop.f32.mrb[0].mxu0
        %4583 = vmatprep.mubr.bf16.mxu0 0
        %4584 = vmatmul.mubr.bf16.gmra.mrb[0].mxu0 %v4488
        %v4585 = vpop.f32.mrb[0].mxu0
        %v4586 = vadd.f32 0.0, %v4585
        %v4587 = vpop.f32.mrb[0].mxu0
        %v4588 = vpop.f32.mrb[0].mxu0
        %v4589 = vadd.f32 0.0, %v4588
        %v4590 = vpop.f32.mrb[0].mxu0
        %4591 = vmatprep.mubr.bf16.mxu0 0
        %4592 = vmatmul.mubr.bf16.gmra.mrb[0].mxu0 %v4489
        %v4593 = vpop.f32.mrb[0].mxu0
        %v4594 = vadd.f32 0.0, %v4593
        %v4595 = vpop.f32.mrb[0].mxu0
        %v4596 = vpop.f32.mrb[0].mxu0
        %v4597 = vadd.f32 0.0, %v4596
        %v4598 = vpop.f32.mrb[0].mxu0
        %4599 = vmatprep.mubr.bf16.mxu0 0
        %4600 = vmatmul.mubr.bf16.gmra.mrb[0].mxu0 %v4490
        %v4601 = vpop.f32.mrb[0].mxu0
        %v4602 = vadd.f32 0.0, %v4601
        %v4603 = vpop.f32.mrb[0].mxu0
        %v4604 = vpop.f32.mrb[0].mxu0
        %v4605 = vadd.f32 0.0, %v4604
        %v4606 = vpop.f32.mrb[0].mxu0
        %4607 = vdwg.mxu0
        %v4608 = vld [vmem:[%s8] sm:$0x1]
        %v4610 = vlaneseq
        %v4611 = vshrl.u32 %v4610, 7
        %v4612 = vsub.s32 0, %v4611
        %v4613 = vrot.slane %v4608, %v4612
        %v4615 = vmul.f32 %v4578, %v4613
        %v4616 = vmul.f32 %v4581, %v4613
        %v4617 = vmul.f32 %v4586, %v4613
        %v4618 = vmul.f32 %v4589, %v4613
        %v4619 = vmul.f32 %v4594, %v4613
        %v4620 = vmul.f32 %v4597, %v4613
        %v4621 = vmul.f32 %v4602, %v4613
        %v4622 = vmul.f32 %v4605, %v4613
        %v4623 = vld [vmem:[%s9] sm:$0x1]
        %v4625 = vlaneseq
        %v4626 = vshrl.u32 %v4625, 7
        %v4627 = vsub.s32 0, %v4626
        %v4628 = vrot.slane %v4623, %v4627
        %v4630 = vadd.f32 %v4615, %v4628
        %v4631 = vadd.f32 %v4616, %v4628
        %v4632 = vadd.f32 %v4617, %v4628
        %v4633 = vadd.f32 %v4618, %v4628
        %v4634 = vadd.f32 %v4619, %v4628
        %v4635 = vadd.f32 %v4620, %v4628
        %v4636 = vadd.f32 %v4621, %v4628
        %v4637 = vadd.f32 %v4622, %v4628
        %v4638 = vadd.f32 %v4439, %v4630
        %v4639 = vadd.f32 %v4440, %v4631
        %v4640 = vadd.f32 %v4441, %v4632
        %v4641 = vadd.f32 %v4442, %v4633
        %v4642 = vadd.f32 %v4443, %v4634
        %v4643 = vadd.f32 %v4444, %v4635
        %v4644 = vadd.f32 %v4445, %v4636
        %v4645 = vadd.f32 %v4446, %v4637
        %v4646 = vmax.f32 %v4638, 0.0
        %v4647 = vmax.f32 %v4639, 0.0
        %v4648 = vmax.f32 %v4640, 0.0
        %v4649 = vmax.f32 %v4641, 0.0
        %v4650 = vmax.f32 %v4642, 0.0
        %v4651 = vmax.f32 %v4643, 0.0
        %v4652 = vmax.f32 %v4644, 0.0
        %v4653 = vmax.f32 %v4645, 0.0
        %v4654 = vpack.c.bf16 %v4646, %v4646
        %v4655 = vpack.c.bf16 %v4647, %v4647
        %v4656 = vpack.c.bf16 %v4648, %v4648
        %v4657 = vpack.c.bf16 %v4649, %v4649
        %v4658 = vpack.c.bf16 %v4650, %v4650
        %v4659 = vpack.c.bf16 %v4651, %v4651
        %v4660 = vpack.c.bf16 %v4652, %v4652
        %v4661 = vpack.c.bf16 %v4653, %v4653
        %4662 = vst [vmem:[%s367] sm:$0xf] %v4654
        %4663 = vst [vmem:[%s367 + $0x4] sm:$0xf] %v4655
        %4664 = vst [vmem:[%s367 + $0x8] sm:$0xf] %v4656
        %4665 = vst [vmem:[%s367 + $0xc] sm:$0xf] %v4657
        %4666 = vst [vmem:[%s367 + $0x10] sm:$0xf] %v4658
        %4667 = vst [vmem:[%s367 + $0x14] sm:$0xf] %v4659
        %4668 = vst [vmem:[%s367 + $0x18] sm:$0xf] %v4660
        %4669 = vst [vmem:[%s367 + $0x1c] sm:$0xf] %v4661
        %s4670 = sand.u32 %s248, 1
        %s4671 = scalar_lea.sflag [#allocation5], %s4670
        %s4672 = sand.u32 %s248, 1
        %s4673 = smul.addr %s4672, 32
        %s4674 = scalar_lea.vmem [#allocation6], %s4673
        // Predicated region
        $region65: #{tpu_custom_call.1} parent=59 // pred_check
          %p4675 = pneg %p258
        $region66: #{tpu_custom_call.1} parent=59 // pred_check_branch
          %4677 = sbr.rel (%p4675) target = $region68
        $region67: #{tpu_custom_call.1} parent=59 // pred_region
          %s4679 = ssub.s32 512, 512
          %4680 = vsyncadd %s4671, %s4679
          %s4681 = smul.addr %s25, 8
          %s4682 = smul.addr %s4681, 64
          %s4683 = scalar_lea.hbm %s10, %s4682
          %s4684 = sshll.u32 %s4674, 4
          %s4685 = int_to_ptr.vmem [resolvable:$true] %s4684
          %4690 = dma.vmem_to_hbm [thread:$0]  %s4685, 512, %s4683, %s4671, 64, 64, 4
        $region68: #{tpu_custom_call.1} parent=59 // pred_fallthru
          _
      $region60: #{tpu_custom_call.1} parent=5 // pred_fallthru
        _
      %p4691 = scmp.le.s32.totalorder 2, %s20
      // Predicated region
      $region69: #{tpu_custom_call.1} parent=5 // pred_check
        %p4692 = pneg %p4691
      $region70: #{tpu_custom_call.1} parent=5 // pred_check_branch
        %4694 = sbr.rel (%p4692) target = $region72
      $region71: #{tpu_custom_call.1} parent=5 // pred_region
        %s4695 = ssub.s32 %s20, 2
        // Predicated region
        $region73: #{tpu_custom_call.1} parent=71 // pred_check
          %p4696 = pneg %p264
        $region74: #{tpu_custom_call.1} parent=71 // pred_check_branch
          %4698 = sbr.rel (%p4696) target = $region76
        $region75: #{tpu_custom_call.1} parent=71 // pred_region
          %s4699 = sand.u32 %s249, 1
          %s4700 = scalar_lea.sflag [#allocation5], %s4699
          %s4701 = sand.u32 %s249, 1
          %s4702 = smul.addr %s4701, 32
          %s4703 = scalar_lea.vmem [#allocation6], %s4702
          %4704 = dma.done %s4700, 512
        $region76: #{tpu_custom_call.1} parent=71 // pred_fallthru
          _
      $region72: #{tpu_custom_call.1} parent=5 // pred_fallthru
        _
    $region6: #{tpu_custom_call.1} parent=1 // loop_footer
      %s24 = sadd.s32 1, %s20
    $region7: #{tpu_custom_call.1} parent=1 // loop_footer_branch
      %19 = sbr.rel target = $region3
    $region8: #{tpu_custom_call.1} parent=1 // loop_exit
      _
    %4705 = vsyncpa [#allocation4], 1
    %s4706 = scalar_lea.sflag [#allocation4], 1
    %4707 = vsyncpa %s4706, 1
    %4708 = vsyncpa [#allocation5], 1
    %s4709 = scalar_lea.sflag [#allocation5], 1
    %4710 = vsyncpa %s4709, 1

</llo_original>
